<compile_context>
chip_gen: v7x
topology: tpu7x:2x2x1
jax: 0.10.0
libtpu: 0.0.40
codegen_flags: <defaults>
</compile_context>

<pallas_src>
import jax
import jax.numpy as jnp
from jax import lax
from jax.experimental import pallas as pl
from jax.experimental.pallas import tpu as pltpu

INPUT_CHANNEL = 1
CHANNEL_D = 128        # original: 512
CHANNEL_C = 128        # original: 256
INPUT_FEATURES = 200   # original: 2439
LATENT_DIM = 128       # original: 1024
OUTPUT_DIM = 1
BN_EPS = 1e-5
# fc1 K tile (elements of the flattened Cc*L axis).  Must be a multiple of Cc.
# At original sizes: 8192 on v5e/v6e (don't triple-buffer under a 48 MiB VMEM
# limit), 4096 on v7x (64 MiB VMEM per TC).
FC1_K_TILE = 2048
VMEM_LIMIT_BYTES = 48 * 1024 * 1024
HPAD = 16              # bf16 (16,128)-tile-aligned row offset for the padded-h scratch

assert FC1_K_TILE % CHANNEL_C == 0
TL = FC1_K_TILE // CHANNEL_C                               # conv rows per fc1 K step
L_PAD = ((INPUT_FEATURES + TL - 1) // TL) * TL             # producer-side padded length


# ------------------------------------------------------------------ kernel 1
def convs_kernel(xpad_ref, w1_ref, b1_ref, w2_ref, b2_ref,
                 y_ref, sum_ref, ssq_ref, hp_ref):
    L = xpad_ref.shape[1] - 2
    Lp = y_ref.shape[1]
    Cd = hp_ref.shape[1]
    x = xpad_ref[0]                          # (L+2, 1) f32
    w1 = w1_ref[...]                         # (3, Cd) f32
    # Conv1 (C_in == 1): three broadcast multiply-adds (rank-1 per tap) on VPU.
    # TODO(synk): x has lane-dim 1 (each vreg 1/128 occupied); conv1 is <1% of
    # conv2's FLOPs so this is left as-is.
    h = (x[0:L, :] * w1[0:1, :]
         + x[1:L + 1, :] * w1[1:2, :]
         + x[2:L + 2, :] * w1[2:3, :]
         + b1_ref[...])                      # (L, Cd) f32
    h = jnp.maximum(h, 0.0)
    hb = h.astype(jnp.bfloat16)

    # Zero-padded activation in a bf16 VMEM scratch (aligned store of hb at row
    # offset HPAD=16); rows outside [HPAD-1, HPAD+L] are never read.
    zrow = jnp.zeros((1, Cd), jnp.bfloat16)
    hp_ref[HPAD - 1:HPAD, :] = zrow                  # left border  (h_pad[0])
    hp_ref[HPAD + L:HPAD + L + 1, :] = zrow          # right border (h_pad[L+1])
    hp_ref[HPAD:HPAD + L, :] = hb

    # Conv2: three shifted bf16 MXU matmuls accumulated in f32.
    # TODO(synk): could fuse into one (L, 3*Cd) x (3*Cd, Cc) im2col matmul to
    # avoid the +-1-row realignment of the side taps (trade VMEM for XLU work).
    w2 = w2_ref[...]                                 # (3, Cd, Cc) bf16
    y = (jnp.dot(hp_ref[HPAD - 1:HPAD - 1 + L, :], w2[0],
                 preferred_element_type=jnp.float32)
         + jnp.dot(hb, w2[1], preferred_element_type=jnp.float32)
         + jnp.dot(hp_ref[HPAD + 1:HPAD + 1 + L, :], w2[2],
                   preferred_element_type=jnp.float32)
         + b2_ref[...])                              # (L, Cc) f32
    y = jnp.maximum(y, 0.0)

    # Per-batch partial BN1 statistics (reduced across batch in glue) from the
    # f32 y -> no cross-grid-step accumulation, batch axis stays parallel.
    # TODO(synk): single-pass E[x^2]-mean^2 variance in glue; switch to a
    # two-pass reduction if precision tightens at the original L=2439.
    sum_ref[0] = jnp.sum(y, axis=0, keepdims=True)
    ssq_ref[0] = jnp.sum(y * y, axis=0, keepdims=True)

    # bf16 writeback, producer-side padding: tail rows [L, Lp) MUST be zeroed
    # here (never rely on the consumer's weight padding alone).
    y_ref[0, 0:L, :] = y.astype(jnp.bfloat16)
    if Lp > L:  # static
        y_ref[0, L:Lp, :] = jnp.zeros((Lp - L, y.shape[1]), jnp.bfloat16)


# ------------------------------------------------------------------ kernel 2
def fc1_head_kernel(xf_ref, scale_ref, shift_ref, w_ref, b_ref,
                    g2_ref, beta2_ref, w2_ref, b2_ref, out_ref, acc_ref):
    k = pl.program_id(0)

    @pl.when(k == 0)
    def _init():
        acc_ref[...] = jnp.zeros_like(acc_ref)

    scale = scale_ref[...]                     # (1, Cc) f32, VMEM-resident
    shift = shift_ref[...]                     # (1, Cc) f32
    x3 = xf_ref[...]                           # (B, TL, Cc) bf16
    tl = w_ref.shape[0]
    # Per-row matmuls avoid any in-kernel relayout of the (B, TL, Cc) block;
    # the MXU has large slack here (the kernel is HBM-bound on the fc1 weight).
    for l in range(tl):
        xb = x3[:, l, :].astype(jnp.float32) * scale + shift        # BN1 affine
        acc_ref[...] += jnp.dot(xb.astype(jnp.bfloat16), w_ref[l],
                                preferred_element_type=jnp.float32)  # (B, D)

    @pl.when(k == pl.num_programs(0) - 1)
    def _fin():
        # fc1 bias + ReLU
        h = jnp.maximum(acc_ref[...] + b_ref[...], 0.0)              # (B, D)
        # BatchNorm1d(latent), training mode, two-pass batch statistics.
        n = h.shape[0]
        mean = jnp.sum(h, axis=0, keepdims=True) / n
        d = h - mean
        var = jnp.sum(d * d, axis=0, keepdims=True) / n
        hn = d * lax.rsqrt(var + BN_EPS) * g2_ref[...] + beta2_ref[...]
        # fc2 (latent -> 1) as a VPU multiply + lane reduction (MXU with N=1
        # would waste 127/128 lanes), then sigmoid.
        z = jnp.sum(hn * w2_ref[...], axis=-1, keepdims=True) + b2_ref[...]
        out_ref[...] = 1.0 / (1.0 + jnp.exp(-z))


# ------------------------------------------------------------------ param prep
def prepare_params(p):
    """One-time conversion of PyTorch-layout params to kernel layout.

    Done OUTSIDE the jitted forward: at original sizes the fc1 permute + pad +
    bf16 cast touches ~3.7 GB and must not run per call.
    """
    L, Cc, Cd, D = INPUT_FEATURES, CHANNEL_C, CHANNEL_D, LATENT_DIM
    # fc1: PyTorch (D, Cc*L) with in-index c*L + l  ->  (Lp, Cc, D) bf16,
    # zero-padded along L so the K tiling always divides evenly.
    w_fc1 = p['w_fc1'].reshape(D, Cc, L).transpose(2, 1, 0)          # (L, Cc, D)
    w_fc1 = jnp.pad(w_fc1, ((0, L_PAD - L), (0, 0), (0, 0))).astype(jnp.bfloat16)
    # TODO(synk): optional int8 (v5e/v6e) / fp8 (v7x) quantization of w_fc1
    # with per-output-column scales to halve the HBM weight stream again.
    return dict(
        w1=jnp.transpose(p['w_conv1'][:, 0, :], (1, 0)),             # (3, Cd) f32
        b1=p['b_conv1'][None, :],                                    # (1, Cd)
        w2=jnp.transpose(p['w_conv2'], (2, 1, 0)).astype(jnp.bfloat16),  # (3, Cd, Cc)
        b2=p['b_conv2'][None, :],                                    # (1, Cc)
        g_bn1=p['g_bn1'][None, :], beta_bn1=p['beta_bn1'][None, :],  # (1, Cc)
        w_fc1=w_fc1,                                                 # (Lp, Cc, D) bf16
        b_fc1=p['b_fc1'][None, :],                                   # (1, D)
        g_bn2=p['g_bn2'][None, :], beta_bn2=p['beta_bn2'][None, :],  # (1, D)
        w_fc2=p['w_fc2'],                                            # (1, D)
        b_fc2=p['b_fc2'][None, :],                                   # (1, 1)
    )


# ------------------------------------------------------------------ wrapper
@jax.jit
def discriminator_forward(inp, kp):
    L, Cd, Cc, D = INPUT_FEATURES, CHANNEL_D, CHANNEL_C, LATENT_DIM
    Lp, tl = L_PAD, TL
    x = inp.reshape(-1, L)                    # == input.view(-1, 1, input_features)
    B = x.shape[0]
    xpad = jnp.pad(x, ((0, 0), (1, 1)))[:, :, None]           # (B, L+2, 1)

    y, psum, pssq = pl.pallas_call(
        convs_kernel,
        out_shape=(jax.ShapeDtypeStruct((B, Lp, Cc), jnp.bfloat16),
                   jax.ShapeDtypeStruct((B, 1, Cc), jnp.float32),
                   jax.ShapeDtypeStruct((B, 1, Cc), jnp.float32)),
        grid=(B,),
        in_specs=[pl.BlockSpec((1, L + 2, 1), lambda b: (b, 0, 0)),
                  pl.BlockSpec((3, Cd), lambda b: (0, 0)),
                  pl.BlockSpec((1, Cd), lambda b: (0, 0)),
                  pl.BlockSpec((3, Cd, Cc), lambda b: (0, 0, 0)),
                  pl.BlockSpec((1, Cc), lambda b: (0, 0))],
        out_specs=(pl.BlockSpec((1, Lp, Cc), lambda b: (b, 0, 0)),
                   pl.BlockSpec((1, 1, Cc), lambda b: (b, 0, 0)),
                   pl.BlockSpec((1, 1, Cc), lambda b: (b, 0, 0))),
        scratch_shapes=[pltpu.VMEM((L + 2 * HPAD, Cd), jnp.bfloat16)],
        compiler_params=pltpu.CompilerParams(
            dimension_semantics=("parallel",),        # batch axis -> 2 TCs on v7x
            vmem_limit_bytes=VMEM_LIMIT_BYTES),
    )(xpad, kp['w1'], kp['b1'], kp['w2'], kp['b2'])

    # BatchNorm1d(Cc) training-mode stats: reduce per-batch partials (glue).
    cnt = B * L
    s1 = jnp.sum(psum[:, 0, :], axis=0, keepdims=True)        # (1, Cc)
    ss1 = jnp.sum(pssq[:, 0, :], axis=0, keepdims=True)
    mean1 = s1 / cnt
    var1 = jnp.maximum(ss1 / cnt - mean1 * mean1, 0.0)
    scale1 = kp['g_bn1'] / jnp.sqrt(var1 + BN_EPS)             # (1, Cc)
    shift1 = kp['beta_bn1'] - mean1 * scale1                   # (1, Cc)

    # K-tiled fc1 + fused head.  y is consumed directly as (B, tl, Cc) bf16
    # blocks (no glue reshape/pad); the fc1 weight is already (Lp, Cc, D) bf16.
    # TODO(synk): on v7x, add a leading size-2 'parallel' grid axis partitioning
    # the K tiles across the two TensorCores ((2,B,D) partials + tiny epilogue).
    # TODO(synk): optionally pipeline_mode=pl.Buffered(3) on the weight spec
    # (only with tk<=4096-6144 or a raised vmem_limit_bytes).
    out = pl.pallas_call(
        fc1_head_kernel,
        out_shape=jax.ShapeDtypeStruct((B, OUTPUT_DIM), jnp.float32),
        grid=(Lp // tl,),
        in_specs=[pl.BlockSpec((B, tl, Cc), lambda k: (0, k, 0)),
                  pl.BlockSpec((1, Cc), lambda k: (0, 0)),
                  pl.BlockSpec((1, Cc), lambda k: (0, 0)),
                  pl.BlockSpec((tl, Cc, D), lambda k: (k, 0, 0)),
                  pl.BlockSpec((1, D), lambda k: (0, 0)),
                  pl.BlockSpec((1, D), lambda k: (0, 0)),
                  pl.BlockSpec((1, D), lambda k: (0, 0)),
                  pl.BlockSpec((1, D), lambda k: (0, 0)),
                  pl.BlockSpec((1, 1), lambda k: (0, 0))],
        out_specs=pl.BlockSpec((B, OUTPUT_DIM), lambda k: (0, 0)),
        scratch_shapes=[pltpu.VMEM((B, D), jnp.float32)],
        compiler_params=pltpu.CompilerParams(
            dimension_semantics=("arbitrary",),
            vmem_limit_bytes=VMEM_LIMIT_BYTES),
    )(y, scale1, shift1, kp['w_fc1'], kp['b_fc1'],
      kp['g_bn2'], kp['beta_bn2'], kp['w_fc2'], kp['b_fc2'])
    return out                                # (B, 1)


# ------------------------------------------------------------------ params
def init_params(key):
    ks = jax.random.split(key, 10)
    n = lambda k, shape, s=0.02: s * jax.random.normal(k, shape, jnp.float32)
    # Conv weights ~ N(0, 0.02), BN gamma ~ N(1, 0.02), BN beta = 0 (weights_init);
    # Linear weights/biases use scaled normals (synthetic, deterministic).
    return dict(
        w_conv1=n(ks[0], (CHANNEL_D, INPUT_CHANNEL, 3)),
        b_conv1=n(ks[1], (CHANNEL_D,)),
        w_conv2=n(ks[2], (CHANNEL_C, CHANNEL_D, 3)),
        b_conv2=n(ks[3], (CHANNEL_C,)),
        g_bn1=1.0 + n(ks[4], (CHANNEL_C,)),
        beta_bn1=jnp.zeros((CHANNEL_C,), jnp.float32),
        w_fc1=n(ks[5], (LATENT_DIM, CHANNEL_C * INPUT_FEATURES)),
        b_fc1=n(ks[6], (LATENT_DIM,)),
        g_bn2=1.0 + n(ks[7], (LATENT_DIM,)),
        beta_bn2=jnp.zeros((LATENT_DIM,), jnp.float32),
        w_fc2=n(ks[8], (OUTPUT_DIM, LATENT_DIM)),
        b_fc2=n(ks[9], (OUTPUT_DIM,)),
    )


# ------------------------------------------------------------------ reference
def reference_forward(inp, p):
    L, Cc = INPUT_FEATURES, CHANNEL_C
    x = inp.reshape(-1, 1, L)                                  # NCL
    B = x.shape[0]
    xp = jnp.pad(x, ((0, 0), (0, 0), (1, 1)))
    cols = jnp.stack([xp[:, :, k:k + L] for k in range(3)], axis=-1)     # (B,1,L,3)
    h = jnp.einsum('bilk,dik->bdl', cols, p['w_conv1']) + p['b_conv1'][None, :, None]
    h = jnp.maximum(h, 0.0)                                    # (B, Cd, L)
    hp = jnp.pad(h, ((0, 0), (0, 0), (1, 1)))
    cols2 = jnp.stack([hp[:, :, k:k + L] for k in range(3)], axis=-1)    # (B,Cd,L,3)
    y = jnp.einsum('bdlk,cdk->bcl', cols2, p['w_conv2']) + p['b_conv2'][None, :, None]
    y = jnp.maximum(y, 0.0)                                    # (B, Cc, L)
    mean = jnp.mean(y, axis=(0, 2), keepdims=True)
    var = jnp.mean((y - mean) ** 2, axis=(0, 2), keepdims=True)
    ybn = ((y - mean) / jnp.sqrt(var + BN_EPS) * p['g_bn1'][None, :, None]
           + p['beta_bn1'][None, :, None])
    flat = ybn.reshape(B, Cc * L)
    z = jnp.maximum(flat @ p['w_fc1'].T + p['b_fc1'], 0.0)
    m2 = jnp.mean(z, axis=0, keepdims=True)
    v2 = jnp.mean((z - m2) ** 2, axis=0, keepdims=True)
    zbn = (z - m2) / jnp.sqrt(v2 + BN_EPS) * p['g_bn2'] + p['beta_bn2']
    o = zbn @ p['w_fc2'].T + p['b_fc2']
    return (1.0 / (1.0 + jnp.exp(-o))).reshape(-1, 1)


if __name__ == "__main__":
    key = jax.random.PRNGKey(0)
    pkey, xkey = jax.random.split(key)
    params = init_params(pkey)
    kparams = prepare_params(params)          # one-time, outside the jitted forward
    x = jax.random.normal(xkey, (4, INPUT_CHANNEL, INPUT_FEATURES), jnp.float32)

    out = discriminator_forward(x, kparams)
    jax.block_until_ready(out)
    assert out.shape == (4, 1)

    ref = reference_forward(x, params)
    err = float(jnp.max(jnp.abs(out - ref)))
    # conv2 activations, y writeback and the fc1 weight are streamed in bf16
    # (all matmuls accumulate in f32) -> looser tolerance than pure f32.
    if err > 2e-2:
        raise AssertionError(f"kernel/reference mismatch, max abs err = {err}")
    print("KERNEL_OK")
</pallas_src>

<mosaic_0001>
module attributes {stable_mosaic.version = 11 : i64} {
  func.func @convs_kernel(%arg0: i32, %arg1: memref<1x202x1xf32, #tpu.memory_space<vmem>>, %arg2: memref<3x128xf32, #tpu.memory_space<vmem>>, %arg3: memref<1x128xf32, #tpu.memory_space<vmem>>, %arg4: memref<3x128x128xbf16, #tpu.memory_space<vmem>>, %arg5: memref<1x128xf32, #tpu.memory_space<vmem>>, %arg6: memref<1x208x128xbf16, #tpu.memory_space<vmem>>, %arg7: memref<1x1x128xf32, #tpu.memory_space<vmem>>, %arg8: memref<1x1x128xf32, #tpu.memory_space<vmem>>, %arg9: memref<232x128xbf16, #tpu.memory_space<vmem>>) attributes {dimension_semantics = [#tpu.dimension_semantics<parallel>], iteration_bounds = array<i64: 4>, scalar_prefetch = 0 : i64, scratch_operands = 1 : i64, tpu.core_type = #tpu.core_type<tc>, window_params = [{transform_indices = @transform_0, window_bounds = array<i64: 1, 202, 1>}, {pipeline_mode = #tpu.pipeline_mode<synchronous>, transform_indices = @transform_1, window_bounds = array<i64: 3, 128>}, {pipeline_mode = #tpu.pipeline_mode<synchronous>, transform_indices = @transform_2, window_bounds = array<i64: 1, 128>}, {pipeline_mode = #tpu.pipeline_mode<synchronous>, transform_indices = @transform_3, window_bounds = array<i64: 3, 128, 128>}, {pipeline_mode = #tpu.pipeline_mode<synchronous>, transform_indices = @transform_4, window_bounds = array<i64: 1, 128>}, {transform_indices = @transform_5, window_bounds = array<i64: 1, 208, 128>}, {transform_indices = @transform_6, window_bounds = array<i64: 1, 1, 128>}, {transform_indices = @transform_7, window_bounds = array<i64: 1, 1, 128>}]} {
    %c0 = arith.constant 0 : index
    %c0_0 = arith.constant 0 : index
    %c0_1 = arith.constant 0 : index
    %0 = vector.load %arg1[%c0, %c0_0, %c0_1] : memref<1x202x1xf32, #tpu.memory_space<vmem>>, vector<1x202x1xf32>
    %1 = vector.shape_cast %0 : vector<1x202x1xf32> to vector<202x1xf32>
    %c0_2 = arith.constant 0 : index
    %c0_3 = arith.constant 0 : index
    %2 = vector.load %arg2[%c0_2, %c0_3] : memref<3x128xf32, #tpu.memory_space<vmem>>, vector<3x128xf32>
    %3 = vector.extract_strided_slice %1 {offsets = [0, 0], sizes = [200, 1], strides = [1, 1]} : vector<202x1xf32> to vector<200x1xf32>
    %4 = vector.extract_strided_slice %2 {offsets = [0, 0], sizes = [1, 128], strides = [1, 1]} : vector<3x128xf32> to vector<1x128xf32>
    %5 = vector.broadcast %3 : vector<200x1xf32> to vector<200x128xf32>
    %6 = vector.broadcast %4 : vector<1x128xf32> to vector<200x128xf32>
    %7 = arith.mulf %5, %6 : vector<200x128xf32>
    %8 = vector.extract_strided_slice %1 {offsets = [1, 0], sizes = [200, 1], strides = [1, 1]} : vector<202x1xf32> to vector<200x1xf32>
    %9 = vector.extract_strided_slice %2 {offsets = [1, 0], sizes = [1, 128], strides = [1, 1]} : vector<3x128xf32> to vector<1x128xf32>
    %10 = vector.broadcast %8 : vector<200x1xf32> to vector<200x128xf32>
    %11 = vector.broadcast %9 : vector<1x128xf32> to vector<200x128xf32>
    %12 = arith.mulf %10, %11 : vector<200x128xf32>
    %13 = arith.addf %7, %12 : vector<200x128xf32>
    %14 = vector.extract_strided_slice %1 {offsets = [2, 0], sizes = [200, 1], strides = [1, 1]} : vector<202x1xf32> to vector<200x1xf32>
    %15 = vector.extract_strided_slice %2 {offsets = [2, 0], sizes = [1, 128], strides = [1, 1]} : vector<3x128xf32> to vector<1x128xf32>
    %16 = vector.broadcast %14 : vector<200x1xf32> to vector<200x128xf32>
    %17 = vector.broadcast %15 : vector<1x128xf32> to vector<200x128xf32>
    %18 = arith.mulf %16, %17 : vector<200x128xf32>
    %19 = arith.addf %13, %18 : vector<200x128xf32>
    %c0_4 = arith.constant 0 : index
    %c0_5 = arith.constant 0 : index
    %20 = vector.load %arg3[%c0_4, %c0_5] : memref<1x128xf32, #tpu.memory_space<vmem>>, vector<1x128xf32>
    %21 = vector.broadcast %20 : vector<1x128xf32> to vector<200x128xf32>
    %22 = arith.addf %19, %21 : vector<200x128xf32>
    %cst = arith.constant 0.000000e+00 : f32
    %23 = vector.broadcast %cst : f32 to vector<200x128xf32>
    %24 = arith.maximumf %22, %23 : vector<200x128xf32>
    %25 = arith.truncf %24 : vector<200x128xf32> to vector<200x128xbf16>
    %cst_6 = arith.constant 0.000000e+00 : bf16
    %26 = vector.broadcast %cst_6 : bf16 to vector<1x128xbf16>
    %c15 = arith.constant 15 : index
    %c0_7 = arith.constant 0 : index
    %27 = vector.load %arg9[%c15, %c0_7] : memref<232x128xbf16, #tpu.memory_space<vmem>>, vector<1x128xbf16>
    tpu.vector_store %arg9[%c15, %c0_7], %26 {strides = array<i32>} : memref<232x128xbf16, #tpu.memory_space<vmem>>, vector<1x128xbf16>,
    %c216 = arith.constant 216 : index
    %c0_8 = arith.constant 0 : index
    %28 = vector.load %arg9[%c216, %c0_8] : memref<232x128xbf16, #tpu.memory_space<vmem>>, vector<1x128xbf16>
    tpu.vector_store %arg9[%c216, %c0_8], %26 {strides = array<i32>} : memref<232x128xbf16, #tpu.memory_space<vmem>>, vector<1x128xbf16>,
    %c16 = arith.constant 16 : index
    %c0_9 = arith.constant 0 : index
    %29 = vector.load %arg9[%c16, %c0_9] : memref<232x128xbf16, #tpu.memory_space<vmem>>, vector<200x128xbf16>
    tpu.vector_store %arg9[%c16, %c0_9], %25 {strides = array<i32>} : memref<232x128xbf16, #tpu.memory_space<vmem>>, vector<200x128xbf16>,
    %c0_10 = arith.constant 0 : index
    %c0_11 = arith.constant 0 : index
    %c0_12 = arith.constant 0 : index
    %30 = vector.load %arg4[%c0_10, %c0_11, %c0_12] : memref<3x128x128xbf16, #tpu.memory_space<vmem>>, vector<3x128x128xbf16>
    %c15_13 = arith.constant 15 : index
    %c0_14 = arith.constant 0 : index
    %31 = vector.load %arg9[%c15_13, %c0_14] : memref<232x128xbf16, #tpu.memory_space<vmem>>, vector<200x128xbf16>
    %32 = vector.extract_strided_slice %30 {offsets = [0, 0, 0], sizes = [1, 128, 128], strides = [1, 1, 1]} : vector<3x128x128xbf16> to vector<1x128x128xbf16>
    %33 = vector.shape_cast %32 : vector<1x128x128xbf16> to vector<128x128xbf16>
    %cst_15 = arith.constant dense<0.000000e+00> : vector<200x128xf32>
    %34 = tpu.matmul %31, %33, %cst_15 {dimension_numbers = #tpu.dot_dimension_numbers<[1], [0], [0], [1], [0, 0, 1, 1], [], []>} : vector<200x128xbf16>, vector<128x128xbf16>, vector<200x128xf32> -> vector<200x128xf32>
    %35 = vector.extract_strided_slice %30 {offsets = [1, 0, 0], sizes = [1, 128, 128], strides = [1, 1, 1]} : vector<3x128x128xbf16> to vector<1x128x128xbf16>
    %36 = vector.shape_cast %35 : vector<1x128x128xbf16> to vector<128x128xbf16>
    %cst_16 = arith.constant dense<0.000000e+00> : vector<200x128xf32>
    %37 = tpu.matmul %25, %36, %cst_16 {dimension_numbers = #tpu.dot_dimension_numbers<[1], [0], [0], [1], [0, 0, 1, 1], [], []>} : vector<200x128xbf16>, vector<128x128xbf16>, vector<200x128xf32> -> vector<200x128xf32>
    %38 = arith.addf %34, %37 : vector<200x128xf32>
    %c17 = arith.constant 17 : index
    %c0_17 = arith.constant 0 : index
    %39 = vector.load %arg9[%c17, %c0_17] : memref<232x128xbf16, #tpu.memory_space<vmem>>, vector<200x128xbf16>
    %40 = vector.extract_strided_slice %30 {offsets = [2, 0, 0], sizes = [1, 128, 128], strides = [1, 1, 1]} : vector<3x128x128xbf16> to vector<1x128x128xbf16>
    %41 = vector.shape_cast %40 : vector<1x128x128xbf16> to vector<128x128xbf16>
    %cst_18 = arith.constant dense<0.000000e+00> : vector<200x128xf32>
    %42 = tpu.matmul %39, %41, %cst_18 {dimension_numbers = #tpu.dot_dimension_numbers<[1], [0], [0], [1], [0, 0, 1, 1], [], []>} : vector<200x128xbf16>, vector<128x128xbf16>, vector<200x128xf32> -> vector<200x128xf32>
    %43 = arith.addf %38, %42 : vector<200x128xf32>
    %c0_19 = arith.constant 0 : index
    %c0_20 = arith.constant 0 : index
    %44 = vector.load %arg5[%c0_19, %c0_20] : memref<1x128xf32, #tpu.memory_space<vmem>>, vector<1x128xf32>
    %45 = vector.broadcast %44 : vector<1x128xf32> to vector<200x128xf32>
    %46 = arith.addf %43, %45 : vector<200x128xf32>
    %cst_21 = arith.constant 0.000000e+00 : f32
    %47 = vector.broadcast %cst_21 : f32 to vector<200x128xf32>
    %48 = arith.maximumf %46, %47 : vector<200x128xf32>
    %cst_22 = arith.constant dense<0.000000e+00> : vector<128xf32>
    %49 = vector.multi_reduction <add>, %48, %cst_22 [0] : vector<200x128xf32> to vector<128xf32>
    %50 = vector.shape_cast %49 : vector<128xf32> to vector<1x128xf32>
    %c0_23 = arith.constant 0 : index
    %c0_24 = arith.constant 0 : index
    %c0_25 = arith.constant 0 : index
    %51 = vector.load %arg7[%c0_23, %c0_24, %c0_25] : memref<1x1x128xf32, #tpu.memory_space<vmem>>, vector<1x1x128xf32>
    %52 = vector.shape_cast %51 : vector<1x1x128xf32> to vector<1x128xf32>
    %53 = vector.shape_cast %50 : vector<1x128xf32> to vector<1x1x128xf32>
    tpu.vector_store %arg7[%c0_23, %c0_24, %c0_25], %53 {strides = array<i32>} : memref<1x1x128xf32, #tpu.memory_space<vmem>>, vector<1x1x128xf32>,
    %54 = arith.mulf %48, %48 : vector<200x128xf32>
    %cst_26 = arith.constant dense<0.000000e+00> : vector<128xf32>
    %55 = vector.multi_reduction <add>, %54, %cst_26 [0] : vector<200x128xf32> to vector<128xf32>
    %56 = vector.shape_cast %55 : vector<128xf32> to vector<1x128xf32>
    %c0_27 = arith.constant 0 : index
    %c0_28 = arith.constant 0 : index
    %c0_29 = arith.constant 0 : index
    %57 = vector.load %arg8[%c0_27, %c0_28, %c0_29] : memref<1x1x128xf32, #tpu.memory_space<vmem>>, vector<1x1x128xf32>
    %58 = vector.shape_cast %57 : vector<1x1x128xf32> to vector<1x128xf32>
    %59 = vector.shape_cast %56 : vector<1x128xf32> to vector<1x1x128xf32>
    tpu.vector_store %arg8[%c0_27, %c0_28, %c0_29], %59 {strides = array<i32>} : memref<1x1x128xf32, #tpu.memory_space<vmem>>, vector<1x1x128xf32>,
    %60 = arith.truncf %48 : vector<200x128xf32> to vector<200x128xbf16>
    %c0_30 = arith.constant 0 : index
    %c0_31 = arith.constant 0 : index
    %c0_32 = arith.constant 0 : index
    %61 = vector.load %arg6[%c0_30, %c0_31, %c0_32] : memref<1x208x128xbf16, #tpu.memory_space<vmem>>, vector<1x200x128xbf16>
    %62 = vector.shape_cast %61 : vector<1x200x128xbf16> to vector<200x128xbf16>
    %63 = vector.shape_cast %60 : vector<200x128xbf16> to vector<1x200x128xbf16>
    tpu.vector_store %arg6[%c0_30, %c0_31, %c0_32], %63 {strides = array<i32>} : memref<1x208x128xbf16, #tpu.memory_space<vmem>>, vector<1x200x128xbf16>,
    %cst_33 = arith.constant 0.000000e+00 : bf16
    %64 = vector.broadcast %cst_33 : bf16 to vector<8x128xbf16>
    %c0_34 = arith.constant 0 : index
    %c200 = arith.constant 200 : index
    %c0_35 = arith.constant 0 : index
    %65 = vector.load %arg6[%c0_34, %c200, %c0_35] : memref<1x208x128xbf16, #tpu.memory_space<vmem>>, vector<1x8x128xbf16>
    %66 = vector.shape_cast %65 : vector<1x8x128xbf16> to vector<8x128xbf16>
    %67 = vector.shape_cast %64 : vector<8x128xbf16> to vector<1x8x128xbf16>
    tpu.vector_store %arg6[%c0_34, %c200, %c0_35], %67 {strides = array<i32>} : memref<1x208x128xbf16, #tpu.memory_space<vmem>>, vector<1x8x128xbf16>,
    return
  }
  func.func @transform_0(%arg0: i32) -> (i32, i32, i32) {
    %c0_i32 = arith.constant 0 : i32
    %c0_i32_0 = arith.constant 0 : i32
    %c0_i32_1 = arith.constant 0 : i32
    return %arg0, %c0_i32, %c0_i32_0 : i32, i32, i32
  }
  func.func @transform_1(%arg0: i32) -> (i32, i32) {
    %c0_i32 = arith.constant 0 : i32
    %c0_i32_0 = arith.constant 0 : i32
    %c0_i32_1 = arith.constant 0 : i32
    return %c0_i32, %c0_i32_0 : i32, i32
  }
  func.func @transform_2(%arg0: i32) -> (i32, i32) {
    %c0_i32 = arith.constant 0 : i32
    %c0_i32_0 = arith.constant 0 : i32
    %c0_i32_1 = arith.constant 0 : i32
    return %c0_i32, %c0_i32_0 : i32, i32
  }
  func.func @transform_3(%arg0: i32) -> (i32, i32, i32) {
    %c0_i32 = arith.constant 0 : i32
    %c0_i32_0 = arith.constant 0 : i32
    %c0_i32_1 = arith.constant 0 : i32
    %c0_i32_2 = arith.constant 0 : i32
    return %c0_i32, %c0_i32_0, %c0_i32_1 : i32, i32, i32
  }
  func.func @transform_4(%arg0: i32) -> (i32, i32) {
    %c0_i32 = arith.constant 0 : i32
    %c0_i32_0 = arith.constant 0 : i32
    %c0_i32_1 = arith.constant 0 : i32
    return %c0_i32, %c0_i32_0 : i32, i32
  }
  func.func @transform_5(%arg0: i32) -> (i32, i32, i32) {
    %c0_i32 = arith.constant 0 : i32
    %c0_i32_0 = arith.constant 0 : i32
    %c0_i32_1 = arith.constant 0 : i32
    return %arg0, %c0_i32, %c0_i32_0 : i32, i32, i32
  }
  func.func @transform_6(%arg0: i32) -> (i32, i32, i32) {
    %c0_i32 = arith.constant 0 : i32
    %c0_i32_0 = arith.constant 0 : i32
    %c0_i32_1 = arith.constant 0 : i32
    return %arg0, %c0_i32, %c0_i32_0 : i32, i32, i32
  }
  func.func @transform_7(%arg0: i32) -> (i32, i32, i32) {
    %c0_i32 = arith.constant 0 : i32
    %c0_i32_0 = arith.constant 0 : i32
    %c0_i32_1 = arith.constant 0 : i32
    return %arg0, %c0_i32, %c0_i32_0 : i32, i32, i32
  }
}

module attributes {stable_mosaic.version = 11 : i64} {
  func.func @fc1_head_kernel(%arg0: i32, %arg1: memref<4x16x128xbf16, #tpu.memory_space<vmem>>, %arg2: memref<1x128xf32, #tpu.memory_space<vmem>>, %arg3: memref<1x128xf32, #tpu.memory_space<vmem>>, %arg4: memref<16x128x128xbf16, #tpu.memory_space<vmem>>, %arg5: memref<1x128xf32, #tpu.memory_space<vmem>>, %arg6: memref<1x128xf32, #tpu.memory_space<vmem>>, %arg7: memref<1x128xf32, #tpu.memory_space<vmem>>, %arg8: memref<1x128xf32, #tpu.memory_space<vmem>>, %arg9: memref<1x1xf32, #tpu.memory_space<vmem>>, %arg10: memref<4x1xf32, #tpu.memory_space<vmem>>, %arg11: memref<4x128xf32, #tpu.memory_space<vmem>>) attributes {dimension_semantics = [#tpu.dimension_semantics<arbitrary>], iteration_bounds = array<i64: 13>, scalar_prefetch = 0 : i64, scratch_operands = 1 : i64, tpu.core_type = #tpu.core_type<tc>, window_params = [{transform_indices = @transform_0, window_bounds = array<i64: 4, 16, 128>}, {pipeline_mode = #tpu.pipeline_mode<synchronous>, transform_indices = @transform_1, window_bounds = array<i64: 1, 128>}, {pipeline_mode = #tpu.pipeline_mode<synchronous>, transform_indices = @transform_2, window_bounds = array<i64: 1, 128>}, {transform_indices = @transform_3, window_bounds = array<i64: 16, 128, 128>}, {pipeline_mode = #tpu.pipeline_mode<synchronous>, transform_indices = @transform_4, window_bounds = array<i64: 1, 128>}, {pipeline_mode = #tpu.pipeline_mode<synchronous>, transform_indices = @transform_5, window_bounds = array<i64: 1, 128>}, {pipeline_mode = #tpu.pipeline_mode<synchronous>, transform_indices = @transform_6, window_bounds = array<i64: 1, 128>}, {pipeline_mode = #tpu.pipeline_mode<synchronous>, transform_indices = @transform_7, window_bounds = array<i64: 1, 128>}, {pipeline_mode = #tpu.pipeline_mode<synchronous>, transform_indices = @transform_8, window_bounds = array<i64: 1, 1>}, {pipeline_mode = #tpu.pipeline_mode<synchronous>, transform_indices = @transform_9, window_bounds = array<i64: 4, 1>}]} {
    %c0_i32 = arith.constant 0 : i32
    %0 = arith.cmpi eq, %arg0, %c0_i32 : i32
    %1 = arith.extui %0 : i1 to i32
    %c0_i32_0 = arith.constant 0 : i32
    %2 = arith.cmpi ne, %1, %c0_i32_0 : i32
    scf.if %2 {
      %cst_120 = arith.constant 0.000000e+00 : f32
      %233 = vector.broadcast %cst_120 : f32 to vector<4x128xf32>
      %c0_121 = arith.constant 0 : index
      %c0_122 = arith.constant 0 : index
      %234 = vector.load %arg11[%c0_121, %c0_122] : memref<4x128xf32, #tpu.memory_space<vmem>>, vector<4x128xf32>
      tpu.vector_store %arg11[%c0_121, %c0_122], %233 {strides = array<i32>} : memref<4x128xf32, #tpu.memory_space<vmem>>, vector<4x128xf32>,
    } else {
    }
    %c0 = arith.constant 0 : index
    %c0_1 = arith.constant 0 : index
    %3 = vector.load %arg2[%c0, %c0_1] : memref<1x128xf32, #tpu.memory_space<vmem>>, vector<1x128xf32>
    %c0_2 = arith.constant 0 : index
    %c0_3 = arith.constant 0 : index
    %4 = vector.load %arg3[%c0_2, %c0_3] : memref<1x128xf32, #tpu.memory_space<vmem>>, vector<1x128xf32>
    %c0_4 = arith.constant 0 : index
    %c0_5 = arith.constant 0 : index
    %c0_6 = arith.constant 0 : index
    %5 = vector.load %arg1[%c0_4, %c0_5, %c0_6] : memref<4x16x128xbf16, #tpu.memory_space<vmem>>, vector<4x16x128xbf16>
    %6 = vector.extract_strided_slice %5 {offsets = [0, 0, 0], sizes = [4, 1, 128], strides = [1, 1, 1]} : vector<4x16x128xbf16> to vector<4x1x128xbf16>
    %7 = vector.shape_cast %6 : vector<4x1x128xbf16> to vector<4x128xbf16>
    %8 = arith.extf %7 : vector<4x128xbf16> to vector<4x128xf32>
    %9 = vector.broadcast %3 : vector<1x128xf32> to vector<4x128xf32>
    %10 = arith.mulf %8, %9 : vector<4x128xf32>
    %11 = vector.broadcast %4 : vector<1x128xf32> to vector<4x128xf32>
    %12 = arith.addf %10, %11 : vector<4x128xf32>
    %c0_7 = arith.constant 0 : index
    %c0_8 = arith.constant 0 : index
    %13 = vector.load %arg11[%c0_7, %c0_8] : memref<4x128xf32, #tpu.memory_space<vmem>>, vector<4x128xf32>
    %14 = arith.truncf %12 : vector<4x128xf32> to vector<4x128xbf16>
    %c0_9 = arith.constant 0 : index
    %c0_10 = arith.constant 0 : index
    %c0_11 = arith.constant 0 : index
    %15 = vector.load %arg4[%c0_9, %c0_10, %c0_11] : memref<16x128x128xbf16, #tpu.memory_space<vmem>>, vector<1x128x128xbf16>
    %16 = vector.shape_cast %15 : vector<1x128x128xbf16> to vector<128x128xbf16>
    %cst = arith.constant dense<0.000000e+00> : vector<4x128xf32>
    %17 = tpu.matmul %14, %16, %cst {dimension_numbers = #tpu.dot_dimension_numbers<[1], [0], [0], [1], [0, 0, 1, 1], [], []>} : vector<4x128xbf16>, vector<128x128xbf16>, vector<4x128xf32> -> vector<4x128xf32>
    %18 = arith.addf %13, %17 : vector<4x128xf32>
    %c0_12 = arith.constant 0 : index
    %c0_13 = arith.constant 0 : index
    %19 = vector.load %arg11[%c0_12, %c0_13] : memref<4x128xf32, #tpu.memory_space<vmem>>, vector<4x128xf32>
    tpu.vector_store %arg11[%c0_12, %c0_13], %18 {strides = array<i32>} : memref<4x128xf32, #tpu.memory_space<vmem>>, vector<4x128xf32>,
    %20 = vector.extract_strided_slice %5 {offsets = [0, 1, 0], sizes = [4, 1, 128], strides = [1, 1, 1]} : vector<4x16x128xbf16> to vector<4x1x128xbf16>
    %21 = vector.shape_cast %20 : vector<4x1x128xbf16> to vector<4x128xbf16>
    %22 = arith.extf %21 : vector<4x128xbf16> to vector<4x128xf32>
    %23 = vector.broadcast %3 : vector<1x128xf32> to vector<4x128xf32>
    %24 = arith.mulf %22, %23 : vector<4x128xf32>
    %25 = vector.broadcast %4 : vector<1x128xf32> to vector<4x128xf32>
    %26 = arith.addf %24, %25 : vector<4x128xf32>
    %c0_14 = arith.constant 0 : index
    %c0_15 = arith.constant 0 : index
    %27 = vector.load %arg11[%c0_14, %c0_15] : memref<4x128xf32, #tpu.memory_space<vmem>>, vector<4x128xf32>
    %28 = arith.truncf %26 : vector<4x128xf32> to vector<4x128xbf16>
    %c1 = arith.constant 1 : index
    %c0_16 = arith.constant 0 : index
    %c0_17 = arith.constant 0 : index
    %29 = vector.load %arg4[%c1, %c0_16, %c0_17] : memref<16x128x128xbf16, #tpu.memory_space<vmem>>, vector<1x128x128xbf16>
    %30 = vector.shape_cast %29 : vector<1x128x128xbf16> to vector<128x128xbf16>
    %cst_18 = arith.constant dense<0.000000e+00> : vector<4x128xf32>
    %31 = tpu.matmul %28, %30, %cst_18 {dimension_numbers = #tpu.dot_dimension_numbers<[1], [0], [0], [1], [0, 0, 1, 1], [], []>} : vector<4x128xbf16>, vector<128x128xbf16>, vector<4x128xf32> -> vector<4x128xf32>
    %32 = arith.addf %27, %31 : vector<4x128xf32>
    %c0_19 = arith.constant 0 : index
    %c0_20 = arith.constant 0 : index
    %33 = vector.load %arg11[%c0_19, %c0_20] : memref<4x128xf32, #tpu.memory_space<vmem>>, vector<4x128xf32>
    tpu.vector_store %arg11[%c0_19, %c0_20], %32 {strides = array<i32>} : memref<4x128xf32, #tpu.memory_space<vmem>>, vector<4x128xf32>,
    %34 = vector.extract_strided_slice %5 {offsets = [0, 2, 0], sizes = [4, 1, 128], strides = [1, 1, 1]} : vector<4x16x128xbf16> to vector<4x1x128xbf16>
    %35 = vector.shape_cast %34 : vector<4x1x128xbf16> to vector<4x128xbf16>
    %36 = arith.extf %35 : vector<4x128xbf16> to vector<4x128xf32>
    %37 = vector.broadcast %3 : vector<1x128xf32> to vector<4x128xf32>
    %38 = arith.mulf %36, %37 : vector<4x128xf32>
    %39 = vector.broadcast %4 : vector<1x128xf32> to vector<4x128xf32>
    %40 = arith.addf %38, %39 : vector<4x128xf32>
    %c0_21 = arith.constant 0 : index
    %c0_22 = arith.constant 0 : index
    %41 = vector.load %arg11[%c0_21, %c0_22] : memref<4x128xf32, #tpu.memory_space<vmem>>, vector<4x128xf32>
    %42 = arith.truncf %40 : vector<4x128xf32> to vector<4x128xbf16>
    %c2 = arith.constant 2 : index
    %c0_23 = arith.constant 0 : index
    %c0_24 = arith.constant 0 : index
    %43 = vector.load %arg4[%c2, %c0_23, %c0_24] : memref<16x128x128xbf16, #tpu.memory_space<vmem>>, vector<1x128x128xbf16>
    %44 = vector.shape_cast %43 : vector<1x128x128xbf16> to vector<128x128xbf16>
    %cst_25 = arith.constant dense<0.000000e+00> : vector<4x128xf32>
    %45 = tpu.matmul %42, %44, %cst_25 {dimension_numbers = #tpu.dot_dimension_numbers<[1], [0], [0], [1], [0, 0, 1, 1], [], []>} : vector<4x128xbf16>, vector<128x128xbf16>, vector<4x128xf32> -> vector<4x128xf32>
    %46 = arith.addf %41, %45 : vector<4x128xf32>
    %c0_26 = arith.constant 0 : index
    %c0_27 = arith.constant 0 : index
    %47 = vector.load %arg11[%c0_26, %c0_27] : memref<4x128xf32, #tpu.memory_space<vmem>>, vector<4x128xf32>
    tpu.vector_store %arg11[%c0_26, %c0_27], %46 {strides = array<i32>} : memref<4x128xf32, #tpu.memory_space<vmem>>, vector<4x128xf32>,
    %48 = vector.extract_strided_slice %5 {offsets = [0, 3, 0], sizes = [4, 1, 128], strides = [1, 1, 1]} : vector<4x16x128xbf16> to vector<4x1x128xbf16>
    %49 = vector.shape_cast %48 : vector<4x1x128xbf16> to vector<4x128xbf16>
    %50 = arith.extf %49 : vector<4x128xbf16> to vector<4x128xf32>
    %51 = vector.broadcast %3 : vector<1x128xf32> to vector<4x128xf32>
    %52 = arith.mulf %50, %51 : vector<4x128xf32>
    %53 = vector.broadcast %4 : vector<1x128xf32> to vector<4x128xf32>
    %54 = arith.addf %52, %53 : vector<4x128xf32>
    %c0_28 = arith.constant 0 : index
    %c0_29 = arith.constant 0 : index
    %55 = vector.load %arg11[%c0_28, %c0_29] : memref<4x128xf32, #tpu.memory_space<vmem>>, vector<4x128xf32>
    %56 = arith.truncf %54 : vector<4x128xf32> to vector<4x128xbf16>
    %c3 = arith.constant 3 : index
    %c0_30 = arith.constant 0 : index
    %c0_31 = arith.constant 0 : index
    %57 = vector.load %arg4[%c3, %c0_30, %c0_31] : memref<16x128x128xbf16, #tpu.memory_space<vmem>>, vector<1x128x128xbf16>
    %58 = vector.shape_cast %57 : vector<1x128x128xbf16> to vector<128x128xbf16>
    %cst_32 = arith.constant dense<0.000000e+00> : vector<4x128xf32>
    %59 = tpu.matmul %56, %58, %cst_32 {dimension_numbers = #tpu.dot_dimension_numbers<[1], [0], [0], [1], [0, 0, 1, 1], [], []>} : vector<4x128xbf16>, vector<128x128xbf16>, vector<4x128xf32> -> vector<4x128xf32>
    %60 = arith.addf %55, %59 : vector<4x128xf32>
    %c0_33 = arith.constant 0 : index
    %c0_34 = arith.constant 0 : index
    %61 = vector.load %arg11[%c0_33, %c0_34] : memref<4x128xf32, #tpu.memory_space<vmem>>, vector<4x128xf32>
    tpu.vector_store %arg11[%c0_33, %c0_34], %60 {strides = array<i32>} : memref<4x128xf32, #tpu.memory_space<vmem>>, vector<4x128xf32>,
    %62 = vector.extract_strided_slice %5 {offsets = [0, 4, 0], sizes = [4, 1, 128], strides = [1, 1, 1]} : vector<4x16x128xbf16> to vector<4x1x128xbf16>
    %63 = vector.shape_cast %62 : vector<4x1x128xbf16> to vector<4x128xbf16>
    %64 = arith.extf %63 : vector<4x128xbf16> to vector<4x128xf32>
    %65 = vector.broadcast %3 : vector<1x128xf32> to vector<4x128xf32>
    %66 = arith.mulf %64, %65 : vector<4x128xf32>
    %67 = vector.broadcast %4 : vector<1x128xf32> to vector<4x128xf32>
    %68 = arith.addf %66, %67 : vector<4x128xf32>
    %c0_35 = arith.constant 0 : index
    %c0_36 = arith.constant 0 : index
    %69 = vector.load %arg11[%c0_35, %c0_36] : memref<4x128xf32, #tpu.memory_space<vmem>>, vector<4x128xf32>
    %70 = arith.truncf %68 : vector<4x128xf32> to vector<4x128xbf16>
    %c4 = arith.constant 4 : index
    %c0_37 = arith.constant 0 : index
    %c0_38 = arith.constant 0 : index
    %71 = vector.load %arg4[%c4, %c0_37, %c0_38] : memref<16x128x128xbf16, #tpu.memory_space<vmem>>, vector<1x128x128xbf16>
    %72 = vector.shape_cast %71 : vector<1x128x128xbf16> to vector<128x128xbf16>
    %cst_39 = arith.constant dense<0.000000e+00> : vector<4x128xf32>
    %73 = tpu.matmul %70, %72, %cst_39 {dimension_numbers = #tpu.dot_dimension_numbers<[1], [0], [0], [1], [0, 0, 1, 1], [], []>} : vector<4x128xbf16>, vector<128x128xbf16>, vector<4x128xf32> -> vector<4x128xf32>
    %74 = arith.addf %69, %73 : vector<4x128xf32>
    %c0_40 = arith.constant 0 : index
    %c0_41 = arith.constant 0 : index
    %75 = vector.load %arg11[%c0_40, %c0_41] : memref<4x128xf32, #tpu.memory_space<vmem>>, vector<4x128xf32>
    tpu.vector_store %arg11[%c0_40, %c0_41], %74 {strides = array<i32>} : memref<4x128xf32, #tpu.memory_space<vmem>>, vector<4x128xf32>,
    %76 = vector.extract_strided_slice %5 {offsets = [0, 5, 0], sizes = [4, 1, 128], strides = [1, 1, 1]} : vector<4x16x128xbf16> to vector<4x1x128xbf16>
    %77 = vector.shape_cast %76 : vector<4x1x128xbf16> to vector<4x128xbf16>
    %78 = arith.extf %77 : vector<4x128xbf16> to vector<4x128xf32>
    %79 = vector.broadcast %3 : vector<1x128xf32> to vector<4x128xf32>
    %80 = arith.mulf %78, %79 : vector<4x128xf32>
    %81 = vector.broadcast %4 : vector<1x128xf32> to vector<4x128xf32>
    %82 = arith.addf %80, %81 : vector<4x128xf32>
    %c0_42 = arith.constant 0 : index
    %c0_43 = arith.constant 0 : index
    %83 = vector.load %arg11[%c0_42, %c0_43] : memref<4x128xf32, #tpu.memory_space<vmem>>, vector<4x128xf32>
    %84 = arith.truncf %82 : vector<4x128xf32> to vector<4x128xbf16>
    %c5 = arith.constant 5 : index
    %c0_44 = arith.constant 0 : index
    %c0_45 = arith.constant 0 : index
    %85 = vector.load %arg4[%c5, %c0_44, %c0_45] : memref<16x128x128xbf16, #tpu.memory_space<vmem>>, vector<1x128x128xbf16>
    %86 = vector.shape_cast %85 : vector<1x128x128xbf16> to vector<128x128xbf16>
    %cst_46 = arith.constant dense<0.000000e+00> : vector<4x128xf32>
    %87 = tpu.matmul %84, %86, %cst_46 {dimension_numbers = #tpu.dot_dimension_numbers<[1], [0], [0], [1], [0, 0, 1, 1], [], []>} : vector<4x128xbf16>, vector<128x128xbf16>, vector<4x128xf32> -> vector<4x128xf32>
    %88 = arith.addf %83, %87 : vector<4x128xf32>
    %c0_47 = arith.constant 0 : index
    %c0_48 = arith.constant 0 : index
    %89 = vector.load %arg11[%c0_47, %c0_48] : memref<4x128xf32, #tpu.memory_space<vmem>>, vector<4x128xf32>
    tpu.vector_store %arg11[%c0_47, %c0_48], %88 {strides = array<i32>} : memref<4x128xf32, #tpu.memory_space<vmem>>, vector<4x128xf32>,
    %90 = vector.extract_strided_slice %5 {offsets = [0, 6, 0], sizes = [4, 1, 128], strides = [1, 1, 1]} : vector<4x16x128xbf16> to vector<4x1x128xbf16>
    %91 = vector.shape_cast %90 : vector<4x1x128xbf16> to vector<4x128xbf16>
    %92 = arith.extf %91 : vector<4x128xbf16> to vector<4x128xf32>
    %93 = vector.broadcast %3 : vector<1x128xf32> to vector<4x128xf32>
    %94 = arith.mulf %92, %93 : vector<4x128xf32>
    %95 = vector.broadcast %4 : vector<1x128xf32> to vector<4x128xf32>
    %96 = arith.addf %94, %95 : vector<4x128xf32>
    %c0_49 = arith.constant 0 : index
    %c0_50 = arith.constant 0 : index
    %97 = vector.load %arg11[%c0_49, %c0_50] : memref<4x128xf32, #tpu.memory_space<vmem>>, vector<4x128xf32>
    %98 = arith.truncf %96 : vector<4x128xf32> to vector<4x128xbf16>
    %c6 = arith.constant 6 : index
    %c0_51 = arith.constant 0 : index
    %c0_52 = arith.constant 0 : index
    %99 = vector.load %arg4[%c6, %c0_51, %c0_52] : memref<16x128x128xbf16, #tpu.memory_space<vmem>>, vector<1x128x128xbf16>
    %100 = vector.shape_cast %99 : vector<1x128x128xbf16> to vector<128x128xbf16>
    %cst_53 = arith.constant dense<0.000000e+00> : vector<4x128xf32>
    %101 = tpu.matmul %98, %100, %cst_53 {dimension_numbers = #tpu.dot_dimension_numbers<[1], [0], [0], [1], [0, 0, 1, 1], [], []>} : vector<4x128xbf16>, vector<128x128xbf16>, vector<4x128xf32> -> vector<4x128xf32>
    %102 = arith.addf %97, %101 : vector<4x128xf32>
    %c0_54 = arith.constant 0 : index
    %c0_55 = arith.constant 0 : index
    %103 = vector.load %arg11[%c0_54, %c0_55] : memref<4x128xf32, #tpu.memory_space<vmem>>, vector<4x128xf32>
    tpu.vector_store %arg11[%c0_54, %c0_55], %102 {strides = array<i32>} : memref<4x128xf32, #tpu.memory_space<vmem>>, vector<4x128xf32>,
    %104 = vector.extract_strided_slice %5 {offsets = [0, 7, 0], sizes = [4, 1, 128], strides = [1, 1, 1]} : vector<4x16x128xbf16> to vector<4x1x128xbf16>
    %105 = vector.shape_cast %104 : vector<4x1x128xbf16> to vector<4x128xbf16>
    %106 = arith.extf %105 : vector<4x128xbf16> to vector<4x128xf32>
    %107 = vector.broadcast %3 : vector<1x128xf32> to vector<4x128xf32>
    %108 = arith.mulf %106, %107 : vector<4x128xf32>
    %109 = vector.broadcast %4 : vector<1x128xf32> to vector<4x128xf32>
    %110 = arith.addf %108, %109 : vector<4x128xf32>
    %c0_56 = arith.constant 0 : index
    %c0_57 = arith.constant 0 : index
    %111 = vector.load %arg11[%c0_56, %c0_57] : memref<4x128xf32, #tpu.memory_space<vmem>>, vector<4x128xf32>
    %112 = arith.truncf %110 : vector<4x128xf32> to vector<4x128xbf16>
    %c7 = arith.constant 7 : index
    %c0_58 = arith.constant 0 : index
    %c0_59 = arith.constant 0 : index
    %113 = vector.load %arg4[%c7, %c0_58, %c0_59] : memref<16x128x128xbf16, #tpu.memory_space<vmem>>, vector<1x128x128xbf16>
    %114 = vector.shape_cast %113 : vector<1x128x128xbf16> to vector<128x128xbf16>
    %cst_60 = arith.constant dense<0.000000e+00> : vector<4x128xf32>
    %115 = tpu.matmul %112, %114, %cst_60 {dimension_numbers = #tpu.dot_dimension_numbers<[1], [0], [0], [1], [0, 0, 1, 1], [], []>} : vector<4x128xbf16>, vector<128x128xbf16>, vector<4x128xf32> -> vector<4x128xf32>
    %116 = arith.addf %111, %115 : vector<4x128xf32>
    %c0_61 = arith.constant 0 : index
    %c0_62 = arith.constant 0 : index
    %117 = vector.load %arg11[%c0_61, %c0_62] : memref<4x128xf32, #tpu.memory_space<vmem>>, vector<4x128xf32>
    tpu.vector_store %arg11[%c0_61, %c0_62], %116 {strides = array<i32>} : memref<4x128xf32, #tpu.memory_space<vmem>>, vector<4x128xf32>,
    %118 = vector.extract_strided_slice %5 {offsets = [0, 8, 0], sizes = [4, 1, 128], strides = [1, 1, 1]} : vector<4x16x128xbf16> to vector<4x1x128xbf16>
    %119 = vector.shape_cast %118 : vector<4x1x128xbf16> to vector<4x128xbf16>
    %120 = arith.extf %119 : vector<4x128xbf16> to vector<4x128xf32>
    %121 = vector.broadcast %3 : vector<1x128xf32> to vector<4x128xf32>
    %122 = arith.mulf %120, %121 : vector<4x128xf32>
    %123 = vector.broadcast %4 : vector<1x128xf32> to vector<4x128xf32>
    %124 = arith.addf %122, %123 : vector<4x128xf32>
    %c0_63 = arith.constant 0 : index
    %c0_64 = arith.constant 0 : index
    %125 = vector.load %arg11[%c0_63, %c0_64] : memref<4x128xf32, #tpu.memory_space<vmem>>, vector<4x128xf32>
    %126 = arith.truncf %124 : vector<4x128xf32> to vector<4x128xbf16>
    %c8 = arith.constant 8 : index
    %c0_65 = arith.constant 0 : index
    %c0_66 = arith.constant 0 : index
    %127 = vector.load %arg4[%c8, %c0_65, %c0_66] : memref<16x128x128xbf16, #tpu.memory_space<vmem>>, vector<1x128x128xbf16>
    %128 = vector.shape_cast %127 : vector<1x128x128xbf16> to vector<128x128xbf16>
    %cst_67 = arith.constant dense<0.000000e+00> : vector<4x128xf32>
    %129 = tpu.matmul %126, %128, %cst_67 {dimension_numbers = #tpu.dot_dimension_numbers<[1], [0], [0], [1], [0, 0, 1, 1], [], []>} : vector<4x128xbf16>, vector<128x128xbf16>, vector<4x128xf32> -> vector<4x128xf32>
    %130 = arith.addf %125, %129 : vector<4x128xf32>
    %c0_68 = arith.constant 0 : index
    %c0_69 = arith.constant 0 : index
    %131 = vector.load %arg11[%c0_68, %c0_69] : memref<4x128xf32, #tpu.memory_space<vmem>>, vector<4x128xf32>
    tpu.vector_store %arg11[%c0_68, %c0_69], %130 {strides = array<i32>} : memref<4x128xf32, #tpu.memory_space<vmem>>, vector<4x128xf32>,
    %132 = vector.extract_strided_slice %5 {offsets = [0, 9, 0], sizes = [4, 1, 128], strides = [1, 1, 1]} : vector<4x16x128xbf16> to vector<4x1x128xbf16>
    %133 = vector.shape_cast %132 : vector<4x1x128xbf16> to vector<4x128xbf16>
    %134 = arith.extf %133 : vector<4x128xbf16> to vector<4x128xf32>
    %135 = vector.broadcast %3 : vector<1x128xf32> to vector<4x128xf32>
    %136 = arith.mulf %134, %135 : vector<4x128xf32>
    %137 = vector.broadcast %4 : vector<1x128xf32> to vector<4x128xf32>
    %138 = arith.addf %136, %137 : vector<4x128xf32>
    %c0_70 = arith.constant 0 : index
    %c0_71 = arith.constant 0 : index
    %139 = vector.load %arg11[%c0_70, %c0_71] : memref<4x128xf32, #tpu.memory_space<vmem>>, vector<4x128xf32>
    %140 = arith.truncf %138 : vector<4x128xf32> to vector<4x128xbf16>
    %c9 = arith.constant 9 : index
    %c0_72 = arith.constant 0 : index
    %c0_73 = arith.constant 0 : index
    %141 = vector.load %arg4[%c9, %c0_72, %c0_73] : memref<16x128x128xbf16, #tpu.memory_space<vmem>>, vector<1x128x128xbf16>
    %142 = vector.shape_cast %141 : vector<1x128x128xbf16> to vector<128x128xbf16>
    %cst_74 = arith.constant dense<0.000000e+00> : vector<4x128xf32>
    %143 = tpu.matmul %140, %142, %cst_74 {dimension_numbers = #tpu.dot_dimension_numbers<[1], [0], [0], [1], [0, 0, 1, 1], [], []>} : vector<4x128xbf16>, vector<128x128xbf16>, vector<4x128xf32> -> vector<4x128xf32>
    %144 = arith.addf %139, %143 : vector<4x128xf32>
    %c0_75 = arith.constant 0 : index
    %c0_76 = arith.constant 0 : index
    %145 = vector.load %arg11[%c0_75, %c0_76] : memref<4x128xf32, #tpu.memory_space<vmem>>, vector<4x128xf32>
    tpu.vector_store %arg11[%c0_75, %c0_76], %144 {strides = array<i32>} : memref<4x128xf32, #tpu.memory_space<vmem>>, vector<4x128xf32>,
    %146 = vector.extract_strided_slice %5 {offsets = [0, 10, 0], sizes = [4, 1, 128], strides = [1, 1, 1]} : vector<4x16x128xbf16> to vector<4x1x128xbf16>
    %147 = vector.shape_cast %146 : vector<4x1x128xbf16> to vector<4x128xbf16>
    %148 = arith.extf %147 : vector<4x128xbf16> to vector<4x128xf32>
    %149 = vector.broadcast %3 : vector<1x128xf32> to vector<4x128xf32>
    %150 = arith.mulf %148, %149 : vector<4x128xf32>
    %151 = vector.broadcast %4 : vector<1x128xf32> to vector<4x128xf32>
    %152 = arith.addf %150, %151 : vector<4x128xf32>
    %c0_77 = arith.constant 0 : index
    %c0_78 = arith.constant 0 : index
    %153 = vector.load %arg11[%c0_77, %c0_78] : memref<4x128xf32, #tpu.memory_space<vmem>>, vector<4x128xf32>
    %154 = arith.truncf %152 : vector<4x128xf32> to vector<4x128xbf16>
    %c10 = arith.constant 10 : index
    %c0_79 = arith.constant 0 : index
    %c0_80 = arith.constant 0 : index
    %155 = vector.load %arg4[%c10, %c0_79, %c0_80] : memref<16x128x128xbf16, #tpu.memory_space<vmem>>, vector<1x128x128xbf16>
    %156 = vector.shape_cast %155 : vector<1x128x128xbf16> to vector<128x128xbf16>
    %cst_81 = arith.constant dense<0.000000e+00> : vector<4x128xf32>
    %157 = tpu.matmul %154, %156, %cst_81 {dimension_numbers = #tpu.dot_dimension_numbers<[1], [0], [0], [1], [0, 0, 1, 1], [], []>} : vector<4x128xbf16>, vector<128x128xbf16>, vector<4x128xf32> -> vector<4x128xf32>
    %158 = arith.addf %153, %157 : vector<4x128xf32>
    %c0_82 = arith.constant 0 : index
    %c0_83 = arith.constant 0 : index
    %159 = vector.load %arg11[%c0_82, %c0_83] : memref<4x128xf32, #tpu.memory_space<vmem>>, vector<4x128xf32>
    tpu.vector_store %arg11[%c0_82, %c0_83], %158 {strides = array<i32>} : memref<4x128xf32, #tpu.memory_space<vmem>>, vector<4x128xf32>,
    %160 = vector.extract_strided_slice %5 {offsets = [0, 11, 0], sizes = [4, 1, 128], strides = [1, 1, 1]} : vector<4x16x128xbf16> to vector<4x1x128xbf16>
    %161 = vector.shape_cast %160 : vector<4x1x128xbf16> to vector<4x128xbf16>
    %162 = arith.extf %161 : vector<4x128xbf16> to vector<4x128xf32>
    %163 = vector.broadcast %3 : vector<1x128xf32> to vector<4x128xf32>
    %164 = arith.mulf %162, %163 : vector<4x128xf32>
    %165 = vector.broadcast %4 : vector<1x128xf32> to vector<4x128xf32>
    %166 = arith.addf %164, %165 : vector<4x128xf32>
    %c0_84 = arith.constant 0 : index
    %c0_85 = arith.constant 0 : index
    %167 = vector.load %arg11[%c0_84, %c0_85] : memref<4x128xf32, #tpu.memory_space<vmem>>, vector<4x128xf32>
    %168 = arith.truncf %166 : vector<4x128xf32> to vector<4x128xbf16>
    %c11 = arith.constant 11 : index
    %c0_86 = arith.constant 0 : index
    %c0_87 = arith.constant 0 : index
    %169 = vector.load %arg4[%c11, %c0_86, %c0_87] : memref<16x128x128xbf16, #tpu.memory_space<vmem>>, vector<1x128x128xbf16>
    %170 = vector.shape_cast %169 : vector<1x128x128xbf16> to vector<128x128xbf16>
    %cst_88 = arith.constant dense<0.000000e+00> : vector<4x128xf32>
    %171 = tpu.matmul %168, %170, %cst_88 {dimension_numbers = #tpu.dot_dimension_numbers<[1], [0], [0], [1], [0, 0, 1, 1], [], []>} : vector<4x128xbf16>, vector<128x128xbf16>, vector<4x128xf32> -> vector<4x128xf32>
    %172 = arith.addf %167, %171 : vector<4x128xf32>
    %c0_89 = arith.constant 0 : index
    %c0_90 = arith.constant 0 : index
    %173 = vector.load %arg11[%c0_89, %c0_90] : memref<4x128xf32, #tpu.memory_space<vmem>>, vector<4x128xf32>
    tpu.vector_store %arg11[%c0_89, %c0_90], %172 {strides = array<i32>} : memref<4x128xf32, #tpu.memory_space<vmem>>, vector<4x128xf32>,
    %174 = vector.extract_strided_slice %5 {offsets = [0, 12, 0], sizes = [4, 1, 128], strides = [1, 1, 1]} : vector<4x16x128xbf16> to vector<4x1x128xbf16>
    %175 = vector.shape_cast %174 : vector<4x1x128xbf16> to vector<4x128xbf16>
    %176 = arith.extf %175 : vector<4x128xbf16> to vector<4x128xf32>
    %177 = vector.broadcast %3 : vector<1x128xf32> to vector<4x128xf32>
    %178 = arith.mulf %176, %177 : vector<4x128xf32>
    %179 = vector.broadcast %4 : vector<1x128xf32> to vector<4x128xf32>
    %180 = arith.addf %178, %179 : vector<4x128xf32>
    %c0_91 = arith.constant 0 : index
    %c0_92 = arith.constant 0 : index
    %181 = vector.load %arg11[%c0_91, %c0_92] : memref<4x128xf32, #tpu.memory_space<vmem>>, vector<4x128xf32>
    %182 = arith.truncf %180 : vector<4x128xf32> to vector<4x128xbf16>
    %c12 = arith.constant 12 : index
    %c0_93 = arith.constant 0 : index
    %c0_94 = arith.constant 0 : index
    %183 = vector.load %arg4[%c12, %c0_93, %c0_94] : memref<16x128x128xbf16, #tpu.memory_space<vmem>>, vector<1x128x128xbf16>
    %184 = vector.shape_cast %183 : vector<1x128x128xbf16> to vector<128x128xbf16>
    %cst_95 = arith.constant dense<0.000000e+00> : vector<4x128xf32>
    %185 = tpu.matmul %182, %184, %cst_95 {dimension_numbers = #tpu.dot_dimension_numbers<[1], [0], [0], [1], [0, 0, 1, 1], [], []>} : vector<4x128xbf16>, vector<128x128xbf16>, vector<4x128xf32> -> vector<4x128xf32>
    %186 = arith.addf %181, %185 : vector<4x128xf32>
    %c0_96 = arith.constant 0 : index
    %c0_97 = arith.constant 0 : index
    %187 = vector.load %arg11[%c0_96, %c0_97] : memref<4x128xf32, #tpu.memory_space<vmem>>, vector<4x128xf32>
    tpu.vector_store %arg11[%c0_96, %c0_97], %186 {strides = array<i32>} : memref<4x128xf32, #tpu.memory_space<vmem>>, vector<4x128xf32>,
    %188 = vector.extract_strided_slice %5 {offsets = [0, 13, 0], sizes = [4, 1, 128], strides = [1, 1, 1]} : vector<4x16x128xbf16> to vector<4x1x128xbf16>
    %189 = vector.shape_cast %188 : vector<4x1x128xbf16> to vector<4x128xbf16>
    %190 = arith.extf %189 : vector<4x128xbf16> to vector<4x128xf32>
    %191 = vector.broadcast %3 : vector<1x128xf32> to vector<4x128xf32>
    %192 = arith.mulf %190, %191 : vector<4x128xf32>
    %193 = vector.broadcast %4 : vector<1x128xf32> to vector<4x128xf32>
    %194 = arith.addf %192, %193 : vector<4x128xf32>
    %c0_98 = arith.constant 0 : index
    %c0_99 = arith.constant 0 : index
    %195 = vector.load %arg11[%c0_98, %c0_99] : memref<4x128xf32, #tpu.memory_space<vmem>>, vector<4x128xf32>
    %196 = arith.truncf %194 : vector<4x128xf32> to vector<4x128xbf16>
    %c13 = arith.constant 13 : index
    %c0_100 = arith.constant 0 : index
    %c0_101 = arith.constant 0 : index
    %197 = vector.load %arg4[%c13, %c0_100, %c0_101] : memref<16x128x128xbf16, #tpu.memory_space<vmem>>, vector<1x128x128xbf16>
    %198 = vector.shape_cast %197 : vector<1x128x128xbf16> to vector<128x128xbf16>
    %cst_102 = arith.constant dense<0.000000e+00> : vector<4x128xf32>
    %199 = tpu.matmul %196, %198, %cst_102 {dimension_numbers = #tpu.dot_dimension_numbers<[1], [0], [0], [1], [0, 0, 1, 1], [], []>} : vector<4x128xbf16>, vector<128x128xbf16>, vector<4x128xf32> -> vector<4x128xf32>
    %200 = arith.addf %195, %199 : vector<4x128xf32>
    %c0_103 = arith.constant 0 : index
    %c0_104 = arith.constant 0 : index
    %201 = vector.load %arg11[%c0_103, %c0_104] : memref<4x128xf32, #tpu.memory_space<vmem>>, vector<4x128xf32>
    tpu.vector_store %arg11[%c0_103, %c0_104], %200 {strides = array<i32>} : memref<4x128xf32, #tpu.memory_space<vmem>>, vector<4x128xf32>,
    %202 = vector.extract_strided_slice %5 {offsets = [0, 14, 0], sizes = [4, 1, 128], strides = [1, 1, 1]} : vector<4x16x128xbf16> to vector<4x1x128xbf16>
    %203 = vector.shape_cast %202 : vector<4x1x128xbf16> to vector<4x128xbf16>
    %204 = arith.extf %203 : vector<4x128xbf16> to vector<4x128xf32>
    %205 = vector.broadcast %3 : vector<1x128xf32> to vector<4x128xf32>
    %206 = arith.mulf %204, %205 : vector<4x128xf32>
    %207 = vector.broadcast %4 : vector<1x128xf32> to vector<4x128xf32>
    %208 = arith.addf %206, %207 : vector<4x128xf32>
    %c0_105 = arith.constant 0 : index
    %c0_106 = arith.constant 0 : index
    %209 = vector.load %arg11[%c0_105, %c0_106] : memref<4x128xf32, #tpu.memory_space<vmem>>, vector<4x128xf32>
    %210 = arith.truncf %208 : vector<4x128xf32> to vector<4x128xbf16>
    %c14 = arith.constant 14 : index
    %c0_107 = arith.constant 0 : index
    %c0_108 = arith.constant 0 : index
    %211 = vector.load %arg4[%c14, %c0_107, %c0_108] : memref<16x128x128xbf16, #tpu.memory_space<vmem>>, vector<1x128x128xbf16>
    %212 = vector.shape_cast %211 : vector<1x128x128xbf16> to vector<128x128xbf16>
    %cst_109 = arith.constant dense<0.000000e+00> : vector<4x128xf32>
    %213 = tpu.matmul %210, %212, %cst_109 {dimension_numbers = #tpu.dot_dimension_numbers<[1], [0], [0], [1], [0, 0, 1, 1], [], []>} : vector<4x128xbf16>, vector<128x128xbf16>, vector<4x128xf32> -> vector<4x128xf32>
    %214 = arith.addf %209, %213 : vector<4x128xf32>
    %c0_110 = arith.constant 0 : index
    %c0_111 = arith.constant 0 : index
    %215 = vector.load %arg11[%c0_110, %c0_111] : memref<4x128xf32, #tpu.memory_space<vmem>>, vector<4x128xf32>
    tpu.vector_store %arg11[%c0_110, %c0_111], %214 {strides = array<i32>} : memref<4x128xf32, #tpu.memory_space<vmem>>, vector<4x128xf32>,
    %216 = vector.extract_strided_slice %5 {offsets = [0, 15, 0], sizes = [4, 1, 128], strides = [1, 1, 1]} : vector<4x16x128xbf16> to vector<4x1x128xbf16>
    %217 = vector.shape_cast %216 : vector<4x1x128xbf16> to vector<4x128xbf16>
    %218 = arith.extf %217 : vector<4x128xbf16> to vector<4x128xf32>
    %219 = vector.broadcast %3 : vector<1x128xf32> to vector<4x128xf32>
    %220 = arith.mulf %218, %219 : vector<4x128xf32>
    %221 = vector.broadcast %4 : vector<1x128xf32> to vector<4x128xf32>
    %222 = arith.addf %220, %221 : vector<4x128xf32>
    %c0_112 = arith.constant 0 : index
    %c0_113 = arith.constant 0 : index
    %223 = vector.load %arg11[%c0_112, %c0_113] : memref<4x128xf32, #tpu.memory_space<vmem>>, vector<4x128xf32>
    %224 = arith.truncf %222 : vector<4x128xf32> to vector<4x128xbf16>
    %c15 = arith.constant 15 : index
    %c0_114 = arith.constant 0 : index
    %c0_115 = arith.constant 0 : index
    %225 = vector.load %arg4[%c15, %c0_114, %c0_115] : memref<16x128x128xbf16, #tpu.memory_space<vmem>>, vector<1x128x128xbf16>
    %226 = vector.shape_cast %225 : vector<1x128x128xbf16> to vector<128x128xbf16>
    %cst_116 = arith.constant dense<0.000000e+00> : vector<4x128xf32>
    %227 = tpu.matmul %224, %226, %cst_116 {dimension_numbers = #tpu.dot_dimension_numbers<[1], [0], [0], [1], [0, 0, 1, 1], [], []>} : vector<4x128xbf16>, vector<128x128xbf16>, vector<4x128xf32> -> vector<4x128xf32>
    %228 = arith.addf %223, %227 : vector<4x128xf32>
    %c0_117 = arith.constant 0 : index
    %c0_118 = arith.constant 0 : index
    %229 = vector.load %arg11[%c0_117, %c0_118] : memref<4x128xf32, #tpu.memory_space<vmem>>, vector<4x128xf32>
    tpu.vector_store %arg11[%c0_117, %c0_118], %228 {strides = array<i32>} : memref<4x128xf32, #tpu.memory_space<vmem>>, vector<4x128xf32>,
    %c12_i32 = arith.constant 12 : i32
    %230 = arith.cmpi eq, %arg0, %c12_i32 : i32
    %231 = arith.extui %230 : i1 to i32
    %c0_i32_119 = arith.constant 0 : i32
    %232 = arith.cmpi ne, %231, %c0_i32_119 : i32
    scf.if %232 {
      %c0_120 = arith.constant 0 : index
      %c0_121 = arith.constant 0 : index
      %233 = vector.load %arg11[%c0_120, %c0_121] : memref<4x128xf32, #tpu.memory_space<vmem>>, vector<4x128xf32>
      %c0_122 = arith.constant 0 : index
      %c0_123 = arith.constant 0 : index
      %234 = vector.load %arg5[%c0_122, %c0_123] : memref<1x128xf32, #tpu.memory_space<vmem>>, vector<1x128xf32>
      %235 = vector.broadcast %234 : vector<1x128xf32> to vector<4x128xf32>
      %236 = arith.addf %233, %235 : vector<4x128xf32>
      %cst_124 = arith.constant 0.000000e+00 : f32
      %237 = vector.broadcast %cst_124 : f32 to vector<4x128xf32>
      %238 = arith.maximumf %236, %237 : vector<4x128xf32>
      %cst_125 = arith.constant dense<0.000000e+00> : vector<128xf32>
      %239 = vector.multi_reduction <add>, %238, %cst_125 [0] : vector<4x128xf32> to vector<128xf32>
      %240 = vector.shape_cast %239 : vector<128xf32> to vector<1x128xf32>
      %cst_126 = arith.constant 4.000000e+00 : f32
      %241 = vector.broadcast %cst_126 : f32 to vector<1x128xf32>
      %242 = arith.divf %240, %241 : vector<1x128xf32>
      %243 = vector.broadcast %242 : vector<1x128xf32> to vector<4x128xf32>
      %244 = arith.subf %238, %243 : vector<4x128xf32>
      %245 = arith.mulf %244, %244 : vector<4x128xf32>
      %cst_127 = arith.constant dense<0.000000e+00> : vector<128xf32>
      %246 = vector.multi_reduction <add>, %245, %cst_127 [0] : vector<4x128xf32> to vector<128xf32>
      %247 = vector.shape_cast %246 : vector<128xf32> to vector<1x128xf32>
      %cst_128 = arith.constant 4.000000e+00 : f32
      %248 = vector.broadcast %cst_128 : f32 to vector<1x128xf32>
      %249 = arith.divf %247, %248 : vector<1x128xf32>
      %cst_129 = arith.constant 9.99999974E-6 : f32
      %250 = vector.broadcast %cst_129 : f32 to vector<1x128xf32>
      %251 = arith.addf %249, %250 : vector<1x128xf32>
      %252 = math.rsqrt %251 : vector<1x128xf32>
      %253 = vector.broadcast %252 : vector<1x128xf32> to vector<4x128xf32>
      %254 = arith.mulf %244, %253 : vector<4x128xf32>
      %c0_130 = arith.constant 0 : index
      %c0_131 = arith.constant 0 : index
      %255 = vector.load %arg6[%c0_130, %c0_131] : memref<1x128xf32, #tpu.memory_space<vmem>>, vector<1x128xf32>
      %256 = vector.broadcast %255 : vector<1x128xf32> to vector<4x128xf32>
      %257 = arith.mulf %254, %256 : vector<4x128xf32>
      %c0_132 = arith.constant 0 : index
      %c0_133 = arith.constant 0 : index
      %258 = vector.load %arg7[%c0_132, %c0_133] : memref<1x128xf32, #tpu.memory_space<vmem>>, vector<1x128xf32>
      %259 = vector.broadcast %258 : vector<1x128xf32> to vector<4x128xf32>
      %260 = arith.addf %257, %259 : vector<4x128xf32>
      %c0_134 = arith.constant 0 : index
      %c0_135 = arith.constant 0 : index
      %261 = vector.load %arg8[%c0_134, %c0_135] : memref<1x128xf32, #tpu.memory_space<vmem>>, vector<1x128xf32>
      %262 = vector.broadcast %261 : vector<1x128xf32> to vector<4x128xf32>
      %263 = arith.mulf %260, %262 : vector<4x128xf32>
      %cst_136 = arith.constant dense<0.000000e+00> : vector<4xf32>
      %264 = vector.multi_reduction <add>, %263, %cst_136 [1] : vector<4x128xf32> to vector<4xf32>
      %265 = vector.shape_cast %264 : vector<4xf32> to vector<4x1xf32>
      %c0_137 = arith.constant 0 : index
      %c0_138 = arith.constant 0 : index
      %266 = vector.load %arg9[%c0_137, %c0_138] : memref<1x1xf32, #tpu.memory_space<vmem>>, vector<1x1xf32>
      %267 = vector.broadcast %266 : vector<1x1xf32> to vector<4x1xf32>
      %268 = arith.addf %265, %267 : vector<4x1xf32>
      %cst_139 = arith.constant 0.000000e+00 : f32
      %269 = vector.broadcast %cst_139 : f32 to vector<4x1xf32>
      %270 = arith.subf %269, %268 : vector<4x1xf32>
      %271 = math.exp %270 : vector<4x1xf32>
      %cst_140 = arith.constant 1.000000e+00 : f32
      %272 = vector.broadcast %cst_140 : f32 to vector<4x1xf32>
      %273 = arith.addf %272, %271 : vector<4x1xf32>
      %cst_141 = arith.constant 1.000000e+00 : f32
      %274 = vector.broadcast %cst_141 : f32 to vector<4x1xf32>
      %275 = arith.divf %274, %273 : vector<4x1xf32>
      %c0_142 = arith.constant 0 : index
      %c0_143 = arith.constant 0 : index
      %276 = vector.load %arg10[%c0_142, %c0_143] : memref<4x1xf32, #tpu.memory_space<vmem>>, vector<4x1xf32>
      tpu.vector_store %arg10[%c0_142, %c0_143], %275 {strides = array<i32>} : memref<4x1xf32, #tpu.memory_space<vmem>>, vector<4x1xf32>,
    } else {
    }
    return
  }
  func.func @transform_0(%arg0: i32) -> (i32, i32, i32) {
    %c0_i32 = arith.constant 0 : i32
    %c0_i32_0 = arith.constant 0 : i32
    %c0_i32_1 = arith.constant 0 : i32
    return %c0_i32, %arg0, %c0_i32_0 : i32, i32, i32
  }
  func.func @transform_1(%arg0: i32) -> (i32, i32) {
    %c0_i32 = arith.constant 0 : i32
    %c0_i32_0 = arith.constant 0 : i32
    %c0_i32_1 = arith.constant 0 : i32
    return %c0_i32, %c0_i32_0 : i32, i32
  }
  func.func @transform_2(%arg0: i32) -> (i32, i32) {
    %c0_i32 = arith.constant 0 : i32
    %c0_i32_0 = arith.constant 0 : i32
    %c0_i32_1 = arith.constant 0 : i32
    return %c0_i32, %c0_i32_0 : i32, i32
  }
  func.func @transform_3(%arg0: i32) -> (i32, i32, i32) {
    %c0_i32 = arith.constant 0 : i32
    %c0_i32_0 = arith.constant 0 : i32
    %c0_i32_1 = arith.constant 0 : i32
    return %arg0, %c0_i32, %c0_i32_0 : i32, i32, i32
  }
  func.func @transform_4(%arg0: i32) -> (i32, i32) {
    %c0_i32 = arith.constant 0 : i32
    %c0_i32_0 = arith.constant 0 : i32
    %c0_i32_1 = arith.constant 0 : i32
    return %c0_i32, %c0_i32_0 : i32, i32
  }
  func.func @transform_5(%arg0: i32) -> (i32, i32) {
    %c0_i32 = arith.constant 0 : i32
    %c0_i32_0 = arith.constant 0 : i32
    %c0_i32_1 = arith.constant 0 : i32
    return %c0_i32, %c0_i32_0 : i32, i32
  }
  func.func @transform_6(%arg0: i32) -> (i32, i32) {
    %c0_i32 = arith.constant 0 : i32
    %c0_i32_0 = arith.constant 0 : i32
    %c0_i32_1 = arith.constant 0 : i32
    return %c0_i32, %c0_i32_0 : i32, i32
  }
  func.func @transform_7(%arg0: i32) -> (i32, i32) {
    %c0_i32 = arith.constant 0 : i32
    %c0_i32_0 = arith.constant 0 : i32
    %c0_i32_1 = arith.constant 0 : i32
    return %c0_i32, %c0_i32_0 : i32, i32
  }
  func.func @transform_8(%arg0: i32) -> (i32, i32) {
    %c0_i32 = arith.constant 0 : i32
    %c0_i32_0 = arith.constant 0 : i32
    %c0_i32_1 = arith.constant 0 : i32
    return %c0_i32, %c0_i32_0 : i32, i32
  }
  func.func @transform_9(%arg0: i32) -> (i32, i32) {
    %c0_i32 = arith.constant 0 : i32
    %c0_i32_0 = arith.constant 0 : i32
    %c0_i32_1 = arith.constant 0 : i32
    return %c0_i32, %c0_i32_0 : i32, i32
  }
}

</mosaic_0001>

<llo_original>
// kernel: discriminator_forward.2
$region0: #{discriminator_forward.2}
  #allocation0 [shape = 'u32[]', space=smem, size = 0x4, offset = 0x4, fixed_abs, tag = 'smem constant byte address 0x4 - core index']
  #allocation1 [shape = 'u32[144,128]{1,0:T(1,128)}', space=vmem, size = 0x12000, scoped, tag = 'internal scratch']
  #allocation2 [shape = 'bf16[232,128]{1,0:T(8,128)(2,1)}', space=vmem, size = 0xe800, scoped, tag = 'scratch operand']
  %s0 = inlined_call_operand.vmem [shape: f32[4,202,1], index: 0, kind: input, shape index: {}]
  %s1 = inlined_call_operand.hbm [shape: f32[3,128], index: 1, kind: input, shape index: {}]
  %s2 = inlined_call_operand.hbm [shape: f32[1,128], index: 2, kind: input, shape index: {}]
  %s3 = inlined_call_operand.hbm [shape: bf16[3,128,128], index: 3, kind: input, shape index: {}]
  %s4 = inlined_call_operand.hbm [shape: f32[1,128], index: 4, kind: input, shape index: {}]
  %s5 = inlined_call_operand.vmem [shape: bf16[4,208,128], index: 5, kind: output, shape index: {0}]
  %s6 = inlined_call_operand.vmem [shape: f32[4,1,128], index: 6, kind: output, shape index: {1}]
  %s7 = inlined_call_operand.vmem [shape: f32[4,1,128], index: 7, kind: output, shape index: {2}]
  %8 = xla_tuple %s5, %s6, %s7
  %s9 = sld [smem:[#allocation0]]
  $region85: #{discriminator_forward.2} parent=0
    _
  %s11 = ssub.s32 1, %s9
  %s12 = scalar_select 0, %s11, %s9
  $region1: #{discriminator_forward.2} parent=0
    #allocation3 [shape = 'u8[2048]{0}', space=vmem, size = 0x800, scoped, tag = 'input window, operand 1, single buffered']
    #allocation4 [shape = 's32[2]{0}', space=sflag, size = 0x8, scoped, tag = 'scoped memory for discriminator_forward.2']
    #allocation5 [shape = 'u8[512]{0}', space=vmem, size = 0x400, scoped, tag = 'input window, operand 2, single buffered']
    #allocation6 [shape = 's32[1]{0}', space=sflag, size = 0x4, scoped, tag = 'scoped memory for discriminator_forward.2']
    #allocation7 [shape = 'u8[98304]{0}', space=vmem, size = 0x18000, scoped, tag = 'input window, operand 3, single buffered']
    #allocation8 [shape = 'u8[512]{0}', space=vmem, size = 0x400, scoped, tag = 'input window, operand 4, single buffered']
    #allocation9 [shape = 's32[1]{0}', space=sflag, size = 0x4, scoped, tag = 'scoped memory for discriminator_forward.2']
    %13 = vsyncpa [#allocation4], 0
    %14 = vsyncpa [#allocation6], 0
    %15 = vsyncpa [#allocation9], 0
    loop: start=0, step=1, limit=6
    $region2: #{discriminator_forward.2} parent=1 // loop_pre_header
      _
    $region3: #{discriminator_forward.2} parent=1 // loop_header
      %s17 = sphi 0, %s21
      %p18 = scmp.ge.s32.totalorder %s17, 6
      %s27 = sphi 0, %s29
      %s30 = sphi 0, %s27
      %s31 = sphi 0, %s30
      %s47 = sphi 0, %s31
      %s51 = sphi 0, %s51
      %s53 = sphi 0, %s51
      %s54 = sphi 0, %s53
      %s68 = sphi 0, %s54
      %s72 = sphi 0, %s72
      %s74 = sphi 0, %s72
      %s75 = sphi 0, %s74
      %s89 = sphi 0, %s75
      %s93 = sphi 0, %s93
      %s95 = sphi 0, %s93
      %s96 = sphi 0, %s95
      %s110 = sphi 0, %s96
      %s114 = sphi 0, %s114
      %s116 = sphi 0, %s114
      %s117 = sphi 0, %s116
      %s131 = sphi 0, %s117
      %s137 = sphi 0, %s139
      %s140 = sphi 0, %s137
      %s141 = sphi 0, %s140
      %s157 = sphi 0, %s141
      %s163 = sphi 0, %s165
      %s166 = sphi 0, %s163
      %s167 = sphi 0, %s166
      %s183 = sphi 0, %s167
      %s189 = sphi 0, %s191
      %s192 = sphi 0, %s189
      %s193 = sphi 0, %s192
      %s209 = sphi 0, %s193
    $region4: #{discriminator_forward.2} parent=1 // loop_header_branch
      %20 = sbr.rel (%p18) target = $region8
    $region5: #{discriminator_forward.2} parent=1 // loop_body
      %s22 = ssub.s32 %s17, 1
      %s23 = ssub.s32 %s17, 2
      %s24 = sadd.s32 %s17, 1
      %s25 = ssub.s32 %s17, %s24
      %p26 = scmp.eq.s32.totalorder %s25, 0
      %s28 = sadd.s32 %s27, 1
      %s29 = scalar_select %p26, %s27, %s28
      %p32 = pneg %p26
      %p33 = scmp.eq.s32.totalorder %s17, 3
      %p34 = por %p32, %p33
      %p35 = scmp.ne.s32.totalorder %s27, %s30
      %p36 = scmp.eq.s32.totalorder %s17, 0
      %p37 = por %p35, %p36
      %p38 = scmp.ne.s32.totalorder %s27, %s30
      %p39 = scmp.eq.s32.totalorder %s22, 3
      %p40 = por %p38, %p39
      %p41 = scmp.ne.s32.totalorder %s30, %s31
      %p42 = scmp.eq.s32.totalorder %s22, 0
      %p43 = por %p41, %p42
      %p44 = scmp.ne.s32.totalorder %s30, %s31
      %p45 = scmp.eq.s32.totalorder %s23, 3
      %p46 = por %p44, %p45
      %p48 = scmp.ne.s32.totalorder %s31, %s47
      %p49 = scmp.eq.s32.totalorder %s23, 0
      %p50 = por %p48, %p49
      %s52 = sadd.s32 %s51, 1
      %p55 = scmp.eq.s32.totalorder %s17, 3
      %p56 = scmp.ne.s32.totalorder %s51, %s53
      %p57 = scmp.eq.s32.totalorder %s17, 0
      %p58 = por %p56, %p57
      %p59 = scmp.ne.s32.totalorder %s51, %s53
      %p60 = scmp.eq.s32.totalorder %s22, 3
      %p61 = por %p59, %p60
      %p62 = scmp.ne.s32.totalorder %s53, %s54
      %p63 = scmp.eq.s32.totalorder %s22, 0
      %p64 = por %p62, %p63
      %p65 = scmp.ne.s32.totalorder %s53, %s54
      %p66 = scmp.eq.s32.totalorder %s23, 3
      %p67 = por %p65, %p66
      %p69 = scmp.ne.s32.totalorder %s54, %s68
      %p70 = scmp.eq.s32.totalorder %s23, 0
      %p71 = por %p69, %p70
      %s73 = sadd.s32 %s72, 1
      %p76 = scmp.eq.s32.totalorder %s17, 3
      %p77 = scmp.ne.s32.totalorder %s72, %s74
      %p78 = scmp.eq.s32.totalorder %s17, 0
      %p79 = por %p77, %p78
      %p80 = scmp.ne.s32.totalorder %s72, %s74
      %p81 = scmp.eq.s32.totalorder %s22, 3
      %p82 = por %p80, %p81
      %p83 = scmp.ne.s32.totalorder %s74, %s75
      %p84 = scmp.eq.s32.totalorder %s22, 0
      %p85 = por %p83, %p84
      %p86 = scmp.ne.s32.totalorder %s74, %s75
      %p87 = scmp.eq.s32.totalorder %s23, 3
      %p88 = por %p86, %p87
      %p90 = scmp.ne.s32.totalorder %s75, %s89
      %p91 = scmp.eq.s32.totalorder %s23, 0
      %p92 = por %p90, %p91
      %s94 = sadd.s32 %s93, 1
      %p97 = scmp.eq.s32.totalorder %s17, 3
      %p98 = scmp.ne.s32.totalorder %s93, %s95
      %p99 = scmp.eq.s32.totalorder %s17, 0
      %p100 = por %p98, %p99
      %p101 = scmp.ne.s32.totalorder %s93, %s95
      %p102 = scmp.eq.s32.totalorder %s22, 3
      %p103 = por %p101, %p102
      %p104 = scmp.ne.s32.totalorder %s95, %s96
      %p105 = scmp.eq.s32.totalorder %s22, 0
      %p106 = por %p104, %p105
      %p107 = scmp.ne.s32.totalorder %s95, %s96
      %p108 = scmp.eq.s32.totalorder %s23, 3
      %p109 = por %p107, %p108
      %p111 = scmp.ne.s32.totalorder %s96, %s110
      %p112 = scmp.eq.s32.totalorder %s23, 0
      %p113 = por %p111, %p112
      %s115 = sadd.s32 %s114, 1
      %p118 = scmp.eq.s32.totalorder %s17, 3
      %p119 = scmp.ne.s32.totalorder %s114, %s116
      %p120 = scmp.eq.s32.totalorder %s17, 0
      %p121 = por %p119, %p120
      %p122 = scmp.ne.s32.totalorder %s114, %s116
      %p123 = scmp.eq.s32.totalorder %s22, 3
      %p124 = por %p122, %p123
      %p125 = scmp.ne.s32.totalorder %s116, %s117
      %p126 = scmp.eq.s32.totalorder %s22, 0
      %p127 = por %p125, %p126
      %p128 = scmp.ne.s32.totalorder %s116, %s117
      %p129 = scmp.eq.s32.totalorder %s23, 3
      %p130 = por %p128, %p129
      %p132 = scmp.ne.s32.totalorder %s117, %s131
      %p133 = scmp.eq.s32.totalorder %s23, 0
      %p134 = por %p132, %p133
      %s135 = ssub.s32 %s17, %s24
      %p136 = scmp.eq.s32.totalorder %s135, 0
      %s138 = sadd.s32 %s137, 1
      %s139 = scalar_select %p136, %s137, %s138
      %p142 = pneg %p136
      %p143 = scmp.eq.s32.totalorder %s17, 3
      %p144 = por %p142, %p143
      %p145 = scmp.ne.s32.totalorder %s137, %s140
      %p146 = scmp.eq.s32.totalorder %s17, 0
      %p147 = por %p145, %p146
      %p148 = scmp.ne.s32.totalorder %s137, %s140
      %p149 = scmp.eq.s32.totalorder %s22, 3
      %p150 = por %p148, %p149
      %p151 = scmp.ne.s32.totalorder %s140, %s141
      %p152 = scmp.eq.s32.totalorder %s22, 0
      %p153 = por %p151, %p152
      %p154 = scmp.ne.s32.totalorder %s140, %s141
      %p155 = scmp.eq.s32.totalorder %s23, 3
      %p156 = por %p154, %p155
      %p158 = scmp.ne.s32.totalorder %s141, %s157
      %p159 = scmp.eq.s32.totalorder %s23, 0
      %p160 = por %p158, %p159
      %s161 = ssub.s32 %s17, %s24
      %p162 = scmp.eq.s32.totalorder %s161, 0
      %s164 = sadd.s32 %s163, 1
      %s165 = scalar_select %p162, %s163, %s164
      %p168 = pneg %p162
      %p169 = scmp.eq.s32.totalorder %s17, 3
      %p170 = por %p168, %p169
      %p171 = scmp.ne.s32.totalorder %s163, %s166
      %p172 = scmp.eq.s32.totalorder %s17, 0
      %p173 = por %p171, %p172
      %p174 = scmp.ne.s32.totalorder %s163, %s166
      %p175 = scmp.eq.s32.totalorder %s22, 3
      %p176 = por %p174, %p175
      %p177 = scmp.ne.s32.totalorder %s166, %s167
      %p178 = scmp.eq.s32.totalorder %s22, 0
      %p179 = por %p177, %p178
      %p180 = scmp.ne.s32.totalorder %s166, %s167
      %p181 = scmp.eq.s32.totalorder %s23, 3
      %p182 = por %p180, %p181
      %p184 = scmp.ne.s32.totalorder %s167, %s183
      %p185 = scmp.eq.s32.totalorder %s23, 0
      %p186 = por %p184, %p185
      %s187 = ssub.s32 %s17, %s24
      %p188 = scmp.eq.s32.totalorder %s187, 0
      %s190 = sadd.s32 %s189, 1
      %s191 = scalar_select %p188, %s189, %s190
      %p194 = pneg %p188
      %p195 = scmp.eq.s32.totalorder %s17, 3
      %p196 = por %p194, %p195
      %p197 = scmp.ne.s32.totalorder %s189, %s192
      %p198 = scmp.eq.s32.totalorder %s17, 0
      %p199 = por %p197, %p198
      %p200 = scmp.ne.s32.totalorder %s189, %s192
      %p201 = scmp.eq.s32.totalorder %s22, 3
      %p202 = por %p200, %p201
      %p203 = scmp.ne.s32.totalorder %s192, %s193
      %p204 = scmp.eq.s32.totalorder %s22, 0
      %p205 = por %p203, %p204
      %p206 = scmp.ne.s32.totalorder %s192, %s193
      %p207 = scmp.eq.s32.totalorder %s23, 3
      %p208 = por %p206, %p207
      %p210 = scmp.ne.s32.totalorder %s193, %s209
      %p211 = scmp.eq.s32.totalorder %s23, 0
      %p212 = por %p210, %p211
      %p213 = scmp.le.s32.totalorder 1, %s17
      %p214 = scmp.lt.s32.totalorder %s17, 5
      %p215 = pnand %p213, %p214
      %p216 = pneg %p215
      // Predicated region
      $region9: #{discriminator_forward.2} parent=5 // pred_check
        _
      $region10: #{discriminator_forward.2} parent=5 // pred_check_branch
        %218 = sbr.rel (%p215) target = $region12
      $region11: #{discriminator_forward.2} parent=5 // pred_region
        %s219 = ssub.s32 %s17, 1
        // Predicated region
        $region13: #{discriminator_forward.2} parent=11 // pred_check
          %p220 = pneg %p64
        $region14: #{discriminator_forward.2} parent=11 // pred_check_branch
          %222 = sbr.rel (%p220) target = $region16
        $region15: #{discriminator_forward.2} parent=11 // pred_region
          %s224 = ssub.s32 64, 64
          %225 = vsyncadd [#allocation4], %s224
          %s227 = sshll.u32 [#allocation3], 4
          %s228 = int_to_ptr.vmem [resolvable:$true] %s227
          %230 = dma.hbm_to_vmem [thread:$0]  %s1, 64, %s228, [#allocation4]
        $region16: #{discriminator_forward.2} parent=11 // pred_fallthru
          _
        // Predicated region
        $region17: #{discriminator_forward.2} parent=11 // pred_check
          %p231 = pneg %p85
        $region18: #{discriminator_forward.2} parent=11 // pred_check_branch
          %233 = sbr.rel (%p231) target = $region20
        $region19: #{discriminator_forward.2} parent=11 // pred_region
          %s235 = ssub.s32 16, 16
          %236 = vsyncadd [#allocation6], %s235
          %s238 = sshll.u32 [#allocation5], 4
          %s239 = int_to_ptr.vmem [resolvable:$true] %s238
          %241 = dma.hbm_to_vmem [thread:$0]  %s2, 16, %s239, [#allocation6]
        $region20: #{discriminator_forward.2} parent=11 // pred_fallthru
          _
        // Predicated region
        $region21: #{discriminator_forward.2} parent=11 // pred_check
          %p242 = pneg %p106
        $region22: #{discriminator_forward.2} parent=11 // pred_check_branch
          %244 = sbr.rel (%p242) target = $region24
        $region23: #{discriminator_forward.2} parent=11 // pred_region
          %s246 = ssub.s32 3072, 3072
          %247 = vsyncadd [#allocation6], %s246
          %s248 = sshll.u32 [#allocation7], 4
          %s249 = int_to_ptr.vmem [resolvable:$true] %s248
          %254 = dma.hbm_to_vmem [thread:$0]  %s3, 3072, %s249, [#allocation6], 64, 64, 4
        $region24: #{discriminator_forward.2} parent=11 // pred_fallthru
          _
        // Predicated region
        $region25: #{discriminator_forward.2} parent=11 // pred_check
          %p255 = pneg %p127
        $region26: #{discriminator_forward.2} parent=11 // pred_check_branch
          %257 = sbr.rel (%p255) target = $region28
        $region27: #{discriminator_forward.2} parent=11 // pred_region
          %s259 = ssub.s32 16, 16
          %260 = vsyncadd [#allocation9], %s259
          %s262 = sshll.u32 [#allocation8], 4
          %s263 = int_to_ptr.vmem [resolvable:$true] %s262
          %265 = dma.hbm_to_vmem [thread:$0]  %s4, 16, %s263, [#allocation9]
        $region28: #{discriminator_forward.2} parent=11 // pred_fallthru
          _
      $region12: #{discriminator_forward.2} parent=5 // pred_fallthru
        _
      %p266 = scmp.lt.s32.totalorder %s17, 4
      // Predicated region
      $region29: #{discriminator_forward.2} parent=5 // pred_check
        %p267 = pneg %p266
      $region30: #{discriminator_forward.2} parent=5 // pred_check_branch
        %269 = sbr.rel (%p267) target = $region32
      $region31: #{discriminator_forward.2} parent=5 // pred_region
        // Predicated region
        $region33: #{discriminator_forward.2} parent=31 // pred_check
          %p270 = pneg %p37
        $region34: #{discriminator_forward.2} parent=31 // pred_check_branch
          %272 = sbr.rel (%p270) target = $region36
        $region35: #{discriminator_forward.2} parent=31 // pred_region
          %p273 = scmp.lt.s32.totalorder %s17, 3
          %s274 = scalar_select %p273, %s17, 3
          %s275 = smul.addr %s274, 26
          %s276 = smul.addr %s275, 8
          %s277 = scalar_lea.vmem %s0, %s276
        $region36: #{discriminator_forward.2} parent=31 // pred_fallthru
          _
      $region32: #{discriminator_forward.2} parent=5 // pred_fallthru
        _
      %p278 = scmp.le.s32.totalorder 1, %s17
      %p279 = scmp.lt.s32.totalorder %s17, 5
      %p280 = pnand %p278, %p279
      %p281 = pneg %p280
      // Predicated region
      $region37: #{discriminator_forward.2} parent=5 // pred_check
        _
      $region38: #{discriminator_forward.2} parent=5 // pred_check_branch
        %283 = sbr.rel (%p280) target = $region40
      $region39: #{discriminator_forward.2} parent=5 // pred_region
        %s284 = ssub.s32 %s17, 1
        // Predicated region
        $region41: #{discriminator_forward.2} parent=39 // pred_check
          %p285 = pneg %p64
        $region42: #{discriminator_forward.2} parent=39 // pred_check_branch
          %287 = sbr.rel (%p285) target = $region44
        $region43: #{discriminator_forward.2} parent=39 // pred_region
          %288 = dma.done [#allocation4], 64
        $region44: #{discriminator_forward.2} parent=39 // pred_fallthru
          _
        // Predicated region
        $region45: #{discriminator_forward.2} parent=39 // pred_check
          %p289 = pneg %p85
        $region46: #{discriminator_forward.2} parent=39 // pred_check_branch
          %291 = sbr.rel (%p289) target = $region48
        $region47: #{discriminator_forward.2} parent=39 // pred_region
          %292 = dma.done [#allocation6], 16
        $region48: #{discriminator_forward.2} parent=39 // pred_fallthru
          _
        // Predicated region
        $region49: #{discriminator_forward.2} parent=39 // pred_check
          %p293 = pneg %p106
        $region50: #{discriminator_forward.2} parent=39 // pred_check_branch
          %295 = sbr.rel (%p293) target = $region52
        $region51: #{discriminator_forward.2} parent=39 // pred_region
          %296 = dma.done [#allocation6], 3072
        $region52: #{discriminator_forward.2} parent=39 // pred_fallthru
          _
        // Predicated region
        $region53: #{discriminator_forward.2} parent=39 // pred_check
          %p297 = pneg %p127
        $region54: #{discriminator_forward.2} parent=39 // pred_check_branch
          %299 = sbr.rel (%p297) target = $region56
        $region55: #{discriminator_forward.2} parent=39 // pred_region
          %300 = dma.done [#allocation9], 16
        $region56: #{discriminator_forward.2} parent=39 // pred_fallthru
          _
        %p301 = scmp.lt.s32.totalorder %s22, 3
        %s302 = scalar_select %p301, %s22, 3
        %s303 = smul.addr %s302, 26
        %s304 = smul.addr %s303, 8
        %s305 = scalar_lea.vmem %s0, %s304
        %p306 = pneg %p43
        %p307 = pneg %p40
        %p308 = pneg %p64
        %p309 = pneg %p61
        %p310 = pneg %p85
        %p311 = pneg %p82
        %p312 = pneg %p106
        %p313 = pneg %p103
        %p314 = pneg %p127
        %p315 = pneg %p124
        %p316 = pneg %p153
        %p317 = pneg %p150
        %p318 = scmp.lt.s32.totalorder %s22, 3
        %s319 = scalar_select %p318, %s22, 3
        %s320 = smul.addr %s319, 26
        %s321 = smul.addr %s320, 4
        %s322 = scalar_lea.vmem %s5, %s321
        %p323 = pneg %p179
        %p324 = pneg %p176
        %p325 = scmp.lt.s32.totalorder %s22, 3
        %s326 = scalar_select %p325, %s22, 3
        %s327 = scalar_lea.vmem %s6, %s326
        %p328 = pneg %p205
        %p329 = pneg %p202
        %p330 = scmp.lt.s32.totalorder %s22, 3
        %s331 = scalar_select %p330, %s22, 3
        %s332 = scalar_lea.vmem %s7, %s331
        %p333 = scmp.lt.s32.totalorder %s22, 3
        %s334 = scalar_select %p333, %s22, 3
        %s335 = smul.addr %s334, 26
        %s336 = smul.addr %s335, 8
        %s337 = scalar_lea.vmem %s0, %s336
        %p338 = scmp.lt.s32.totalorder %s22, 3
        %s339 = scalar_select %p338, %s22, 3
        %s340 = smul.addr %s339, 26
        %s341 = smul.addr %s340, 4
        %s342 = scalar_lea.vmem %s5, %s341
        %p343 = scmp.lt.s32.totalorder %s22, 3
        %s344 = scalar_select %p343, %s22, 3
        %s345 = scalar_lea.vmem %s6, %s344
        %p346 = scmp.lt.s32.totalorder %s22, 3
        %s347 = scalar_select %p346, %s22, 3
        %s348 = scalar_lea.vmem %s7, %s347
        %v350 = vld [vmem:[%s337] sm:$0xff]
        %v351 = vld [vmem:[%s337 + $0x8] sm:$0xff]
        %v352 = vld [vmem:[%s337 + $0x10] sm:$0xff]
        %v353 = vld [vmem:[%s337 + $0x18] sm:$0xff]
        %v354 = vld [vmem:[%s337 + $0x20] sm:$0xff]
        %v355 = vld [vmem:[%s337 + $0x28] sm:$0xff]
        %v356 = vld [vmem:[%s337 + $0x30] sm:$0xff]
        %v357 = vld [vmem:[%s337 + $0x38] sm:$0xff]
        %v358 = vld [vmem:[%s337 + $0x40] sm:$0xff]
        %v359 = vld [vmem:[%s337 + $0x48] sm:$0xff]
        %v360 = vld [vmem:[%s337 + $0x50] sm:$0xff]
        %v361 = vld [vmem:[%s337 + $0x58] sm:$0xff]
        %v362 = vld [vmem:[%s337 + $0x60] sm:$0xff]
        %v363 = vld [vmem:[%s337 + $0x68] sm:$0xff]
        %v364 = vld [vmem:[%s337 + $0x70] sm:$0xff]
        %v365 = vld [vmem:[%s337 + $0x78] sm:$0xff]
        %v366 = vld [vmem:[%s337 + $0x80] sm:$0xff]
        %v367 = vld [vmem:[%s337 + $0x88] sm:$0xff]
        %v368 = vld [vmem:[%s337 + $0x90] sm:$0xff]
        %v369 = vld [vmem:[%s337 + $0x98] sm:$0xff]
        %v370 = vld [vmem:[%s337 + $0xa0] sm:$0xff]
        %v371 = vld [vmem:[%s337 + $0xa8] sm:$0xff]
        %v372 = vld [vmem:[%s337 + $0xb0] sm:$0xff]
        %v373 = vld [vmem:[%s337 + $0xb8] sm:$0xff]
        %v374 = vld [vmem:[%s337 + $0xc0] sm:$0xff]
        %v375 = vld [vmem:[%s337 + $0xc8] sm:$0x3]
        %v376 = vld [vmem:[#allocation3] sm:$0x7]
        %378 = vset.pattern.permute.xlu0 0
        %379 = vperm.xlu0 %378, %v350
        %v380 = vpop.permute.xlu0 %379
        %383 = vset.pattern.permute.xlu0 0
        %384 = vperm.xlu0 %383, %v351
        %v385 = vpop.permute.xlu0 %384
        %388 = vset.pattern.permute.xlu0 0
        %389 = vperm.xlu0 %388, %v352
        %v390 = vpop.permute.xlu0 %389
        %393 = vset.pattern.permute.xlu0 0
        %394 = vperm.xlu0 %393, %v353
        %v395 = vpop.permute.xlu0 %394
        %398 = vset.pattern.permute.xlu0 0
        %399 = vperm.xlu0 %398, %v354
        %v400 = vpop.permute.xlu0 %399
        %403 = vset.pattern.permute.xlu0 0
        %404 = vperm.xlu0 %403, %v355
        %v405 = vpop.permute.xlu0 %404
        %408 = vset.pattern.permute.xlu0 0
        %409 = vperm.xlu0 %408, %v356
        %v410 = vpop.permute.xlu0 %409
        %413 = vset.pattern.permute.xlu0 0
        %414 = vperm.xlu0 %413, %v357
        %v415 = vpop.permute.xlu0 %414
        %418 = vset.pattern.permute.xlu0 0
        %419 = vperm.xlu0 %418, %v358
        %v420 = vpop.permute.xlu0 %419
        %423 = vset.pattern.permute.xlu0 0
        %424 = vperm.xlu0 %423, %v359
        %v425 = vpop.permute.xlu0 %424
        %428 = vset.pattern.permute.xlu0 0
        %429 = vperm.xlu0 %428, %v360
        %v430 = vpop.permute.xlu0 %429
        %433 = vset.pattern.permute.xlu0 0
        %434 = vperm.xlu0 %433, %v361
        %v435 = vpop.permute.xlu0 %434
        %438 = vset.pattern.permute.xlu0 0
        %439 = vperm.xlu0 %438, %v362
        %v440 = vpop.permute.xlu0 %439
        %443 = vset.pattern.permute.xlu0 0
        %444 = vperm.xlu0 %443, %v363
        %v445 = vpop.permute.xlu0 %444
        %448 = vset.pattern.permute.xlu0 0
        %449 = vperm.xlu0 %448, %v364
        %v450 = vpop.permute.xlu0 %449
        %453 = vset.pattern.permute.xlu0 0
        %454 = vperm.xlu0 %453, %v365
        %v455 = vpop.permute.xlu0 %454
        %458 = vset.pattern.permute.xlu0 0
        %459 = vperm.xlu0 %458, %v366
        %v460 = vpop.permute.xlu0 %459
        %463 = vset.pattern.permute.xlu0 0
        %464 = vperm.xlu0 %463, %v367
        %v465 = vpop.permute.xlu0 %464
        %468 = vset.pattern.permute.xlu0 0
        %469 = vperm.xlu0 %468, %v368
        %v470 = vpop.permute.xlu0 %469
        %473 = vset.pattern.permute.xlu0 0
        %474 = vperm.xlu0 %473, %v369
        %v475 = vpop.permute.xlu0 %474
        %478 = vset.pattern.permute.xlu0 0
        %479 = vperm.xlu0 %478, %v370
        %v480 = vpop.permute.xlu0 %479
        %483 = vset.pattern.permute.xlu0 0
        %484 = vperm.xlu0 %483, %v371
        %v485 = vpop.permute.xlu0 %484
        %488 = vset.pattern.permute.xlu0 0
        %489 = vperm.xlu0 %488, %v372
        %v490 = vpop.permute.xlu0 %489
        %493 = vset.pattern.permute.xlu0 0
        %494 = vperm.xlu0 %493, %v373
        %v495 = vpop.permute.xlu0 %494
        %498 = vset.pattern.permute.xlu0 0
        %499 = vperm.xlu0 %498, %v374
        %v500 = vpop.permute.xlu0 %499
        %v502 = vlaneseq
        %v503 = vshrl.u32 %v502, 7
        %v504 = vsub.s32 0, %v503
        %v505 = vrot.slane %v376, %v504
        %v506 = vmul.f32 %v380, %v505
        %v507 = vmul.f32 %v385, %v505
        %v508 = vmul.f32 %v390, %v505
        %v509 = vmul.f32 %v395, %v505
        %v510 = vmul.f32 %v400, %v505
        %v511 = vmul.f32 %v405, %v505
        %v512 = vmul.f32 %v410, %v505
        %v513 = vmul.f32 %v415, %v505
        %v514 = vmul.f32 %v420, %v505
        %v515 = vmul.f32 %v425, %v505
        %v516 = vmul.f32 %v430, %v505
        %v517 = vmul.f32 %v435, %v505
        %v518 = vmul.f32 %v440, %v505
        %v519 = vmul.f32 %v445, %v505
        %v520 = vmul.f32 %v450, %v505
        %v521 = vmul.f32 %v455, %v505
        %v522 = vmul.f32 %v460, %v505
        %v523 = vmul.f32 %v465, %v505
        %v524 = vmul.f32 %v470, %v505
        %v525 = vmul.f32 %v475, %v505
        %v526 = vmul.f32 %v480, %v505
        %v527 = vmul.f32 %v485, %v505
        %v528 = vmul.f32 %v490, %v505
        %v529 = vmul.f32 %v495, %v505
        %v530 = vmul.f32 %v500, %v505
        %532 = vset.pattern.permute.xlu0 0
        %533 = vperm.xlu0 %532, %v375
        %v534 = vpop.permute.xlu0 %533
        %v536 = vlaneseq
        %v537 = vshrl.u32 %v536, 7
        %v538 = vsub.s32 1, %v537
        %v539 = vrot.slane %v376, %v538
        %v540 = vmul.f32 %v380, %v539
        %v541 = vmul.f32 %v385, %v539
        %v542 = vmul.f32 %v390, %v539
        %v543 = vmul.f32 %v395, %v539
        %v544 = vmul.f32 %v400, %v539
        %v545 = vmul.f32 %v405, %v539
        %v546 = vmul.f32 %v410, %v539
        %v547 = vmul.f32 %v415, %v539
        %v548 = vmul.f32 %v420, %v539
        %v549 = vmul.f32 %v425, %v539
        %v550 = vmul.f32 %v430, %v539
        %v551 = vmul.f32 %v435, %v539
        %v552 = vmul.f32 %v440, %v539
        %v553 = vmul.f32 %v445, %v539
        %v554 = vmul.f32 %v450, %v539
        %v555 = vmul.f32 %v455, %v539
        %v556 = vmul.f32 %v460, %v539
        %v557 = vmul.f32 %v465, %v539
        %v558 = vmul.f32 %v470, %v539
        %v559 = vmul.f32 %v475, %v539
        %v560 = vmul.f32 %v480, %v539
        %v561 = vmul.f32 %v485, %v539
        %v562 = vmul.f32 %v490, %v539
        %v563 = vmul.f32 %v495, %v539
        %v564 = vmul.f32 %v500, %v539
        %v565 = vmul.f32 %v534, %v539
        %vm592 = vcmask 1046528
        %v593 = vrot.slane %v540, 1
        %v594 = vrot.slane %v541, 1
        %v595 = vsel %vm592, %v593, %v594
        %v596 = vrot.slane %v542, 1
        %v597 = vsel %vm592, %v594, %v596
        %v598 = vrot.slane %v543, 1
        %v599 = vsel %vm592, %v596, %v598
        %v600 = vrot.slane %v544, 1
        %v601 = vsel %vm592, %v598, %v600
        %v602 = vrot.slane %v545, 1
        %v603 = vsel %vm592, %v600, %v602
        %v604 = vrot.slane %v546, 1
        %v605 = vsel %vm592, %v602, %v604
        %v606 = vrot.slane %v547, 1
        %v607 = vsel %vm592, %v604, %v606
        %v608 = vrot.slane %v548, 1
        %v609 = vsel %vm592, %v606, %v608
        %v610 = vrot.slane %v549, 1
        %v611 = vsel %vm592, %v608, %v610
        %v612 = vrot.slane %v550, 1
        %v613 = vsel %vm592, %v610, %v612
        %v614 = vrot.slane %v551, 1
        %v615 = vsel %vm592, %v612, %v614
        %v616 = vrot.slane %v552, 1
        %v617 = vsel %vm592, %v614, %v616
        %v618 = vrot.slane %v553, 1
        %v619 = vsel %vm592, %v616, %v618
        %v620 = vrot.slane %v554, 1
        %v621 = vsel %vm592, %v618, %v620
        %v622 = vrot.slane %v555, 1
        %v623 = vsel %vm592, %v620, %v622
        %v624 = vrot.slane %v556, 1
        %v625 = vsel %vm592, %v622, %v624
        %v626 = vrot.slane %v557, 1
        %v627 = vsel %vm592, %v624, %v626
        %v628 = vrot.slane %v558, 1
        %v629 = vsel %vm592, %v626, %v628
        %v630 = vrot.slane %v559, 1
        %v631 = vsel %vm592, %v628, %v630
        %v632 = vrot.slane %v560, 1
        %v633 = vsel %vm592, %v630, %v632
        %v634 = vrot.slane %v561, 1
        %v635 = vsel %vm592, %v632, %v634
        %v636 = vrot.slane %v562, 1
        %v637 = vsel %vm592, %v634, %v636
        %v638 = vrot.slane %v563, 1
        %v639 = vsel %vm592, %v636, %v638
        %v640 = vrot.slane %v564, 1
        %v641 = vsel %vm592, %v638, %v640
        %v642 = vrot.slane %v565, 1
        %v643 = vsel %vm592, %v640, %v642
        %v669 = vadd.f32 %v506, %v595
        %v670 = vadd.f32 %v507, %v597
        %v671 = vadd.f32 %v508, %v599
        %v672 = vadd.f32 %v509, %v601
        %v673 = vadd.f32 %v510, %v603
        %v674 = vadd.f32 %v511, %v605
        %v675 = vadd.f32 %v512, %v607
        %v676 = vadd.f32 %v513, %v609
        %v677 = vadd.f32 %v514, %v611
        %v678 = vadd.f32 %v515, %v613
        %v679 = vadd.f32 %v516, %v615
        %v680 = vadd.f32 %v517, %v617
        %v681 = vadd.f32 %v518, %v619
        %v682 = vadd.f32 %v519, %v621
        %v683 = vadd.f32 %v520, %v623
        %v684 = vadd.f32 %v521, %v625
        %v685 = vadd.f32 %v522, %v627
        %v686 = vadd.f32 %v523, %v629
        %v687 = vadd.f32 %v524, %v631
        %v688 = vadd.f32 %v525, %v633
        %v689 = vadd.f32 %v526, %v635
        %v690 = vadd.f32 %v527, %v637
        %v691 = vadd.f32 %v528, %v639
        %v692 = vadd.f32 %v529, %v641
        %v693 = vadd.f32 %v530, %v643
        %v694 = vlaneseq
        %v695 = vshrl.u32 %v694, 7
        %v696 = vsub.s32 2, %v695
        %v697 = vrot.slane %v376, %v696
        %v698 = vmul.f32 %v380, %v697
        %v699 = vmul.f32 %v385, %v697
        %v700 = vmul.f32 %v390, %v697
        %v701 = vmul.f32 %v395, %v697
        %v702 = vmul.f32 %v400, %v697
        %v703 = vmul.f32 %v405, %v697
        %v704 = vmul.f32 %v410, %v697
        %v705 = vmul.f32 %v415, %v697
        %v706 = vmul.f32 %v420, %v697
        %v707 = vmul.f32 %v425, %v697
        %v708 = vmul.f32 %v430, %v697
        %v709 = vmul.f32 %v435, %v697
        %v710 = vmul.f32 %v440, %v697
        %v711 = vmul.f32 %v445, %v697
        %v712 = vmul.f32 %v450, %v697
        %v713 = vmul.f32 %v455, %v697
        %v714 = vmul.f32 %v460, %v697
        %v715 = vmul.f32 %v465, %v697
        %v716 = vmul.f32 %v470, %v697
        %v717 = vmul.f32 %v475, %v697
        %v718 = vmul.f32 %v480, %v697
        %v719 = vmul.f32 %v485, %v697
        %v720 = vmul.f32 %v490, %v697
        %v721 = vmul.f32 %v495, %v697
        %v722 = vmul.f32 %v500, %v697
        %v723 = vmul.f32 %v534, %v697
        %vm750 = vcmask 1045504
        %v751 = vrot.slane %v698, 2
        %v752 = vrot.slane %v699, 2
        %v753 = vsel %vm750, %v751, %v752
        %v754 = vrot.slane %v700, 2
        %v755 = vsel %vm750, %v752, %v754
        %v756 = vrot.slane %v701, 2
        %v757 = vsel %vm750, %v754, %v756
        %v758 = vrot.slane %v702, 2
        %v759 = vsel %vm750, %v756, %v758
        %v760 = vrot.slane %v703, 2
        %v761 = vsel %vm750, %v758, %v760
        %v762 = vrot.slane %v704, 2
        %v763 = vsel %vm750, %v760, %v762
        %v764 = vrot.slane %v705, 2
        %v765 = vsel %vm750, %v762, %v764
        %v766 = vrot.slane %v706, 2
        %v767 = vsel %vm750, %v764, %v766
        %v768 = vrot.slane %v707, 2
        %v769 = vsel %vm750, %v766, %v768
        %v770 = vrot.slane %v708, 2
        %v771 = vsel %vm750, %v768, %v770
        %v772 = vrot.slane %v709, 2
        %v773 = vsel %vm750, %v770, %v772
        %v774 = vrot.slane %v710, 2
        %v775 = vsel %vm750, %v772, %v774
        %v776 = vrot.slane %v711, 2
        %v777 = vsel %vm750, %v774, %v776
        %v778 = vrot.slane %v712, 2
        %v779 = vsel %vm750, %v776, %v778
        %v780 = vrot.slane %v713, 2
        %v781 = vsel %vm750, %v778, %v780
        %v782 = vrot.slane %v714, 2
        %v783 = vsel %vm750, %v780, %v782
        %v784 = vrot.slane %v715, 2
        %v785 = vsel %vm750, %v782, %v784
        %v786 = vrot.slane %v716, 2
        %v787 = vsel %vm750, %v784, %v786
        %v788 = vrot.slane %v717, 2
        %v789 = vsel %vm750, %v786, %v788
        %v790 = vrot.slane %v718, 2
        %v791 = vsel %vm750, %v788, %v790
        %v792 = vrot.slane %v719, 2
        %v793 = vsel %vm750, %v790, %v792
        %v794 = vrot.slane %v720, 2
        %v795 = vsel %vm750, %v792, %v794
        %v796 = vrot.slane %v721, 2
        %v797 = vsel %vm750, %v794, %v796
        %v798 = vrot.slane %v722, 2
        %v799 = vsel %vm750, %v796, %v798
        %v800 = vrot.slane %v723, 2
        %v801 = vsel %vm750, %v798, %v800
        %v827 = vadd.f32 %v669, %v753
        %v828 = vadd.f32 %v670, %v755
        %v829 = vadd.f32 %v671, %v757
        %v830 = vadd.f32 %v672, %v759
        %v831 = vadd.f32 %v673, %v761
        %v832 = vadd.f32 %v674, %v763
        %v833 = vadd.f32 %v675, %v765
        %v834 = vadd.f32 %v676, %v767
        %v835 = vadd.f32 %v677, %v769
        %v836 = vadd.f32 %v678, %v771
        %v837 = vadd.f32 %v679, %v773
        %v838 = vadd.f32 %v680, %v775
        %v839 = vadd.f32 %v681, %v777
        %v840 = vadd.f32 %v682, %v779
        %v841 = vadd.f32 %v683, %v781
        %v842 = vadd.f32 %v684, %v783
        %v843 = vadd.f32 %v685, %v785
        %v844 = vadd.f32 %v686, %v787
        %v845 = vadd.f32 %v687, %v789
        %v846 = vadd.f32 %v688, %v791
        %v847 = vadd.f32 %v689, %v793
        %v848 = vadd.f32 %v690, %v795
        %v849 = vadd.f32 %v691, %v797
        %v850 = vadd.f32 %v692, %v799
        %v851 = vadd.f32 %v693, %v801
        %v852 = vld [vmem:[#allocation5] sm:$0x1]
        %v854 = vlaneseq
        %v855 = vshrl.u32 %v854, 7
        %v856 = vsub.s32 0, %v855
        %v857 = vrot.slane %v852, %v856
        %v859 = vadd.f32 %v827, %v857
        %v860 = vadd.f32 %v828, %v857
        %v861 = vadd.f32 %v829, %v857
        %v862 = vadd.f32 %v830, %v857
        %v863 = vadd.f32 %v831, %v857
        %v864 = vadd.f32 %v832, %v857
        %v865 = vadd.f32 %v833, %v857
        %v866 = vadd.f32 %v834, %v857
        %v867 = vadd.f32 %v835, %v857
        %v868 = vadd.f32 %v836, %v857
        %v869 = vadd.f32 %v837, %v857
        %v870 = vadd.f32 %v838, %v857
        %v871 = vadd.f32 %v839, %v857
        %v872 = vadd.f32 %v840, %v857
        %v873 = vadd.f32 %v841, %v857
        %v874 = vadd.f32 %v842, %v857
        %v875 = vadd.f32 %v843, %v857
        %v876 = vadd.f32 %v844, %v857
        %v877 = vadd.f32 %v845, %v857
        %v878 = vadd.f32 %v846, %v857
        %v879 = vadd.f32 %v847, %v857
        %v880 = vadd.f32 %v848, %v857
        %v881 = vadd.f32 %v849, %v857
        %v882 = vadd.f32 %v850, %v857
        %v883 = vadd.f32 %v851, %v857
        %v884 = vmax.f32 %v859, 0.0
        %v885 = vmax.f32 %v860, 0.0
        %v886 = vmax.f32 %v861, 0.0
        %v887 = vmax.f32 %v862, 0.0
        %v888 = vmax.f32 %v863, 0.0
        %v889 = vmax.f32 %v864, 0.0
        %v890 = vmax.f32 %v865, 0.0
        %v891 = vmax.f32 %v866, 0.0
        %v892 = vmax.f32 %v867, 0.0
        %v893 = vmax.f32 %v868, 0.0
        %v894 = vmax.f32 %v869, 0.0
        %v895 = vmax.f32 %v870, 0.0
        %v896 = vmax.f32 %v871, 0.0
        %v897 = vmax.f32 %v872, 0.0
        %v898 = vmax.f32 %v873, 0.0
        %v899 = vmax.f32 %v874, 0.0
        %v900 = vmax.f32 %v875, 0.0
        %v901 = vmax.f32 %v876, 0.0
        %v902 = vmax.f32 %v877, 0.0
        %v903 = vmax.f32 %v878, 0.0
        %v904 = vmax.f32 %v879, 0.0
        %v905 = vmax.f32 %v880, 0.0
        %v906 = vmax.f32 %v881, 0.0
        %v907 = vmax.f32 %v882, 0.0
        %v908 = vmax.f32 %v883, 0.0
        %v909 = vpack.c.bf16 %v885, %v884
        %v910 = vpack.c.bf16 %v887, %v886
        %v911 = vpack.c.bf16 %v889, %v888
        %v912 = vpack.c.bf16 %v891, %v890
        %v913 = vpack.c.bf16 %v893, %v892
        %v914 = vpack.c.bf16 %v895, %v894
        %v915 = vpack.c.bf16 %v897, %v896
        %v916 = vpack.c.bf16 %v899, %v898
        %v917 = vpack.c.bf16 %v901, %v900
        %v918 = vpack.c.bf16 %v903, %v902
        %v919 = vpack.c.bf16 %v905, %v904
        %v920 = vpack.c.bf16 %v907, %v906
        %v921 = vpack.c.bf16 %v908, %v908
        %vm922 = vcmask 1043459
        %vm923 = vsmask.f32 7950
        %vm924 = vmand %vm922, %vm923
        %v925 = vld [vmem:[#allocation2 + $0x4] sm:$0x8]
        %v926 = vsel %vm924, 0, %v925
        %927 = vst [vmem:[#allocation2 + $0x4] sm:$0x8] %v926
        %vm928 = vcmask 1040384
        %vm929 = vsmask.f32 256
        %vm930 = vmand %vm928, %vm929
        %v931 = vld [vmem:[#allocation2 + $0x6c] sm:$0x1]
        %v932 = vsel %vm930, 0, %v931
        %933 = vst [vmem:[#allocation2 + $0x6c] sm:$0x1] %v932
        %v947 = vunpack.c.l.b16 %v909
        %v948 = vunpack.c.h.b16 %v909
        %v949 = vunpack.c.l.b16 %v910
        %v950 = vunpack.c.h.b16 %v910
        %v951 = vunpack.c.l.b16 %v911
        %v952 = vunpack.c.h.b16 %v911
        %v953 = vunpack.c.l.b16 %v912
        %v954 = vunpack.c.h.b16 %v912
        %v955 = vunpack.c.l.b16 %v913
        %v956 = vunpack.c.h.b16 %v913
        %v957 = vunpack.c.l.b16 %v914
        %v958 = vunpack.c.h.b16 %v914
        %v959 = vunpack.c.l.b16 %v915
        %v960 = vunpack.c.h.b16 %v915
        %v961 = vunpack.c.l.b16 %v916
        %v962 = vunpack.c.h.b16 %v916
        %v963 = vunpack.c.l.b16 %v917
        %v964 = vunpack.c.h.b16 %v917
        %v965 = vunpack.c.l.b16 %v918
        %v966 = vunpack.c.h.b16 %v918
        %v967 = vunpack.c.l.b16 %v919
        %v968 = vunpack.c.h.b16 %v919
        %v969 = vunpack.c.l.b16 %v920
        %v970 = vunpack.c.h.b16 %v920
        %v971 = vunpack.c.l.b16 %v921
        %v972 = vpack.c.b16 %v947, %v947
        %v973 = vpack.c.b16 %v948, %v948
        %v974 = vpack.c.b16 %v949, %v949
        %v975 = vpack.c.b16 %v950, %v950
        %v976 = vpack.c.b16 %v951, %v951
        %v977 = vpack.c.b16 %v952, %v952
        %v978 = vpack.c.b16 %v953, %v953
        %v979 = vpack.c.b16 %v954, %v954
        %v980 = vpack.c.b16 %v955, %v955
        %v981 = vpack.c.b16 %v956, %v956
        %v982 = vpack.c.b16 %v957, %v957
        %v983 = vpack.c.b16 %v958, %v958
        %v984 = vpack.c.b16 %v959, %v959
        %v985 = vpack.c.b16 %v960, %v960
        %v986 = vpack.c.b16 %v961, %v961
        %v987 = vpack.c.b16 %v962, %v962
        %v988 = vpack.c.b16 %v963, %v963
        %v989 = vpack.c.b16 %v964, %v964
        %v990 = vpack.c.b16 %v965, %v965
        %v991 = vpack.c.b16 %v966, %v966
        %v992 = vpack.c.b16 %v967, %v967
        %v993 = vpack.c.b16 %v968, %v968
        %v994 = vpack.c.b16 %v969, %v969
        %v995 = vpack.c.b16 %v970, %v970
        %v996 = vpack.c.b16 %v971, %v971
        %1022 = vst [vmem:[#allocation2 + $0x8] sm:$0xf] %v972
        %1023 = vst [vmem:[#allocation2 + $0xc] sm:$0xf] %v973
        %1024 = vst [vmem:[#allocation2 + $0x10] sm:$0xf] %v974
        %1025 = vst [vmem:[#allocation2 + $0x14] sm:$0xf] %v975
        %1026 = vst [vmem:[#allocation2 + $0x18] sm:$0xf] %v976
        %1027 = vst [vmem:[#allocation2 + $0x1c] sm:$0xf] %v977
        %1028 = vst [vmem:[#allocation2 + $0x20] sm:$0xf] %v978
        %1029 = vst [vmem:[#allocation2 + $0x24] sm:$0xf] %v979
        %1030 = vst [vmem:[#allocation2 + $0x28] sm:$0xf] %v980
        %1031 = vst [vmem:[#allocation2 + $0x2c] sm:$0xf] %v981
        %1032 = vst [vmem:[#allocation2 + $0x30] sm:$0xf] %v982
        %1033 = vst [vmem:[#allocation2 + $0x34] sm:$0xf] %v983
        %1034 = vst [vmem:[#allocation2 + $0x38] sm:$0xf] %v984
        %1035 = vst [vmem:[#allocation2 + $0x3c] sm:$0xf] %v985
        %1036 = vst [vmem:[#allocation2 + $0x40] sm:$0xf] %v986
        %1037 = vst [vmem:[#allocation2 + $0x44] sm:$0xf] %v987
        %1038 = vst [vmem:[#allocation2 + $0x48] sm:$0xf] %v988
        %1039 = vst [vmem:[#allocation2 + $0x4c] sm:$0xf] %v989
        %1040 = vst [vmem:[#allocation2 + $0x50] sm:$0xf] %v990
        %1041 = vst [vmem:[#allocation2 + $0x54] sm:$0xf] %v991
        %1042 = vst [vmem:[#allocation2 + $0x58] sm:$0xf] %v992
        %1043 = vst [vmem:[#allocation2 + $0x5c] sm:$0xf] %v993
        %1044 = vst [vmem:[#allocation2 + $0x60] sm:$0xf] %v994
        %1045 = vst [vmem:[#allocation2 + $0x64] sm:$0xf] %v995
        %1046 = vst [vmem:[#allocation2 + $0x68] sm:$0xf] %v996
        %v1047 = vld [vmem:[#allocation7] sm:$0xf]
        %v1048 = vld [vmem:[#allocation7 + $0x4] sm:$0xf]
        %v1049 = vld [vmem:[#allocation7 + $0x8] sm:$0xf]
        %v1050 = vld [vmem:[#allocation7 + $0xc] sm:$0xf]
        %v1051 = vld [vmem:[#allocation7 + $0x10] sm:$0xf]
        %v1052 = vld [vmem:[#allocation7 + $0x14] sm:$0xf]
        %v1053 = vld [vmem:[#allocation7 + $0x18] sm:$0xf]
        %v1054 = vld [vmem:[#allocation7 + $0x1c] sm:$0xf]
        %v1055 = vld [vmem:[#allocation7 + $0x20] sm:$0xf]
        %v1056 = vld [vmem:[#allocation7 + $0x24] sm:$0xf]
        %v1057 = vld [vmem:[#allocation7 + $0x28] sm:$0xf]
        %v1058 = vld [vmem:[#allocation7 + $0x2c] sm:$0xf]
        %v1059 = vld [vmem:[#allocation7 + $0x30] sm:$0xf]
        %v1060 = vld [vmem:[#allocation7 + $0x34] sm:$0xf]
        %v1061 = vld [vmem:[#allocation7 + $0x38] sm:$0xf]
        %v1062 = vld [vmem:[#allocation7 + $0x3c] sm:$0xf]
        %v1063 = vld [vmem:[#allocation7 + $0x40] sm:$0xf]
        %v1064 = vld [vmem:[#allocation7 + $0x44] sm:$0xf]
        %v1065 = vld [vmem:[#allocation7 + $0x48] sm:$0xf]
        %v1066 = vld [vmem:[#allocation7 + $0x4c] sm:$0xf]
        %v1067 = vld [vmem:[#allocation7 + $0x50] sm:$0xf]
        %v1068 = vld [vmem:[#allocation7 + $0x54] sm:$0xf]
        %v1069 = vld [vmem:[#allocation7 + $0x58] sm:$0xf]
        %v1070 = vld [vmem:[#allocation7 + $0x5c] sm:$0xf]
        %v1071 = vld [vmem:[#allocation7 + $0x60] sm:$0xf]
        %v1072 = vld [vmem:[#allocation7 + $0x64] sm:$0xf]
        %v1073 = vld [vmem:[#allocation7 + $0x68] sm:$0xf]
        %v1074 = vld [vmem:[#allocation7 + $0x6c] sm:$0xf]
        %v1075 = vld [vmem:[#allocation7 + $0x70] sm:$0xf]
        %v1076 = vld [vmem:[#allocation7 + $0x74] sm:$0xf]
        %v1077 = vld [vmem:[#allocation7 + $0x78] sm:$0xf]
        %v1078 = vld [vmem:[#allocation7 + $0x7c] sm:$0xf]
        %v1079 = vld [vmem:[#allocation7 + $0x80] sm:$0xf]
        %v1080 = vld [vmem:[#allocation7 + $0x84] sm:$0xf]
        %v1081 = vld [vmem:[#allocation7 + $0x88] sm:$0xf]
        %v1082 = vld [vmem:[#allocation7 + $0x8c] sm:$0xf]
        %v1083 = vld [vmem:[#allocation7 + $0x90] sm:$0xf]
        %v1084 = vld [vmem:[#allocation7 + $0x94] sm:$0xf]
        %v1085 = vld [vmem:[#allocation7 + $0x98] sm:$0xf]
        %v1086 = vld [vmem:[#allocation7 + $0x9c] sm:$0xf]
        %v1087 = vld [vmem:[#allocation7 + $0xa0] sm:$0xf]
        %v1088 = vld [vmem:[#allocation7 + $0xa4] sm:$0xf]
        %v1089 = vld [vmem:[#allocation7 + $0xa8] sm:$0xf]
        %v1090 = vld [vmem:[#allocation7 + $0xac] sm:$0xf]
        %v1091 = vld [vmem:[#allocation7 + $0xb0] sm:$0xf]
        %v1092 = vld [vmem:[#allocation7 + $0xb4] sm:$0xf]
        %v1093 = vld [vmem:[#allocation7 + $0xb8] sm:$0xf]
        %v1094 = vld [vmem:[#allocation7 + $0xbc] sm:$0xf]
        %v1095 = vld [vmem:[#allocation2 + $0x4] sm:$0x8]
        %v1096 = vld [vmem:[#allocation2 + $0x8] sm:$0xf]
        %v1097 = vld [vmem:[#allocation2 + $0xc] sm:$0xf]
        %v1098 = vld [vmem:[#allocation2 + $0x10] sm:$0xf]
        %v1099 = vld [vmem:[#allocation2 + $0x14] sm:$0xf]
        %v1100 = vld [vmem:[#allocation2 + $0x18] sm:$0xf]
        %v1101 = vld [vmem:[#allocation2 + $0x1c] sm:$0xf]
        %v1102 = vld [vmem:[#allocation2 + $0x20] sm:$0xf]
        %v1103 = vld [vmem:[#allocation2 + $0x24] sm:$0xf]
        %v1104 = vld [vmem:[#allocation2 + $0x28] sm:$0xf]
        %v1105 = vld [vmem:[#allocation2 + $0x2c] sm:$0xf]
        %v1106 = vld [vmem:[#allocation2 + $0x30] sm:$0xf]
        %v1107 = vld [vmem:[#allocation2 + $0x34] sm:$0xf]
        %v1108 = vld [vmem:[#allocation2 + $0x38] sm:$0xf]
        %v1109 = vld [vmem:[#allocation2 + $0x3c] sm:$0xf]
        %v1110 = vld [vmem:[#allocation2 + $0x40] sm:$0xf]
        %v1111 = vld [vmem:[#allocation2 + $0x44] sm:$0xf]
        %v1112 = vld [vmem:[#allocation2 + $0x48] sm:$0xf]
        %v1113 = vld [vmem:[#allocation2 + $0x4c] sm:$0xf]
        %v1114 = vld [vmem:[#allocation2 + $0x50] sm:$0xf]
        %v1115 = vld [vmem:[#allocation2 + $0x54] sm:$0xf]
        %v1116 = vld [vmem:[#allocation2 + $0x58] sm:$0xf]
        %v1117 = vld [vmem:[#allocation2 + $0x5c] sm:$0xf]
        %v1118 = vld [vmem:[#allocation2 + $0x60] sm:$0xf]
        %v1119 = vld [vmem:[#allocation2 + $0x64] sm:$0xf]
        %v1120 = vld [vmem:[#allocation2 + $0x68] sm:$0xf]
        %v1137 = vunpack.c.l.b16 %v1063
        %v1138 = vunpack.c.l.b16 %v1064
        %v1139 = vunpack.c.l.b16 %v1065
        %v1140 = vunpack.c.l.b16 %v1066
        %v1141 = vunpack.c.l.b16 %v1067
        %v1142 = vunpack.c.l.b16 %v1068
        %v1143 = vunpack.c.l.b16 %v1069
        %v1144 = vunpack.c.l.b16 %v1070
        %v1145 = vunpack.c.l.b16 %v1071
        %v1146 = vunpack.c.l.b16 %v1072
        %v1147 = vunpack.c.l.b16 %v1073
        %v1148 = vunpack.c.l.b16 %v1074
        %v1149 = vunpack.c.l.b16 %v1075
        %v1150 = vunpack.c.l.b16 %v1076
        %v1151 = vunpack.c.l.b16 %v1077
        %v1152 = vunpack.c.l.b16 %v1078
        %v1153 = vpack.c.b16 %v1138, %v1137
        %v1154 = vpack.c.b16 %v1140, %v1139
        %v1155 = vpack.c.b16 %v1142, %v1141
        %v1156 = vpack.c.b16 %v1144, %v1143
        %v1157 = vpack.c.b16 %v1146, %v1145
        %v1158 = vpack.c.b16 %v1148, %v1147
        %v1159 = vpack.c.b16 %v1150, %v1149
        %v1160 = vpack.c.b16 %v1152, %v1151
        %1169 = vmatprep.subr.bf16.mxu0 0
        %1170 = vmatpush1.bf16.msra.mxu0 %v1153
        %1171 = vmatprep.subr.bf16.mxu0 0
        %1172 = vmatpush1.bf16.msra.mxu0 %v1154
        %1173 = vmatprep.subr.bf16.mxu0 0
        %1174 = vmatpush1.bf16.msra.mxu0 %v1155
        %1175 = vmatprep.subr.bf16.mxu0 0
        %1176 = vmatpush1.bf16.msra.mxu0 %v1156
        %1177 = vmatprep.subr.bf16.mxu0 0
        %1178 = vmatpush1.bf16.msra.mxu0 %v1157
        %1179 = vmatprep.subr.bf16.mxu0 0
        %1180 = vmatpush1.bf16.msra.mxu0 %v1158
        %1181 = vmatprep.subr.bf16.mxu0 0
        %1182 = vmatpush1.bf16.msra.mxu0 %v1159
        %1183 = vmatprep.subr.bf16.mxu0 0
        %1184 = vmatpush1.bf16.msra.mxu0 %v1160
        %1185 = vmatprep.subr.bf16.mxu0 0
        %1186 = vmatpush1.bf16.msra.mxu0 0
        %1187 = vmatprep.subr.bf16.mxu0 0
        %1188 = vmatpush1.bf16.msra.mxu0 0
        %1189 = vmatprep.subr.bf16.mxu0 0
        %1190 = vmatpush1.bf16.msra.mxu0 0
        %1191 = vmatprep.subr.bf16.mxu0 0
        %1192 = vmatpush1.bf16.msra.mxu0 0
        %1193 = vmatprep.subr.bf16.mxu0 0
        %1194 = vmatpush1.bf16.msra.mxu0 0
        %1195 = vmatprep.subr.bf16.mxu0 0
        %1196 = vmatpush1.bf16.msra.mxu0 0
        %1197 = vmatprep.subr.bf16.mxu0 0
        %1198 = vmatpush1.bf16.msra.mxu0 0
        %1199 = vmatprep.subr.bf16.mxu0 0
        %1200 = vmatpush1.bf16.msra.mxu0 0
        %1201 = vmatprep.mubr.bf16.mxu0 0
        %1202 = vmatmul.mubr.bf16.gmra.mrb[0].mxu0 %v909
        %v1203 = vpop.f32.mrb[0].mxu0
        %v1204 = vadd.f32 0.0, %v1203
        %v1205 = vpop.f32.mrb[0].mxu0
        %v1206 = vpop.f32.mrb[0].mxu0
        %v1207 = vadd.f32 0.0, %v1206
        %v1208 = vpop.f32.mrb[0].mxu0
        %1209 = vmatprep.mubr.bf16.mxu0 0
        %1210 = vmatmul.mubr.bf16.gmra.mrb[0].mxu0 %v910
        %v1211 = vpop.f32.mrb[0].mxu0
        %v1212 = vadd.f32 0.0, %v1211
        %v1213 = vpop.f32.mrb[0].mxu0
        %v1214 = vpop.f32.mrb[0].mxu0
        %v1215 = vadd.f32 0.0, %v1214
        %v1216 = vpop.f32.mrb[0].mxu0
        %1217 = vmatprep.mubr.bf16.mxu0 0
        %1218 = vmatmul.mubr.bf16.gmra.mrb[0].mxu0 %v911
        %v1219 = vpop.f32.mrb[0].mxu0
        %v1220 = vadd.f32 0.0, %v1219
        %v1221 = vpop.f32.mrb[0].mxu0
        %v1222 = vpop.f32.mrb[0].mxu0
        %v1223 = vadd.f32 0.0, %v1222
        %v1224 = vpop.f32.mrb[0].mxu0
        %1225 = vmatprep.mubr.bf16.mxu0 0
        %1226 = vmatmul.mubr.bf16.gmra.mrb[0].mxu0 %v912
        %v1227 = vpop.f32.mrb[0].mxu0
        %v1228 = vadd.f32 0.0, %v1227
        %v1229 = vpop.f32.mrb[0].mxu0
        %v1230 = vpop.f32.mrb[0].mxu0
        %v1231 = vadd.f32 0.0, %v1230
        %v1232 = vpop.f32.mrb[0].mxu0
        %1233 = vmatprep.mubr.bf16.mxu0 0
        %1234 = vmatmul.mubr.bf16.gmra.mrb[0].mxu0 %v913
        %v1235 = vpop.f32.mrb[0].mxu0
        %v1236 = vadd.f32 0.0, %v1235
        %v1237 = vpop.f32.mrb[0].mxu0
        %v1238 = vpop.f32.mrb[0].mxu0
        %v1239 = vadd.f32 0.0, %v1238
        %v1240 = vpop.f32.mrb[0].mxu0
        %1241 = vmatprep.mubr.bf16.mxu0 0
        %1242 = vmatmul.mubr.bf16.gmra.mrb[0].mxu0 %v914
        %v1243 = vpop.f32.mrb[0].mxu0
        %v1244 = vadd.f32 0.0, %v1243
        %v1245 = vpop.f32.mrb[0].mxu0
        %v1246 = vpop.f32.mrb[0].mxu0
        %v1247 = vadd.f32 0.0, %v1246
        %v1248 = vpop.f32.mrb[0].mxu0
        %1249 = vmatprep.mubr.bf16.mxu0 0
        %1250 = vmatmul.mubr.bf16.gmra.mrb[0].mxu0 %v915
        %v1251 = vpop.f32.mrb[0].mxu0
        %v1252 = vadd.f32 0.0, %v1251
        %v1253 = vpop.f32.mrb[0].mxu0
        %v1254 = vpop.f32.mrb[0].mxu0
        %v1255 = vadd.f32 0.0, %v1254
        %v1256 = vpop.f32.mrb[0].mxu0
        %1257 = vmatprep.mubr.bf16.mxu0 0
        %1258 = vmatmul.mubr.bf16.gmra.mrb[0].mxu0 %v916
        %v1259 = vpop.f32.mrb[0].mxu0
        %v1260 = vadd.f32 0.0, %v1259
        %v1261 = vpop.f32.mrb[0].mxu0
        %v1262 = vpop.f32.mrb[0].mxu0
        %v1263 = vadd.f32 0.0, %v1262
        %v1264 = vpop.f32.mrb[0].mxu0
        %1265 = vmatprep.mubr.bf16.mxu0 0
        %1266 = vmatmul.mubr.bf16.gmra.mrb[0].mxu0 %v917
        %v1267 = vpop.f32.mrb[0].mxu0
        %v1268 = vadd.f32 0.0, %v1267
        %v1269 = vpop.f32.mrb[0].mxu0
        %v1270 = vpop.f32.mrb[0].mxu0
        %v1271 = vadd.f32 0.0, %v1270
        %v1272 = vpop.f32.mrb[0].mxu0
        %1273 = vmatprep.mubr.bf16.mxu0 0
        %1274 = vmatmul.mubr.bf16.gmra.mrb[0].mxu0 %v918
        %v1275 = vpop.f32.mrb[0].mxu0
        %v1276 = vadd.f32 0.0, %v1275
        %v1277 = vpop.f32.mrb[0].mxu0
        %v1278 = vpop.f32.mrb[0].mxu0
        %v1279 = vadd.f32 0.0, %v1278
        %v1280 = vpop.f32.mrb[0].mxu0
        %1281 = vmatprep.mubr.bf16.mxu0 0
        %1282 = vmatmul.mubr.bf16.gmra.mrb[0].mxu0 %v919
        %v1283 = vpop.f32.mrb[0].mxu0
        %v1284 = vadd.f32 0.0, %v1283
        %v1285 = vpop.f32.mrb[0].mxu0
        %v1286 = vpop.f32.mrb[0].mxu0
        %v1287 = vadd.f32 0.0, %v1286
        %v1288 = vpop.f32.mrb[0].mxu0
        %1289 = vmatprep.mubr.bf16.mxu0 0
        %1290 = vmatmul.mubr.bf16.gmra.mrb[0].mxu0 %v920
        %v1291 = vpop.f32.mrb[0].mxu0
        %v1292 = vadd.f32 0.0, %v1291
        %v1293 = vpop.f32.mrb[0].mxu0
        %v1294 = vpop.f32.mrb[0].mxu0
        %v1295 = vadd.f32 0.0, %v1294
        %v1296 = vpop.f32.mrb[0].mxu0
        %1297 = vmatprep.mubr.bf16.mxu0 0
        %1298 = vmatmul.mubr.bf16.gmra.mrb[0].mxu0 %v921
        %v1299 = vpop.f32.mrb[0].mxu0
        %v1300 = vadd.f32 0.0, %v1299
        %v1301 = vpop.f32.mrb[0].mxu0
        %v1302 = vpop.f32.mrb[0].mxu0
        %v1303 = vpop.f32.mrb[0].mxu0
        %1304 = vdwg.mxu0
        %v1331 = vunpack.c.l.b16 %v1095
        %v1332 = vunpack.c.l.b16 %v1096
        %v1333 = vunpack.c.l.b16 %v1097
        %v1334 = vunpack.c.l.b16 %v1098
        %v1335 = vunpack.c.l.b16 %v1099
        %v1336 = vunpack.c.l.b16 %v1100
        %v1337 = vunpack.c.l.b16 %v1101
        %v1338 = vunpack.c.l.b16 %v1102
        %v1339 = vunpack.c.l.b16 %v1103
        %v1340 = vunpack.c.l.b16 %v1104
        %v1341 = vunpack.c.l.b16 %v1105
        %v1342 = vunpack.c.l.b16 %v1106
        %v1343 = vunpack.c.l.b16 %v1107
        %v1344 = vunpack.c.l.b16 %v1108
        %v1345 = vunpack.c.l.b16 %v1109
        %v1346 = vunpack.c.l.b16 %v1110
        %v1347 = vunpack.c.l.b16 %v1111
        %v1348 = vunpack.c.l.b16 %v1112
        %v1349 = vunpack.c.l.b16 %v1113
        %v1350 = vunpack.c.l.b16 %v1114
        %v1351 = vunpack.c.l.b16 %v1115
        %v1352 = vunpack.c.l.b16 %v1116
        %v1353 = vunpack.c.l.b16 %v1117
        %v1354 = vunpack.c.l.b16 %v1118
        %v1355 = vunpack.c.l.b16 %v1119
        %v1356 = vunpack.c.l.b16 %v1120
        %v1357 = vpack.c.b16 %v1332, %v1331
        %v1358 = vpack.c.b16 %v1334, %v1333
        %v1359 = vpack.c.b16 %v1336, %v1335
        %v1360 = vpack.c.b16 %v1338, %v1337
        %v1361 = vpack.c.b16 %v1340, %v1339
        %v1362 = vpack.c.b16 %v1342, %v1341
        %v1363 = vpack.c.b16 %v1344, %v1343
        %v1364 = vpack.c.b16 %v1346, %v1345
        %v1365 = vpack.c.b16 %v1348, %v1347
        %v1366 = vpack.c.b16 %v1350, %v1349
        %v1367 = vpack.c.b16 %v1352, %v1351
        %v1368 = vpack.c.b16 %v1354, %v1353
        %v1369 = vpack.c.b16 %v1356, %v1355
        %vm1370 = vsmask.f32 4352
        %v1372 = vshrl.u32 %v1357, 16
        %v1374 = vrot.slane %v1372, 3
        %v1375 = vshll.u32 %v1357, 16
        %v1377 = vrot.slane %v1375, 4
        %v1378 = vor.u32 %v1374, %v1377
        %v1380 = vshrl.u32 %v1358, 16
        %v1382 = vrot.slane %v1380, 3
        %v1383 = vshll.u32 %v1358, 16
        %v1385 = vrot.slane %v1383, 4
        %v1386 = vor.u32 %v1382, %v1385
        %v1387 = vsel %vm1370, %v1378, %v1386
        %v1389 = vshrl.u32 %v1359, 16
        %v1391 = vrot.slane %v1389, 3
        %v1392 = vshll.u32 %v1359, 16
        %v1394 = vrot.slane %v1392, 4
        %v1395 = vor.u32 %v1391, %v1394
        %v1396 = vsel %vm1370, %v1386, %v1395
        %v1398 = vshrl.u32 %v1360, 16
        %v1400 = vrot.slane %v1398, 3
        %v1401 = vshll.u32 %v1360, 16
        %v1403 = vrot.slane %v1401, 4
        %v1404 = vor.u32 %v1400, %v1403
        %v1405 = vsel %vm1370, %v1395, %v1404
        %v1407 = vshrl.u32 %v1361, 16
        %v1409 = vrot.slane %v1407, 3
        %v1410 = vshll.u32 %v1361, 16
        %v1412 = vrot.slane %v1410, 4
        %v1413 = vor.u32 %v1409, %v1412
        %v1414 = vsel %vm1370, %v1404, %v1413
        %v1416 = vshrl.u32 %v1362, 16
        %v1418 = vrot.slane %v1416, 3
        %v1419 = vshll.u32 %v1362, 16
        %v1421 = vrot.slane %v1419, 4
        %v1422 = vor.u32 %v1418, %v1421
        %v1423 = vsel %vm1370, %v1413, %v1422
        %v1425 = vshrl.u32 %v1363, 16
        %v1427 = vrot.slane %v1425, 3
        %v1428 = vshll.u32 %v1363, 16
        %v1430 = vrot.slane %v1428, 4
        %v1431 = vor.u32 %v1427, %v1430
        %v1432 = vsel %vm1370, %v1422, %v1431
        %v1434 = vshrl.u32 %v1364, 16
        %v1436 = vrot.slane %v1434, 3
        %v1437 = vshll.u32 %v1364, 16
        %v1439 = vrot.slane %v1437, 4
        %v1440 = vor.u32 %v1436, %v1439
        %v1441 = vsel %vm1370, %v1431, %v1440
        %v1443 = vshrl.u32 %v1365, 16
        %v1445 = vrot.slane %v1443, 3
        %v1446 = vshll.u32 %v1365, 16
        %v1448 = vrot.slane %v1446, 4
        %v1449 = vor.u32 %v1445, %v1448
        %v1450 = vsel %vm1370, %v1440, %v1449
        %v1452 = vshrl.u32 %v1366, 16
        %v1454 = vrot.slane %v1452, 3
        %v1455 = vshll.u32 %v1366, 16
        %v1457 = vrot.slane %v1455, 4
        %v1458 = vor.u32 %v1454, %v1457
        %v1459 = vsel %vm1370, %v1449, %v1458
        %v1461 = vshrl.u32 %v1367, 16
        %v1463 = vrot.slane %v1461, 3
        %v1464 = vshll.u32 %v1367, 16
        %v1466 = vrot.slane %v1464, 4
        %v1467 = vor.u32 %v1463, %v1466
        %v1468 = vsel %vm1370, %v1458, %v1467
        %v1470 = vshrl.u32 %v1368, 16
        %v1472 = vrot.slane %v1470, 3
        %v1473 = vshll.u32 %v1368, 16
        %v1475 = vrot.slane %v1473, 4
        %v1476 = vor.u32 %v1472, %v1475
        %v1477 = vsel %vm1370, %v1467, %v1476
        %v1479 = vshrl.u32 %v1369, 16
        %v1481 = vrot.slane %v1479, 3
        %v1482 = vshll.u32 %v1369, 16
        %v1484 = vrot.slane %v1482, 4
        %v1485 = vor.u32 %v1481, %v1484
        %v1486 = vsel %vm1370, %v1476, %v1485
        %v1516 = vunpack.c.l.b16 %v1047
        %v1517 = vunpack.c.l.b16 %v1048
        %v1518 = vunpack.c.l.b16 %v1049
        %v1519 = vunpack.c.l.b16 %v1050
        %v1520 = vunpack.c.l.b16 %v1051
        %v1521 = vunpack.c.l.b16 %v1052
        %v1522 = vunpack.c.l.b16 %v1053
        %v1523 = vunpack.c.l.b16 %v1054
        %v1524 = vunpack.c.l.b16 %v1055
        %v1525 = vunpack.c.l.b16 %v1056
        %v1526 = vunpack.c.l.b16 %v1057
        %v1527 = vunpack.c.l.b16 %v1058
        %v1528 = vunpack.c.l.b16 %v1059
        %v1529 = vunpack.c.l.b16 %v1060
        %v1530 = vunpack.c.l.b16 %v1061
        %v1531 = vunpack.c.l.b16 %v1062
        %v1532 = vpack.c.b16 %v1517, %v1516
        %v1533 = vpack.c.b16 %v1519, %v1518
        %v1534 = vpack.c.b16 %v1521, %v1520
        %v1535 = vpack.c.b16 %v1523, %v1522
        %v1536 = vpack.c.b16 %v1525, %v1524
        %v1537 = vpack.c.b16 %v1527, %v1526
        %v1538 = vpack.c.b16 %v1529, %v1528
        %v1539 = vpack.c.b16 %v1531, %v1530
        %1548 = vmatprep.subr.bf16.mxu0 0
        %1549 = vmatpush1.bf16.msra.mxu0 %v1532
        %1550 = vmatprep.subr.bf16.mxu0 0
        %1551 = vmatpush1.bf16.msra.mxu0 %v1533
        %1552 = vmatprep.subr.bf16.mxu0 0
        %1553 = vmatpush1.bf16.msra.mxu0 %v1534
        %1554 = vmatprep.subr.bf16.mxu0 0
        %1555 = vmatpush1.bf16.msra.mxu0 %v1535
        %1556 = vmatprep.subr.bf16.mxu0 0
        %1557 = vmatpush1.bf16.msra.mxu0 %v1536
        %1558 = vmatprep.subr.bf16.mxu0 0
        %1559 = vmatpush1.bf16.msra.mxu0 %v1537
        %1560 = vmatprep.subr.bf16.mxu0 0
        %1561 = vmatpush1.bf16.msra.mxu0 %v1538
        %1562 = vmatprep.subr.bf16.mxu0 0
        %1563 = vmatpush1.bf16.msra.mxu0 %v1539
        %1564 = vmatprep.subr.bf16.mxu0 0
        %1565 = vmatpush1.bf16.msra.mxu0 0
        %1566 = vmatprep.subr.bf16.mxu0 0
        %1567 = vmatpush1.bf16.msra.mxu0 0
        %1568 = vmatprep.subr.bf16.mxu0 0
        %1569 = vmatpush1.bf16.msra.mxu0 0
        %1570 = vmatprep.subr.bf16.mxu0 0
        %1571 = vmatpush1.bf16.msra.mxu0 0
        %1572 = vmatprep.subr.bf16.mxu0 0
        %1573 = vmatpush1.bf16.msra.mxu0 0
        %1574 = vmatprep.subr.bf16.mxu0 0
        %1575 = vmatpush1.bf16.msra.mxu0 0
        %1576 = vmatprep.subr.bf16.mxu0 0
        %1577 = vmatpush1.bf16.msra.mxu0 0
        %1578 = vmatprep.subr.bf16.mxu0 0
        %1579 = vmatpush1.bf16.msra.mxu0 0
        %1580 = vmatprep.mubr.bf16.mxu0 0
        %1581 = vmatmul.mubr.bf16.gmra.mrb[0].mxu0 %v1387
        %v1582 = vpop.f32.mrb[0].mxu0
        %v1583 = vadd.f32 %v1204, %v1582
        %v1584 = vpop.f32.mrb[0].mxu0
        %v1585 = vpop.f32.mrb[0].mxu0
        %v1586 = vadd.f32 %v1207, %v1585
        %v1587 = vpop.f32.mrb[0].mxu0
        %1588 = vmatprep.mubr.bf16.mxu0 0
        %1589 = vmatmul.mubr.bf16.gmra.mrb[0].mxu0 %v1396
        %v1590 = vpop.f32.mrb[0].mxu0
        %v1591 = vadd.f32 %v1212, %v1590
        %v1592 = vpop.f32.mrb[0].mxu0
        %v1593 = vpop.f32.mrb[0].mxu0
        %v1594 = vadd.f32 %v1215, %v1593
        %v1595 = vpop.f32.mrb[0].mxu0
        %1596 = vmatprep.mubr.bf16.mxu0 0
        %1597 = vmatmul.mubr.bf16.gmra.mrb[0].mxu0 %v1405
        %v1598 = vpop.f32.mrb[0].mxu0
        %v1599 = vadd.f32 %v1220, %v1598
        %v1600 = vpop.f32.mrb[0].mxu0
        %v1601 = vpop.f32.mrb[0].mxu0
        %v1602 = vadd.f32 %v1223, %v1601
        %v1603 = vpop.f32.mrb[0].mxu0
        %1604 = vmatprep.mubr.bf16.mxu0 0
        %1605 = vmatmul.mubr.bf16.gmra.mrb[0].mxu0 %v1414
        %v1606 = vpop.f32.mrb[0].mxu0
        %v1607 = vadd.f32 %v1228, %v1606
        %v1608 = vpop.f32.mrb[0].mxu0
        %v1609 = vpop.f32.mrb[0].mxu0
        %v1610 = vadd.f32 %v1231, %v1609
        %v1611 = vpop.f32.mrb[0].mxu0
        %1612 = vmatprep.mubr.bf16.mxu0 0
        %1613 = vmatmul.mubr.bf16.gmra.mrb[0].mxu0 %v1423
        %v1614 = vpop.f32.mrb[0].mxu0
        %v1615 = vadd.f32 %v1236, %v1614
        %v1616 = vpop.f32.mrb[0].mxu0
        %v1617 = vpop.f32.mrb[0].mxu0
        %v1618 = vadd.f32 %v1239, %v1617
        %v1619 = vpop.f32.mrb[0].mxu0
        %1620 = vmatprep.mubr.bf16.mxu0 0
        %1621 = vmatmul.mubr.bf16.gmra.mrb[0].mxu0 %v1432
        %v1622 = vpop.f32.mrb[0].mxu0
        %v1623 = vadd.f32 %v1244, %v1622
        %v1624 = vpop.f32.mrb[0].mxu0
        %v1625 = vpop.f32.mrb[0].mxu0
        %v1626 = vadd.f32 %v1247, %v1625
        %v1627 = vpop.f32.mrb[0].mxu0
        %1628 = vmatprep.mubr.bf16.mxu0 0
        %1629 = vmatmul.mubr.bf16.gmra.mrb[0].mxu0 %v1441
        %v1630 = vpop.f32.mrb[0].mxu0
        %v1631 = vadd.f32 %v1252, %v1630
        %v1632 = vpop.f32.mrb[0].mxu0
        %v1633 = vpop.f32.mrb[0].mxu0
        %v1634 = vadd.f32 %v1255, %v1633
        %v1635 = vpop.f32.mrb[0].mxu0
        %1636 = vmatprep.mubr.bf16.mxu0 0
        %1637 = vmatmul.mubr.bf16.gmra.mrb[0].mxu0 %v1450
        %v1638 = vpop.f32.mrb[0].mxu0
        %v1639 = vadd.f32 %v1260, %v1638
        %v1640 = vpop.f32.mrb[0].mxu0
        %v1641 = vpop.f32.mrb[0].mxu0
        %v1642 = vadd.f32 %v1263, %v1641
        %v1643 = vpop.f32.mrb[0].mxu0
        %1644 = vmatprep.mubr.bf16.mxu0 0
        %1645 = vmatmul.mubr.bf16.gmra.mrb[0].mxu0 %v1459
        %v1646 = vpop.f32.mrb[0].mxu0
        %v1647 = vadd.f32 %v1268, %v1646
        %v1648 = vpop.f32.mrb[0].mxu0
        %v1649 = vpop.f32.mrb[0].mxu0
        %v1650 = vadd.f32 %v1271, %v1649
        %v1651 = vpop.f32.mrb[0].mxu0
        %1652 = vmatprep.mubr.bf16.mxu0 0
        %1653 = vmatmul.mubr.bf16.gmra.mrb[0].mxu0 %v1468
        %v1654 = vpop.f32.mrb[0].mxu0
        %v1655 = vadd.f32 %v1276, %v1654
        %v1656 = vpop.f32.mrb[0].mxu0
        %v1657 = vpop.f32.mrb[0].mxu0
        %v1658 = vadd.f32 %v1279, %v1657
        %v1659 = vpop.f32.mrb[0].mxu0
        %1660 = vmatprep.mubr.bf16.mxu0 0
        %1661 = vmatmul.mubr.bf16.gmra.mrb[0].mxu0 %v1477
        %v1662 = vpop.f32.mrb[0].mxu0
        %v1663 = vadd.f32 %v1284, %v1662
        %v1664 = vpop.f32.mrb[0].mxu0
        %v1665 = vpop.f32.mrb[0].mxu0
        %v1666 = vadd.f32 %v1287, %v1665
        %v1667 = vpop.f32.mrb[0].mxu0
        %1668 = vmatprep.mubr.bf16.mxu0 0
        %1669 = vmatmul.mubr.bf16.gmra.mrb[0].mxu0 %v1486
        %v1670 = vpop.f32.mrb[0].mxu0
        %v1671 = vadd.f32 %v1292, %v1670
        %v1672 = vpop.f32.mrb[0].mxu0
        %v1673 = vpop.f32.mrb[0].mxu0
        %v1674 = vadd.f32 %v1295, %v1673
        %v1675 = vpop.f32.mrb[0].mxu0
        %1676 = vmatprep.mubr.bf16.mxu0 0
        %1677 = vmatmul.mubr.bf16.gmra.mrb[0].mxu0 %v1485
        %v1678 = vpop.f32.mrb[0].mxu0
        %v1679 = vadd.f32 %v1300, %v1678
        %v1680 = vpop.f32.mrb[0].mxu0
        %v1681 = vpop.f32.mrb[0].mxu0
        %v1682 = vpop.f32.mrb[0].mxu0
        %1683 = vdwg.mxu0
        %v1684 = vld [vmem:[#allocation2 + $0x8] sm:$0xf]
        %v1685 = vld [vmem:[#allocation2 + $0xc] sm:$0xf]
        %v1686 = vld [vmem:[#allocation2 + $0x10] sm:$0xf]
        %v1687 = vld [vmem:[#allocation2 + $0x14] sm:$0xf]
        %v1688 = vld [vmem:[#allocation2 + $0x18] sm:$0xf]
        %v1689 = vld [vmem:[#allocation2 + $0x1c] sm:$0xf]
        %v1690 = vld [vmem:[#allocation2 + $0x20] sm:$0xf]
        %v1691 = vld [vmem:[#allocation2 + $0x24] sm:$0xf]
        %v1692 = vld [vmem:[#allocation2 + $0x28] sm:$0xf]
        %v1693 = vld [vmem:[#allocation2 + $0x2c] sm:$0xf]
        %v1694 = vld [vmem:[#allocation2 + $0x30] sm:$0xf]
        %v1695 = vld [vmem:[#allocation2 + $0x34] sm:$0xf]
        %v1696 = vld [vmem:[#allocation2 + $0x38] sm:$0xf]
        %v1697 = vld [vmem:[#allocation2 + $0x3c] sm:$0xf]
        %v1698 = vld [vmem:[#allocation2 + $0x40] sm:$0xf]
        %v1699 = vld [vmem:[#allocation2 + $0x44] sm:$0xf]
        %v1700 = vld [vmem:[#allocation2 + $0x48] sm:$0xf]
        %v1701 = vld [vmem:[#allocation2 + $0x4c] sm:$0xf]
        %v1702 = vld [vmem:[#allocation2 + $0x50] sm:$0xf]
        %v1703 = vld [vmem:[#allocation2 + $0x54] sm:$0xf]
        %v1704 = vld [vmem:[#allocation2 + $0x58] sm:$0xf]
        %v1705 = vld [vmem:[#allocation2 + $0x5c] sm:$0xf]
        %v1706 = vld [vmem:[#allocation2 + $0x60] sm:$0xf]
        %v1707 = vld [vmem:[#allocation2 + $0x64] sm:$0xf]
        %v1708 = vld [vmem:[#allocation2 + $0x68] sm:$0xf]
        %v1709 = vld [vmem:[#allocation2 + $0x6c] sm:$0x1]
        %v1736 = vunpack.c.l.b16 %v1684
        %v1737 = vunpack.c.l.b16 %v1685
        %v1738 = vunpack.c.l.b16 %v1686
        %v1739 = vunpack.c.l.b16 %v1687
        %v1740 = vunpack.c.l.b16 %v1688
        %v1741 = vunpack.c.l.b16 %v1689
        %v1742 = vunpack.c.l.b16 %v1690
        %v1743 = vunpack.c.l.b16 %v1691
        %v1744 = vunpack.c.l.b16 %v1692
        %v1745 = vunpack.c.l.b16 %v1693
        %v1746 = vunpack.c.l.b16 %v1694
        %v1747 = vunpack.c.l.b16 %v1695
        %v1748 = vunpack.c.l.b16 %v1696
        %v1749 = vunpack.c.l.b16 %v1697
        %v1750 = vunpack.c.l.b16 %v1698
        %v1751 = vunpack.c.l.b16 %v1699
        %v1752 = vunpack.c.l.b16 %v1700
        %v1753 = vunpack.c.l.b16 %v1701
        %v1754 = vunpack.c.l.b16 %v1702
        %v1755 = vunpack.c.l.b16 %v1703
        %v1756 = vunpack.c.l.b16 %v1704
        %v1757 = vunpack.c.l.b16 %v1705
        %v1758 = vunpack.c.l.b16 %v1706
        %v1759 = vunpack.c.l.b16 %v1707
        %v1760 = vunpack.c.l.b16 %v1708
        %v1761 = vunpack.c.l.b16 %v1709
        %v1762 = vpack.c.b16 %v1737, %v1736
        %v1763 = vpack.c.b16 %v1739, %v1738
        %v1764 = vpack.c.b16 %v1741, %v1740
        %v1765 = vpack.c.b16 %v1743, %v1742
        %v1766 = vpack.c.b16 %v1745, %v1744
        %v1767 = vpack.c.b16 %v1747, %v1746
        %v1768 = vpack.c.b16 %v1749, %v1748
        %v1769 = vpack.c.b16 %v1751, %v1750
        %v1770 = vpack.c.b16 %v1753, %v1752
        %v1771 = vpack.c.b16 %v1755, %v1754
        %v1772 = vpack.c.b16 %v1757, %v1756
        %v1773 = vpack.c.b16 %v1759, %v1758
        %v1774 = vpack.c.b16 %v1761, %v1760
        %vm1775 = vsmask.f32 7424
        %v1777 = vshrl.u32 %v1762, 16
        %v1779 = vshll.u32 %v1762, 16
        %v1781 = vrot.slane %v1779, 1
        %v1782 = vor.u32 %v1777, %v1781
        %v1784 = vshll.u32 %v1763, 16
        %v1786 = vrot.slane %v1784, 1
        %v1787 = vsel %vm1775, %v1782, %v1786
        %v1788 = vshrl.u32 %v1763, 16
        %v1790 = vor.u32 %v1788, %v1786
        %v1792 = vshll.u32 %v1764, 16
        %v1794 = vrot.slane %v1792, 1
        %v1795 = vsel %vm1775, %v1790, %v1794
        %v1796 = vshrl.u32 %v1764, 16
        %v1798 = vor.u32 %v1796, %v1794
        %v1800 = vshll.u32 %v1765, 16
        %v1802 = vrot.slane %v1800, 1
        %v1803 = vsel %vm1775, %v1798, %v1802
        %v1804 = vshrl.u32 %v1765, 16
        %v1806 = vor.u32 %v1804, %v1802
        %v1808 = vshll.u32 %v1766, 16
        %v1810 = vrot.slane %v1808, 1
        %v1811 = vsel %vm1775, %v1806, %v1810
        %v1812 = vshrl.u32 %v1766, 16
        %v1814 = vor.u32 %v1812, %v1810
        %v1816 = vshll.u32 %v1767, 16
        %v1818 = vrot.slane %v1816, 1
        %v1819 = vsel %vm1775, %v1814, %v1818
        %v1820 = vshrl.u32 %v1767, 16
        %v1822 = vor.u32 %v1820, %v1818
        %v1824 = vshll.u32 %v1768, 16
        %v1826 = vrot.slane %v1824, 1
        %v1827 = vsel %vm1775, %v1822, %v1826
        %v1828 = vshrl.u32 %v1768, 16
        %v1830 = vor.u32 %v1828, %v1826
        %v1832 = vshll.u32 %v1769, 16
        %v1834 = vrot.slane %v1832, 1
        %v1835 = vsel %vm1775, %v1830, %v1834
        %v1836 = vshrl.u32 %v1769, 16
        %v1838 = vor.u32 %v1836, %v1834
        %v1840 = vshll.u32 %v1770, 16
        %v1842 = vrot.slane %v1840, 1
        %v1843 = vsel %vm1775, %v1838, %v1842
        %v1844 = vshrl.u32 %v1770, 16
        %v1846 = vor.u32 %v1844, %v1842
        %v1848 = vshll.u32 %v1771, 16
        %v1850 = vrot.slane %v1848, 1
        %v1851 = vsel %vm1775, %v1846, %v1850
        %v1852 = vshrl.u32 %v1771, 16
        %v1854 = vor.u32 %v1852, %v1850
        %v1856 = vshll.u32 %v1772, 16
        %v1858 = vrot.slane %v1856, 1
        %v1859 = vsel %vm1775, %v1854, %v1858
        %v1860 = vshrl.u32 %v1772, 16
        %v1862 = vor.u32 %v1860, %v1858
        %v1864 = vshll.u32 %v1773, 16
        %v1866 = vrot.slane %v1864, 1
        %v1867 = vsel %vm1775, %v1862, %v1866
        %v1868 = vshrl.u32 %v1773, 16
        %v1870 = vor.u32 %v1868, %v1866
        %v1872 = vshll.u32 %v1774, 16
        %v1874 = vrot.slane %v1872, 1
        %v1875 = vsel %vm1775, %v1870, %v1874
        %v1876 = vshrl.u32 %v1774, 16
        %v1878 = vor.u32 %v1876, %v1874
        %v1908 = vunpack.c.l.b16 %v1079
        %v1909 = vunpack.c.l.b16 %v1080
        %v1910 = vunpack.c.l.b16 %v1081
        %v1911 = vunpack.c.l.b16 %v1082
        %v1912 = vunpack.c.l.b16 %v1083
        %v1913 = vunpack.c.l.b16 %v1084
        %v1914 = vunpack.c.l.b16 %v1085
        %v1915 = vunpack.c.l.b16 %v1086
        %v1916 = vunpack.c.l.b16 %v1087
        %v1917 = vunpack.c.l.b16 %v1088
        %v1918 = vunpack.c.l.b16 %v1089
        %v1919 = vunpack.c.l.b16 %v1090
        %v1920 = vunpack.c.l.b16 %v1091
        %v1921 = vunpack.c.l.b16 %v1092
        %v1922 = vunpack.c.l.b16 %v1093
        %v1923 = vunpack.c.l.b16 %v1094
        %v1924 = vpack.c.b16 %v1909, %v1908
        %v1925 = vpack.c.b16 %v1911, %v1910
        %v1926 = vpack.c.b16 %v1913, %v1912
        %v1927 = vpack.c.b16 %v1915, %v1914
        %v1928 = vpack.c.b16 %v1917, %v1916
        %v1929 = vpack.c.b16 %v1919, %v1918
        %v1930 = vpack.c.b16 %v1921, %v1920
        %v1931 = vpack.c.b16 %v1923, %v1922
        %1940 = vmatprep.subr.bf16.mxu0 0
        %1941 = vmatpush1.bf16.msra.mxu0 %v1924
        %1942 = vmatprep.subr.bf16.mxu0 0
        %1943 = vmatpush1.bf16.msra.mxu0 %v1925
        %1944 = vmatprep.subr.bf16.mxu0 0
        %1945 = vmatpush1.bf16.msra.mxu0 %v1926
        %1946 = vmatprep.subr.bf16.mxu0 0
        %1947 = vmatpush1.bf16.msra.mxu0 %v1927
        %1948 = vmatprep.subr.bf16.mxu0 0
        %1949 = vmatpush1.bf16.msra.mxu0 %v1928
        %1950 = vmatprep.subr.bf16.mxu0 0
        %1951 = vmatpush1.bf16.msra.mxu0 %v1929
        %1952 = vmatprep.subr.bf16.mxu0 0
        %1953 = vmatpush1.bf16.msra.mxu0 %v1930
        %1954 = vmatprep.subr.bf16.mxu0 0
        %1955 = vmatpush1.bf16.msra.mxu0 %v1931
        %1956 = vmatprep.subr.bf16.mxu0 0
        %1957 = vmatpush1.bf16.msra.mxu0 0
        %1958 = vmatprep.subr.bf16.mxu0 0
        %1959 = vmatpush1.bf16.msra.mxu0 0
        %1960 = vmatprep.subr.bf16.mxu0 0
        %1961 = vmatpush1.bf16.msra.mxu0 0
        %1962 = vmatprep.subr.bf16.mxu0 0
        %1963 = vmatpush1.bf16.msra.mxu0 0
        %1964 = vmatprep.subr.bf16.mxu0 0
        %1965 = vmatpush1.bf16.msra.mxu0 0
        %1966 = vmatprep.subr.bf16.mxu0 0
        %1967 = vmatpush1.bf16.msra.mxu0 0
        %1968 = vmatprep.subr.bf16.mxu0 0
        %1969 = vmatpush1.bf16.msra.mxu0 0
        %1970 = vmatprep.subr.bf16.mxu0 0
        %1971 = vmatpush1.bf16.msra.mxu0 0
        %1972 = vmatprep.mubr.bf16.mxu0 0
        %1973 = vmatmul.mubr.bf16.gmra.mrb[0].mxu0 %v1787
        %v1974 = vpop.f32.mrb[0].mxu0
        %v1975 = vadd.f32 0.0, %v1974
        %v1976 = vpop.f32.mrb[0].mxu0
        %v1977 = vpop.f32.mrb[0].mxu0
        %v1978 = vadd.f32 0.0, %v1977
        %v1979 = vpop.f32.mrb[0].mxu0
        %1980 = vmatprep.mubr.bf16.mxu0 0
        %1981 = vmatmul.mubr.bf16.gmra.mrb[0].mxu0 %v1795
        %v1982 = vpop.f32.mrb[0].mxu0
        %v1983 = vadd.f32 0.0, %v1982
        %v1984 = vpop.f32.mrb[0].mxu0
        %v1985 = vpop.f32.mrb[0].mxu0
        %v1986 = vadd.f32 0.0, %v1985
        %v1987 = vpop.f32.mrb[0].mxu0
        %1988 = vmatprep.mubr.bf16.mxu0 0
        %1989 = vmatmul.mubr.bf16.gmra.mrb[0].mxu0 %v1803
        %v1990 = vpop.f32.mrb[0].mxu0
        %v1991 = vadd.f32 0.0, %v1990
        %v1992 = vpop.f32.mrb[0].mxu0
        %v1993 = vpop.f32.mrb[0].mxu0
        %v1994 = vadd.f32 0.0, %v1993
        %v1995 = vpop.f32.mrb[0].mxu0
        %1996 = vmatprep.mubr.bf16.mxu0 0
        %1997 = vmatmul.mubr.bf16.gmra.mrb[0].mxu0 %v1811
        %v1998 = vpop.f32.mrb[0].mxu0
        %v1999 = vadd.f32 0.0, %v1998
        %v2000 = vpop.f32.mrb[0].mxu0
        %v2001 = vpop.f32.mrb[0].mxu0
        %v2002 = vadd.f32 0.0, %v2001
        %v2003 = vpop.f32.mrb[0].mxu0
        %2004 = vmatprep.mubr.bf16.mxu0 0
        %2005 = vmatmul.mubr.bf16.gmra.mrb[0].mxu0 %v1819
        %v2006 = vpop.f32.mrb[0].mxu0
        %v2007 = vadd.f32 0.0, %v2006
        %v2008 = vpop.f32.mrb[0].mxu0
        %v2009 = vpop.f32.mrb[0].mxu0
        %v2010 = vadd.f32 0.0, %v2009
        %v2011 = vpop.f32.mrb[0].mxu0
        %2012 = vmatprep.mubr.bf16.mxu0 0
        %2013 = vmatmul.mubr.bf16.gmra.mrb[0].mxu0 %v1827
        %v2014 = vpop.f32.mrb[0].mxu0
        %v2015 = vadd.f32 0.0, %v2014
        %v2016 = vpop.f32.mrb[0].mxu0
        %v2017 = vpop.f32.mrb[0].mxu0
        %v2018 = vadd.f32 0.0, %v2017
        %v2019 = vpop.f32.mrb[0].mxu0
        %2020 = vmatprep.mubr.bf16.mxu0 0
        %2021 = vmatmul.mubr.bf16.gmra.mrb[0].mxu0 %v1835
        %v2022 = vpop.f32.mrb[0].mxu0
        %v2023 = vadd.f32 0.0, %v2022
        %v2024 = vpop.f32.mrb[0].mxu0
        %v2025 = vpop.f32.mrb[0].mxu0
        %v2026 = vadd.f32 0.0, %v2025
        %v2027 = vpop.f32.mrb[0].mxu0
        %2028 = vmatprep.mubr.bf16.mxu0 0
        %2029 = vmatmul.mubr.bf16.gmra.mrb[0].mxu0 %v1843
        %v2030 = vpop.f32.mrb[0].mxu0
        %v2031 = vadd.f32 0.0, %v2030
        %v2032 = vpop.f32.mrb[0].mxu0
        %v2033 = vpop.f32.mrb[0].mxu0
        %v2034 = vadd.f32 0.0, %v2033
        %v2035 = vpop.f32.mrb[0].mxu0
        %2036 = vmatprep.mubr.bf16.mxu0 0
        %2037 = vmatmul.mubr.bf16.gmra.mrb[0].mxu0 %v1851
        %v2038 = vpop.f32.mrb[0].mxu0
        %v2039 = vadd.f32 0.0, %v2038
        %v2040 = vpop.f32.mrb[0].mxu0
        %v2041 = vpop.f32.mrb[0].mxu0
        %v2042 = vadd.f32 0.0, %v2041
        %v2043 = vpop.f32.mrb[0].mxu0
        %2044 = vmatprep.mubr.bf16.mxu0 0
        %2045 = vmatmul.mubr.bf16.gmra.mrb[0].mxu0 %v1859
        %v2046 = vpop.f32.mrb[0].mxu0
        %v2047 = vadd.f32 0.0, %v2046
        %v2048 = vpop.f32.mrb[0].mxu0
        %v2049 = vpop.f32.mrb[0].mxu0
        %v2050 = vadd.f32 0.0, %v2049
        %v2051 = vpop.f32.mrb[0].mxu0
        %2052 = vmatprep.mubr.bf16.mxu0 0
        %2053 = vmatmul.mubr.bf16.gmra.mrb[0].mxu0 %v1867
        %v2054 = vpop.f32.mrb[0].mxu0
        %v2055 = vadd.f32 0.0, %v2054
        %v2056 = vpop.f32.mrb[0].mxu0
        %v2057 = vpop.f32.mrb[0].mxu0
        %v2058 = vadd.f32 0.0, %v2057
        %v2059 = vpop.f32.mrb[0].mxu0
        %2060 = vmatprep.mubr.bf16.mxu0 0
        %2061 = vmatmul.mubr.bf16.gmra.mrb[0].mxu0 %v1875
        %v2062 = vpop.f32.mrb[0].mxu0
        %v2063 = vadd.f32 0.0, %v2062
        %v2064 = vpop.f32.mrb[0].mxu0
        %v2065 = vpop.f32.mrb[0].mxu0
        %v2066 = vadd.f32 0.0, %v2065
        %v2067 = vpop.f32.mrb[0].mxu0
        %2068 = vmatprep.mubr.bf16.mxu0 0
        %2069 = vmatmul.mubr.bf16.gmra.mrb[0].mxu0 %v1878
        %v2070 = vpop.f32.mrb[0].mxu0
        %v2071 = vadd.f32 0.0, %v2070
        %v2072 = vpop.f32.mrb[0].mxu0
        %v2073 = vpop.f32.mrb[0].mxu0
        %v2074 = vpop.f32.mrb[0].mxu0
        %2075 = vdwg.mxu0
        %v2076 = vadd.f32 %v1583, %v1975
        %v2077 = vadd.f32 %v1586, %v1978
        %v2078 = vadd.f32 %v1591, %v1983
        %v2079 = vadd.f32 %v1594, %v1986
        %v2080 = vadd.f32 %v1599, %v1991
        %v2081 = vadd.f32 %v1602, %v1994
        %v2082 = vadd.f32 %v1607, %v1999
        %v2083 = vadd.f32 %v1610, %v2002
        %v2084 = vadd.f32 %v1615, %v2007
        %v2085 = vadd.f32 %v1618, %v2010
        %v2086 = vadd.f32 %v1623, %v2015
        %v2087 = vadd.f32 %v1626, %v2018
        %v2088 = vadd.f32 %v1631, %v2023
        %v2089 = vadd.f32 %v1634, %v2026
        %v2090 = vadd.f32 %v1639, %v2031
        %v2091 = vadd.f32 %v1642, %v2034
        %v2092 = vadd.f32 %v1647, %v2039
        %v2093 = vadd.f32 %v1650, %v2042
        %v2094 = vadd.f32 %v1655, %v2047
        %v2095 = vadd.f32 %v1658, %v2050
        %v2096 = vadd.f32 %v1663, %v2055
        %v2097 = vadd.f32 %v1666, %v2058
        %v2098 = vadd.f32 %v1671, %v2063
        %v2099 = vadd.f32 %v1674, %v2066
        %v2100 = vadd.f32 %v1679, %v2071
        %v2101 = vld [vmem:[#allocation8] sm:$0x1]
        %v2103 = vlaneseq
        %v2104 = vshrl.u32 %v2103, 7
        %v2105 = vsub.s32 0, %v2104
        %v2106 = vrot.slane %v2101, %v2105
        %v2108 = vadd.f32 %v2076, %v2106
        %v2109 = vadd.f32 %v2077, %v2106
        %v2110 = vadd.f32 %v2078, %v2106
        %v2111 = vadd.f32 %v2079, %v2106
        %v2112 = vadd.f32 %v2080, %v2106
        %v2113 = vadd.f32 %v2081, %v2106
        %v2114 = vadd.f32 %v2082, %v2106
        %v2115 = vadd.f32 %v2083, %v2106
        %v2116 = vadd.f32 %v2084, %v2106
        %v2117 = vadd.f32 %v2085, %v2106
        %v2118 = vadd.f32 %v2086, %v2106
        %v2119 = vadd.f32 %v2087, %v2106
        %v2120 = vadd.f32 %v2088, %v2106
        %v2121 = vadd.f32 %v2089, %v2106
        %v2122 = vadd.f32 %v2090, %v2106
        %v2123 = vadd.f32 %v2091, %v2106
        %v2124 = vadd.f32 %v2092, %v2106
        %v2125 = vadd.f32 %v2093, %v2106
        %v2126 = vadd.f32 %v2094, %v2106
        %v2127 = vadd.f32 %v2095, %v2106
        %v2128 = vadd.f32 %v2096, %v2106
        %v2129 = vadd.f32 %v2097, %v2106
        %v2130 = vadd.f32 %v2098, %v2106
        %v2131 = vadd.f32 %v2099, %v2106
        %v2132 = vadd.f32 %v2100, %v2106
        %v2133 = vmax.f32 %v2108, 0.0
        %v2134 = vmax.f32 %v2109, 0.0
        %v2135 = vmax.f32 %v2110, 0.0
        %v2136 = vmax.f32 %v2111, 0.0
        %v2137 = vmax.f32 %v2112, 0.0
        %v2138 = vmax.f32 %v2113, 0.0
        %v2139 = vmax.f32 %v2114, 0.0
        %v2140 = vmax.f32 %v2115, 0.0
        %v2141 = vmax.f32 %v2116, 0.0
        %v2142 = vmax.f32 %v2117, 0.0
        %v2143 = vmax.f32 %v2118, 0.0
        %v2144 = vmax.f32 %v2119, 0.0
        %v2145 = vmax.f32 %v2120, 0.0
        %v2146 = vmax.f32 %v2121, 0.0
        %v2147 = vmax.f32 %v2122, 0.0
        %v2148 = vmax.f32 %v2123, 0.0
        %v2149 = vmax.f32 %v2124, 0.0
        %v2150 = vmax.f32 %v2125, 0.0
        %v2151 = vmax.f32 %v2126, 0.0
        %v2152 = vmax.f32 %v2127, 0.0
        %v2153 = vmax.f32 %v2128, 0.0
        %v2154 = vmax.f32 %v2129, 0.0
        %v2155 = vmax.f32 %v2130, 0.0
        %v2156 = vmax.f32 %v2131, 0.0
        %v2157 = vmax.f32 %v2132, 0.0
        %v2158 = vadd.f32 %v2133, %v2134
        %v2159 = vadd.f32 %v2158, %v2135
        %v2160 = vadd.f32 %v2159, %v2136
        %v2161 = vadd.f32 %v2160, %v2137
        %v2162 = vadd.f32 %v2161, %v2138
        %v2163 = vadd.f32 %v2162, %v2139
        %v2164 = vadd.f32 %v2163, %v2140
        %v2165 = vadd.f32 %v2164, %v2141
        %v2166 = vadd.f32 %v2165, %v2142
        %v2167 = vadd.f32 %v2166, %v2143
        %v2168 = vadd.f32 %v2167, %v2144
        %v2169 = vadd.f32 %v2168, %v2145
        %v2170 = vadd.f32 %v2169, %v2146
        %v2171 = vadd.f32 %v2170, %v2147
        %v2172 = vadd.f32 %v2171, %v2148
        %v2173 = vadd.f32 %v2172, %v2149
        %v2174 = vadd.f32 %v2173, %v2150
        %v2175 = vadd.f32 %v2174, %v2151
        %v2176 = vadd.f32 %v2175, %v2152
        %v2177 = vadd.f32 %v2176, %v2153
        %v2178 = vadd.f32 %v2177, %v2154
        %v2179 = vadd.f32 %v2178, %v2155
        %v2180 = vadd.f32 %v2179, %v2156
        %v2181 = vadd.f32 %v2180, %v2157
        %v2182 = vrot.slane %v2181, 4
        %v2183 = vadd.f32 %v2181, %v2182
        %v2184 = vrot.slane %v2183, 2
        %v2185 = vadd.f32 %v2183, %v2184
        %v2186 = vrot.slane %v2185, 1
        %v2187 = vadd.f32 %v2185, %v2186
        %2188 = vst [vmem:[%s345] sm:$0x1] %v2187
        %v2189 = vmul.f32 %v2133, %v2133
        %v2190 = vmul.f32 %v2134, %v2134
        %v2191 = vmul.f32 %v2135, %v2135
        %v2192 = vmul.f32 %v2136, %v2136
        %v2193 = vmul.f32 %v2137, %v2137
        %v2194 = vmul.f32 %v2138, %v2138
        %v2195 = vmul.f32 %v2139, %v2139
        %v2196 = vmul.f32 %v2140, %v2140
        %v2197 = vmul.f32 %v2141, %v2141
        %v2198 = vmul.f32 %v2142, %v2142
        %v2199 = vmul.f32 %v2143, %v2143
        %v2200 = vmul.f32 %v2144, %v2144
        %v2201 = vmul.f32 %v2145, %v2145
        %v2202 = vmul.f32 %v2146, %v2146
        %v2203 = vmul.f32 %v2147, %v2147
        %v2204 = vmul.f32 %v2148, %v2148
        %v2205 = vmul.f32 %v2149, %v2149
        %v2206 = vmul.f32 %v2150, %v2150
        %v2207 = vmul.f32 %v2151, %v2151
        %v2208 = vmul.f32 %v2152, %v2152
        %v2209 = vmul.f32 %v2153, %v2153
        %v2210 = vmul.f32 %v2154, %v2154
        %v2211 = vmul.f32 %v2155, %v2155
        %v2212 = vmul.f32 %v2156, %v2156
        %v2213 = vmul.f32 %v2157, %v2157
        %v2214 = vadd.f32 %v2189, %v2190
        %v2215 = vadd.f32 %v2214, %v2191
        %v2216 = vadd.f32 %v2215, %v2192
        %v2217 = vadd.f32 %v2216, %v2193
        %v2218 = vadd.f32 %v2217, %v2194
        %v2219 = vadd.f32 %v2218, %v2195
        %v2220 = vadd.f32 %v2219, %v2196
        %v2221 = vadd.f32 %v2220, %v2197
        %v2222 = vadd.f32 %v2221, %v2198
        %v2223 = vadd.f32 %v2222, %v2199
        %v2224 = vadd.f32 %v2223, %v2200
        %v2225 = vadd.f32 %v2224, %v2201
        %v2226 = vadd.f32 %v2225, %v2202
        %v2227 = vadd.f32 %v2226, %v2203
        %v2228 = vadd.f32 %v2227, %v2204
        %v2229 = vadd.f32 %v2228, %v2205
        %v2230 = vadd.f32 %v2229, %v2206
        %v2231 = vadd.f32 %v2230, %v2207
        %v2232 = vadd.f32 %v2231, %v2208
        %v2233 = vadd.f32 %v2232, %v2209
        %v2234 = vadd.f32 %v2233, %v2210
        %v2235 = vadd.f32 %v2234, %v2211
        %v2236 = vadd.f32 %v2235, %v2212
        %v2237 = vadd.f32 %v2236, %v2213
        %v2238 = vrot.slane %v2237, 4
        %v2239 = vadd.f32 %v2237, %v2238
        %v2240 = vrot.slane %v2239, 2
        %v2241 = vadd.f32 %v2239, %v2240
        %v2242 = vrot.slane %v2241, 1
        %v2243 = vadd.f32 %v2241, %v2242
        %2244 = vst [vmem:[%s348] sm:$0x1] %v2243
        %v2245 = vpack.c.bf16 %v2134, %v2133
        %v2246 = vpack.c.bf16 %v2136, %v2135
        %v2247 = vpack.c.bf16 %v2138, %v2137
        %v2248 = vpack.c.bf16 %v2140, %v2139
        %v2249 = vpack.c.bf16 %v2142, %v2141
        %v2250 = vpack.c.bf16 %v2144, %v2143
        %v2251 = vpack.c.bf16 %v2146, %v2145
        %v2252 = vpack.c.bf16 %v2148, %v2147
        %v2253 = vpack.c.bf16 %v2150, %v2149
        %v2254 = vpack.c.bf16 %v2152, %v2151
        %v2255 = vpack.c.bf16 %v2154, %v2153
        %v2256 = vpack.c.bf16 %v2156, %v2155
        %v2257 = vpack.c.bf16 %v2157, %v2157
        %v2271 = vunpack.c.l.b16 %v2245
        %v2272 = vunpack.c.h.b16 %v2245
        %v2273 = vunpack.c.l.b16 %v2246
        %v2274 = vunpack.c.h.b16 %v2246
        %v2275 = vunpack.c.l.b16 %v2247
        %v2276 = vunpack.c.h.b16 %v2247
        %v2277 = vunpack.c.l.b16 %v2248
        %v2278 = vunpack.c.h.b16 %v2248
        %v2279 = vunpack.c.l.b16 %v2249
        %v2280 = vunpack.c.h.b16 %v2249
        %v2281 = vunpack.c.l.b16 %v2250
        %v2282 = vunpack.c.h.b16 %v2250
        %v2283 = vunpack.c.l.b16 %v2251
        %v2284 = vunpack.c.h.b16 %v2251
        %v2285 = vunpack.c.l.b16 %v2252
        %v2286 = vunpack.c.h.b16 %v2252
        %v2287 = vunpack.c.l.b16 %v2253
        %v2288 = vunpack.c.h.b16 %v2253
        %v2289 = vunpack.c.l.b16 %v2254
        %v2290 = vunpack.c.h.b16 %v2254
        %v2291 = vunpack.c.l.b16 %v2255
        %v2292 = vunpack.c.h.b16 %v2255
        %v2293 = vunpack.c.l.b16 %v2256
        %v2294 = vunpack.c.h.b16 %v2256
        %v2295 = vunpack.c.l.b16 %v2257
        %v2296 = vpack.c.b16 %v2271, %v2271
        %v2297 = vpack.c.b16 %v2272, %v2272
        %v2298 = vpack.c.b16 %v2273, %v2273
        %v2299 = vpack.c.b16 %v2274, %v2274
        %v2300 = vpack.c.b16 %v2275, %v2275
        %v2301 = vpack.c.b16 %v2276, %v2276
        %v2302 = vpack.c.b16 %v2277, %v2277
        %v2303 = vpack.c.b16 %v2278, %v2278
        %v2304 = vpack.c.b16 %v2279, %v2279
        %v2305 = vpack.c.b16 %v2280, %v2280
        %v2306 = vpack.c.b16 %v2281, %v2281
        %v2307 = vpack.c.b16 %v2282, %v2282
        %v2308 = vpack.c.b16 %v2283, %v2283
        %v2309 = vpack.c.b16 %v2284, %v2284
        %v2310 = vpack.c.b16 %v2285, %v2285
        %v2311 = vpack.c.b16 %v2286, %v2286
        %v2312 = vpack.c.b16 %v2287, %v2287
        %v2313 = vpack.c.b16 %v2288, %v2288
        %v2314 = vpack.c.b16 %v2289, %v2289
        %v2315 = vpack.c.b16 %v2290, %v2290
        %v2316 = vpack.c.b16 %v2291, %v2291
        %v2317 = vpack.c.b16 %v2292, %v2292
        %v2318 = vpack.c.b16 %v2293, %v2293
        %v2319 = vpack.c.b16 %v2294, %v2294
        %v2320 = vpack.c.b16 %v2295, %v2295
        %2346 = vst [vmem:[%s342] sm:$0xf] %v2296
        %2347 = vst [vmem:[%s342 + $0x4] sm:$0xf] %v2297
        %2348 = vst [vmem:[%s342 + $0x8] sm:$0xf] %v2298
        %2349 = vst [vmem:[%s342 + $0xc] sm:$0xf] %v2299
        %2350 = vst [vmem:[%s342 + $0x10] sm:$0xf] %v2300
        %2351 = vst [vmem:[%s342 + $0x14] sm:$0xf] %v2301
        %2352 = vst [vmem:[%s342 + $0x18] sm:$0xf] %v2302
        %2353 = vst [vmem:[%s342 + $0x1c] sm:$0xf] %v2303
        %2354 = vst [vmem:[%s342 + $0x20] sm:$0xf] %v2304
        %2355 = vst [vmem:[%s342 + $0x24] sm:$0xf] %v2305
        %2356 = vst [vmem:[%s342 + $0x28] sm:$0xf] %v2306
        %2357 = vst [vmem:[%s342 + $0x2c] sm:$0xf] %v2307
        %2358 = vst [vmem:[%s342 + $0x30] sm:$0xf] %v2308
        %2359 = vst [vmem:[%s342 + $0x34] sm:$0xf] %v2309
        %2360 = vst [vmem:[%s342 + $0x38] sm:$0xf] %v2310
        %2361 = vst [vmem:[%s342 + $0x3c] sm:$0xf] %v2311
        %2362 = vst [vmem:[%s342 + $0x40] sm:$0xf] %v2312
        %2363 = vst [vmem:[%s342 + $0x44] sm:$0xf] %v2313
        %2364 = vst [vmem:[%s342 + $0x48] sm:$0xf] %v2314
        %2365 = vst [vmem:[%s342 + $0x4c] sm:$0xf] %v2315
        %2366 = vst [vmem:[%s342 + $0x50] sm:$0xf] %v2316
        %2367 = vst [vmem:[%s342 + $0x54] sm:$0xf] %v2317
        %2368 = vst [vmem:[%s342 + $0x58] sm:$0xf] %v2318
        %2369 = vst [vmem:[%s342 + $0x5c] sm:$0xf] %v2319
        %2370 = vst [vmem:[%s342 + $0x60] sm:$0xf] %v2320
        %2371 = vst [vmem:[%s342 + $0x64] sm:$0xf] 0
        %p2372 = scmp.lt.s32.totalorder %s22, 3
        %s2373 = scalar_select %p2372, %s22, 3
        %s2374 = smul.addr %s2373, 26
        %s2375 = smul.addr %s2374, 4
        %s2376 = scalar_lea.vmem %s5, %s2375
        %p2377 = scmp.lt.s32.totalorder %s22, 3
        %s2378 = scalar_select %p2377, %s22, 3
        %s2379 = scalar_lea.vmem %s6, %s2378
        %p2380 = scmp.lt.s32.totalorder %s22, 3
        %s2381 = scalar_select %p2380, %s22, 3
        %s2382 = scalar_lea.vmem %s7, %s2381
        // Predicated region
        $region57: #{discriminator_forward.2} parent=39 // pred_check
          %p2383 = pneg %p150
        $region58: #{discriminator_forward.2} parent=39 // pred_check_branch
          %2385 = sbr.rel (%p2383) target = $region60
        $region59: #{discriminator_forward.2} parent=39 // pred_region
          _
        $region60: #{discriminator_forward.2} parent=39 // pred_fallthru
          _
        // Predicated region
        $region61: #{discriminator_forward.2} parent=39 // pred_check
          %p2386 = pneg %p176
        $region62: #{discriminator_forward.2} parent=39 // pred_check_branch
          %2388 = sbr.rel (%p2386) target = $region64
        $region63: #{discriminator_forward.2} parent=39 // pred_region
          _
        $region64: #{discriminator_forward.2} parent=39 // pred_fallthru
          _
        // Predicated region
        $region65: #{discriminator_forward.2} parent=39 // pred_check
          %p2389 = pneg %p202
        $region66: #{discriminator_forward.2} parent=39 // pred_check_branch
          %2391 = sbr.rel (%p2389) target = $region68
        $region67: #{discriminator_forward.2} parent=39 // pred_region
          _
        $region68: #{discriminator_forward.2} parent=39 // pred_fallthru
          _
      $region40: #{discriminator_forward.2} parent=5 // pred_fallthru
        _
      %p2392 = scmp.le.s32.totalorder 2, %s17
      // Predicated region
      $region69: #{discriminator_forward.2} parent=5 // pred_check
        %p2393 = pneg %p2392
      $region70: #{discriminator_forward.2} parent=5 // pred_check_branch
        %2395 = sbr.rel (%p2393) target = $region72
      $region71: #{discriminator_forward.2} parent=5 // pred_region
        %s2396 = ssub.s32 %s17, 2
        // Predicated region
        $region73: #{discriminator_forward.2} parent=71 // pred_check
          %p2397 = pneg %p156
        $region74: #{discriminator_forward.2} parent=71 // pred_check_branch
          %2399 = sbr.rel (%p2397) target = $region76
        $region75: #{discriminator_forward.2} parent=71 // pred_region
          %p2400 = scmp.lt.s32.totalorder %s23, 3
          %s2401 = scalar_select %p2400, %s23, 3
          %s2402 = smul.addr %s2401, 26
          %s2403 = smul.addr %s2402, 4
          %s2404 = scalar_lea.vmem %s5, %s2403
        $region76: #{discriminator_forward.2} parent=71 // pred_fallthru
          _
        // Predicated region
        $region77: #{discriminator_forward.2} parent=71 // pred_check
          %p2405 = pneg %p182
        $region78: #{discriminator_forward.2} parent=71 // pred_check_branch
          %2407 = sbr.rel (%p2405) target = $region80
        $region79: #{discriminator_forward.2} parent=71 // pred_region
          %p2408 = scmp.lt.s32.totalorder %s23, 3
          %s2409 = scalar_select %p2408, %s23, 3
          %s2410 = scalar_lea.vmem %s6, %s2409
        $region80: #{discriminator_forward.2} parent=71 // pred_fallthru
          _
        // Predicated region
        $region81: #{discriminator_forward.2} parent=71 // pred_check
          %p2411 = pneg %p208
        $region82: #{discriminator_forward.2} parent=71 // pred_check_branch
          %2413 = sbr.rel (%p2411) target = $region84
        $region83: #{discriminator_forward.2} parent=71 // pred_region
          %p2414 = scmp.lt.s32.totalorder %s23, 3
          %s2415 = scalar_select %p2414, %s23, 3
          %s2416 = scalar_lea.vmem %s7, %s2415
        $region84: #{discriminator_forward.2} parent=71 // pred_fallthru
          _
      $region72: #{discriminator_forward.2} parent=5 // pred_fallthru
        _
    $region6: #{discriminator_forward.2} parent=1 // loop_footer
      %s21 = sadd.s32 1, %s17
    $region7: #{discriminator_forward.2} parent=1 // loop_footer_branch
      %16 = sbr.rel target = $region3
    $region8: #{discriminator_forward.2} parent=1 // loop_exit
      _
    %2417 = vsyncpa [#allocation4], 1
    %s2418 = scalar_lea.sflag [#allocation4], 1
    %2419 = vsyncpa %s2418, 1
    %2420 = vsyncpa [#allocation6], 1
    %2421 = vsyncpa [#allocation9], 1

// kernel: discriminator_forward.3
$region0: #{discriminator_forward.3}
  #allocation0 [shape = 'u32[]', space=smem, size = 0x4, offset = 0x4, fixed_abs, tag = 'smem constant byte address 0x4 - core index']
  #allocation1 [shape = 'u32[144,128]{1,0:T(1,128)}', space=vmem, size = 0x12000, scoped, tag = 'internal scratch']
  #allocation2 [shape = 'f32[4,128]{1,0:T(4,128)}', space=vmem, size = 0x800, scoped, tag = 'scratch operand']
  #allocation3 [shape = 'f32[1,1]{1,0:T(1,128)S(1)}', space=vmem, size = 0x200, scoped, tag = 'scoped memory for discriminator_forward.3']
  %s0 = inlined_call_operand.vmem [shape: bf16[4,208,128], index: 0, kind: input, shape index: {}]
  %s1 = inlined_call_operand.vmem [shape: f32[1,128], index: 1, kind: input, shape index: {}]
  %s2 = inlined_call_operand.vmem [shape: f32[1,128], index: 2, kind: input, shape index: {}]
  %s3 = inlined_call_operand.hbm [shape: bf16[208,128,128], index: 3, kind: input, shape index: {}]
  %s4 = inlined_call_operand.hbm [shape: f32[1,128], index: 4, kind: input, shape index: {}]
  %s5 = inlined_call_operand.hbm [shape: f32[1,128], index: 5, kind: input, shape index: {}]
  %s6 = inlined_call_operand.hbm [shape: f32[1,128], index: 6, kind: input, shape index: {}]
  %s7 = inlined_call_operand.hbm [shape: f32[1,128], index: 7, kind: input, shape index: {}]
  %s8 = inlined_call_operand.<no memory space> [shape: f32[1,1], index: 8, kind: input, shape index: {}]
  %s9 = inlined_call_operand.vmem [shape: f32[4,1], index: 9, kind: output, shape index: {}]
  %s10 = sld [smem:[#allocation0]]
  $region138: #{discriminator_forward.3} parent=0
    _
  %s12 = ssub.s32 1, %s10
  %s13 = scalar_select 0, %s12, %s10
  %v14 = vstv %s8
  %15 = vst [vmem:[#allocation3] sm:$0x1] %v14
  $region1: #{discriminator_forward.3} parent=0
    #allocation4 [shape = 'u8[32768]{0}', space=vmem, size = 0x8000, scoped, tag = 'input window, operand 0']
    #allocation5 [shape = 'u8[1048576]{0}', space=vmem, size = 0x100000, scoped, tag = 'input window, operand 3']
    #allocation6 [shape = 's32[2]{0}', space=sflag, size = 0x8, scoped, tag = 'scoped memory for discriminator_forward.3']
    #allocation7 [shape = 'u8[512]{0}', space=vmem, size = 0x400, scoped, tag = 'input window, operand 4, single buffered']
    #allocation8 [shape = 's32[1]{0}', space=sflag, size = 0x4, scoped, tag = 'scoped memory for discriminator_forward.3']
    #allocation9 [shape = 'u8[512]{0}', space=vmem, size = 0x400, scoped, tag = 'input window, operand 5, single buffered']
    #allocation10 [shape = 'u8[512]{0}', space=vmem, size = 0x400, scoped, tag = 'input window, operand 6, single buffered']
    #allocation11 [shape = 's32[1]{0}', space=sflag, size = 0x4, scoped, tag = 'scoped memory for discriminator_forward.3']
    #allocation12 [shape = 'u8[512]{0}', space=vmem, size = 0x400, scoped, tag = 'input window, operand 7, single buffered']
    %16 = vsyncpa [#allocation6], 0
    %s17 = scalar_lea.sflag [#allocation6], 1
    %18 = vsyncpa %s17, 0
    %19 = vsyncpa [#allocation8], 0
    %20 = vsyncpa [#allocation11], 0
    loop: start=0, step=1, limit=15
    $region2: #{discriminator_forward.3} parent=1 // loop_pre_header
      _
    $region3: #{discriminator_forward.3} parent=1 // loop_header
      %s22 = sphi 0, %s26
      %p23 = scmp.ge.s32.totalorder %s22, 15
      %s32 = sphi 0, %s34
      %s35 = sphi 0, %s32
      %s36 = sphi 0, %s35
      %s52 = sphi 0, %s36
      %s56 = sphi 0, %s56
      %s58 = sphi 0, %s56
      %s59 = sphi 0, %s58
      %s73 = sphi 0, %s59
      %s77 = sphi 0, %s77
      %s79 = sphi 0, %s77
      %s80 = sphi 0, %s79
      %s94 = sphi 0, %s80
      %s100 = sphi 0, %s102
      %s103 = sphi 0, %s100
      %s104 = sphi 0, %s103
      %s120 = sphi 0, %s104
      %s124 = sphi 0, %s124
      %s126 = sphi 0, %s124
      %s127 = sphi 0, %s126
      %s141 = sphi 0, %s127
      %s145 = sphi 0, %s145
      %s147 = sphi 0, %s145
      %s148 = sphi 0, %s147
      %s162 = sphi 0, %s148
      %s166 = sphi 0, %s166
      %s168 = sphi 0, %s166
      %s169 = sphi 0, %s168
      %s183 = sphi 0, %s169
      %s187 = sphi 0, %s187
      %s189 = sphi 0, %s187
      %s190 = sphi 0, %s189
      %s204 = sphi 0, %s190
      %s208 = sphi 0, %s208
      %s210 = sphi 0, %s208
      %s211 = sphi 0, %s210
      %s225 = sphi 0, %s211
      %s229 = sphi 0, %s229
      %s231 = sphi 0, %s229
      %s232 = sphi 0, %s231
      %s246 = sphi 0, %s232
    $region4: #{discriminator_forward.3} parent=1 // loop_header_branch
      %25 = sbr.rel (%p23) target = $region8
    $region5: #{discriminator_forward.3} parent=1 // loop_body
      %s27 = ssub.s32 %s22, 1
      %s28 = ssub.s32 %s22, 2
      %s29 = sadd.s32 %s22, 1
      %s30 = ssub.s32 %s22, %s29
      %p31 = scmp.eq.s32.totalorder %s30, 0
      %s33 = sadd.s32 %s32, 1
      %s34 = scalar_select %p31, %s32, %s33
      %p37 = pneg %p31
      %p38 = scmp.eq.s32.totalorder %s22, 12
      %p39 = por %p37, %p38
      %p40 = scmp.ne.s32.totalorder %s32, %s35
      %p41 = scmp.eq.s32.totalorder %s22, 0
      %p42 = por %p40, %p41
      %p43 = scmp.ne.s32.totalorder %s32, %s35
      %p44 = scmp.eq.s32.totalorder %s27, 12
      %p45 = por %p43, %p44
      %p46 = scmp.ne.s32.totalorder %s35, %s36
      %p47 = scmp.eq.s32.totalorder %s27, 0
      %p48 = por %p46, %p47
      %p49 = scmp.ne.s32.totalorder %s35, %s36
      %p50 = scmp.eq.s32.totalorder %s28, 12
      %p51 = por %p49, %p50
      %p53 = scmp.ne.s32.totalorder %s36, %s52
      %p54 = scmp.eq.s32.totalorder %s28, 0
      %p55 = por %p53, %p54
      %s57 = sadd.s32 %s56, 1
      %p60 = scmp.eq.s32.totalorder %s22, 12
      %p61 = scmp.ne.s32.totalorder %s56, %s58
      %p62 = scmp.eq.s32.totalorder %s22, 0
      %p63 = por %p61, %p62
      %p64 = scmp.ne.s32.totalorder %s56, %s58
      %p65 = scmp.eq.s32.totalorder %s27, 12
      %p66 = por %p64, %p65
      %p67 = scmp.ne.s32.totalorder %s58, %s59
      %p68 = scmp.eq.s32.totalorder %s27, 0
      %p69 = por %p67, %p68
      %p70 = scmp.ne.s32.totalorder %s58, %s59
      %p71 = scmp.eq.s32.totalorder %s28, 12
      %p72 = por %p70, %p71
      %p74 = scmp.ne.s32.totalorder %s59, %s73
      %p75 = scmp.eq.s32.totalorder %s28, 0
      %p76 = por %p74, %p75
      %s78 = sadd.s32 %s77, 1
      %p81 = scmp.eq.s32.totalorder %s22, 12
      %p82 = scmp.ne.s32.totalorder %s77, %s79
      %p83 = scmp.eq.s32.totalorder %s22, 0
      %p84 = por %p82, %p83
      %p85 = scmp.ne.s32.totalorder %s77, %s79
      %p86 = scmp.eq.s32.totalorder %s27, 12
      %p87 = por %p85, %p86
      %p88 = scmp.ne.s32.totalorder %s79, %s80
      %p89 = scmp.eq.s32.totalorder %s27, 0
      %p90 = por %p88, %p89
      %p91 = scmp.ne.s32.totalorder %s79, %s80
      %p92 = scmp.eq.s32.totalorder %s28, 12
      %p93 = por %p91, %p92
      %p95 = scmp.ne.s32.totalorder %s80, %s94
      %p96 = scmp.eq.s32.totalorder %s28, 0
      %p97 = por %p95, %p96
      %s98 = ssub.s32 %s22, %s29
      %p99 = scmp.eq.s32.totalorder %s98, 0
      %s101 = sadd.s32 %s100, 1
      %s102 = scalar_select %p99, %s100, %s101
      %p105 = pneg %p99
      %p106 = scmp.eq.s32.totalorder %s22, 12
      %p107 = por %p105, %p106
      %p108 = scmp.ne.s32.totalorder %s100, %s103
      %p109 = scmp.eq.s32.totalorder %s22, 0
      %p110 = por %p108, %p109
      %p111 = scmp.ne.s32.totalorder %s100, %s103
      %p112 = scmp.eq.s32.totalorder %s27, 12
      %p113 = por %p111, %p112
      %p114 = scmp.ne.s32.totalorder %s103, %s104
      %p115 = scmp.eq.s32.totalorder %s27, 0
      %p116 = por %p114, %p115
      %p117 = scmp.ne.s32.totalorder %s103, %s104
      %p118 = scmp.eq.s32.totalorder %s28, 12
      %p119 = por %p117, %p118
      %p121 = scmp.ne.s32.totalorder %s104, %s120
      %p122 = scmp.eq.s32.totalorder %s28, 0
      %p123 = por %p121, %p122
      %s125 = sadd.s32 %s124, 1
      %p128 = scmp.eq.s32.totalorder %s22, 12
      %p129 = scmp.ne.s32.totalorder %s124, %s126
      %p130 = scmp.eq.s32.totalorder %s22, 0
      %p131 = por %p129, %p130
      %p132 = scmp.ne.s32.totalorder %s124, %s126
      %p133 = scmp.eq.s32.totalorder %s27, 12
      %p134 = por %p132, %p133
      %p135 = scmp.ne.s32.totalorder %s126, %s127
      %p136 = scmp.eq.s32.totalorder %s27, 0
      %p137 = por %p135, %p136
      %p138 = scmp.ne.s32.totalorder %s126, %s127
      %p139 = scmp.eq.s32.totalorder %s28, 12
      %p140 = por %p138, %p139
      %p142 = scmp.ne.s32.totalorder %s127, %s141
      %p143 = scmp.eq.s32.totalorder %s28, 0
      %p144 = por %p142, %p143
      %s146 = sadd.s32 %s145, 1
      %p149 = scmp.eq.s32.totalorder %s22, 12
      %p150 = scmp.ne.s32.totalorder %s145, %s147
      %p151 = scmp.eq.s32.totalorder %s22, 0
      %p152 = por %p150, %p151
      %p153 = scmp.ne.s32.totalorder %s145, %s147
      %p154 = scmp.eq.s32.totalorder %s27, 12
      %p155 = por %p153, %p154
      %p156 = scmp.ne.s32.totalorder %s147, %s148
      %p157 = scmp.eq.s32.totalorder %s27, 0
      %p158 = por %p156, %p157
      %p159 = scmp.ne.s32.totalorder %s147, %s148
      %p160 = scmp.eq.s32.totalorder %s28, 12
      %p161 = por %p159, %p160
      %p163 = scmp.ne.s32.totalorder %s148, %s162
      %p164 = scmp.eq.s32.totalorder %s28, 0
      %p165 = por %p163, %p164
      %s167 = sadd.s32 %s166, 1
      %p170 = scmp.eq.s32.totalorder %s22, 12
      %p171 = scmp.ne.s32.totalorder %s166, %s168
      %p172 = scmp.eq.s32.totalorder %s22, 0
      %p173 = por %p171, %p172
      %p174 = scmp.ne.s32.totalorder %s166, %s168
      %p175 = scmp.eq.s32.totalorder %s27, 12
      %p176 = por %p174, %p175
      %p177 = scmp.ne.s32.totalorder %s168, %s169
      %p178 = scmp.eq.s32.totalorder %s27, 0
      %p179 = por %p177, %p178
      %p180 = scmp.ne.s32.totalorder %s168, %s169
      %p181 = scmp.eq.s32.totalorder %s28, 12
      %p182 = por %p180, %p181
      %p184 = scmp.ne.s32.totalorder %s169, %s183
      %p185 = scmp.eq.s32.totalorder %s28, 0
      %p186 = por %p184, %p185
      %s188 = sadd.s32 %s187, 1
      %p191 = scmp.eq.s32.totalorder %s22, 12
      %p192 = scmp.ne.s32.totalorder %s187, %s189
      %p193 = scmp.eq.s32.totalorder %s22, 0
      %p194 = por %p192, %p193
      %p195 = scmp.ne.s32.totalorder %s187, %s189
      %p196 = scmp.eq.s32.totalorder %s27, 12
      %p197 = por %p195, %p196
      %p198 = scmp.ne.s32.totalorder %s189, %s190
      %p199 = scmp.eq.s32.totalorder %s27, 0
      %p200 = por %p198, %p199
      %p201 = scmp.ne.s32.totalorder %s189, %s190
      %p202 = scmp.eq.s32.totalorder %s28, 12
      %p203 = por %p201, %p202
      %p205 = scmp.ne.s32.totalorder %s190, %s204
      %p206 = scmp.eq.s32.totalorder %s28, 0
      %p207 = por %p205, %p206
      %s209 = sadd.s32 %s208, 1
      %p212 = scmp.eq.s32.totalorder %s22, 12
      %p213 = scmp.ne.s32.totalorder %s208, %s210
      %p214 = scmp.eq.s32.totalorder %s22, 0
      %p215 = por %p213, %p214
      %p216 = scmp.ne.s32.totalorder %s208, %s210
      %p217 = scmp.eq.s32.totalorder %s27, 12
      %p218 = por %p216, %p217
      %p219 = scmp.ne.s32.totalorder %s210, %s211
      %p220 = scmp.eq.s32.totalorder %s27, 0
      %p221 = por %p219, %p220
      %p222 = scmp.ne.s32.totalorder %s210, %s211
      %p223 = scmp.eq.s32.totalorder %s28, 12
      %p224 = por %p222, %p223
      %p226 = scmp.ne.s32.totalorder %s211, %s225
      %p227 = scmp.eq.s32.totalorder %s28, 0
      %p228 = por %p226, %p227
      %s230 = sadd.s32 %s229, 1
      %p233 = scmp.eq.s32.totalorder %s22, 12
      %p234 = scmp.ne.s32.totalorder %s229, %s231
      %p235 = scmp.eq.s32.totalorder %s22, 0
      %p236 = por %p234, %p235
      %p237 = scmp.ne.s32.totalorder %s229, %s231
      %p238 = scmp.eq.s32.totalorder %s27, 12
      %p239 = por %p237, %p238
      %p240 = scmp.ne.s32.totalorder %s231, %s232
      %p241 = scmp.eq.s32.totalorder %s27, 0
      %p242 = por %p240, %p241
      %p243 = scmp.ne.s32.totalorder %s231, %s232
      %p244 = scmp.eq.s32.totalorder %s28, 12
      %p245 = por %p243, %p244
      %p247 = scmp.ne.s32.totalorder %s232, %s246
      %p248 = scmp.eq.s32.totalorder %s28, 0
      %p249 = por %p247, %p248
      %p250 = scmp.le.s32.totalorder 1, %s22
      %p251 = scmp.lt.s32.totalorder %s22, 14
      %p252 = pnand %p250, %p251
      %p253 = pneg %p252
      // Predicated region
      $region9: #{discriminator_forward.3} parent=5 // pred_check
        _
      $region10: #{discriminator_forward.3} parent=5 // pred_check_branch
        %255 = sbr.rel (%p252) target = $region12
      $region11: #{discriminator_forward.3} parent=5 // pred_region
        %s256 = ssub.s32 %s22, 1
        // Predicated region
        $region13: #{discriminator_forward.3} parent=11 // pred_check
          %p257 = pneg %p69
        $region14: #{discriminator_forward.3} parent=11 // pred_check_branch
          %259 = sbr.rel (%p257) target = $region16
        $region15: #{discriminator_forward.3} parent=11 // pred_region
          _
        $region16: #{discriminator_forward.3} parent=11 // pred_fallthru
          _
        // Predicated region
        $region17: #{discriminator_forward.3} parent=11 // pred_check
          %p260 = pneg %p90
        $region18: #{discriminator_forward.3} parent=11 // pred_check_branch
          %262 = sbr.rel (%p260) target = $region20
        $region19: #{discriminator_forward.3} parent=11 // pred_region
          _
        $region20: #{discriminator_forward.3} parent=11 // pred_fallthru
          _
        // Predicated region
        $region21: #{discriminator_forward.3} parent=11 // pred_check
          %p263 = pneg %p137
        $region22: #{discriminator_forward.3} parent=11 // pred_check_branch
          %265 = sbr.rel (%p263) target = $region24
        $region23: #{discriminator_forward.3} parent=11 // pred_region
          %s267 = ssub.s32 16, 16
          %268 = vsyncadd [#allocation8], %s267
          %s270 = sshll.u32 [#allocation7], 4
          %s271 = int_to_ptr.vmem [resolvable:$true] %s270
          %273 = dma.hbm_to_vmem [thread:$0]  %s4, 16, %s271, [#allocation8]
        $region24: #{discriminator_forward.3} parent=11 // pred_fallthru
          _
        // Predicated region
        $region25: #{discriminator_forward.3} parent=11 // pred_check
          %p274 = pneg %p158
        $region26: #{discriminator_forward.3} parent=11 // pred_check_branch
          %276 = sbr.rel (%p274) target = $region28
        $region27: #{discriminator_forward.3} parent=11 // pred_region
          %s278 = ssub.s32 16, 16
          %279 = vsyncadd [#allocation8], %s278
          %s281 = sshll.u32 [#allocation9], 4
          %s282 = int_to_ptr.vmem [resolvable:$true] %s281
          %284 = dma.hbm_to_vmem [thread:$0]  %s5, 16, %s282, [#allocation8]
        $region28: #{discriminator_forward.3} parent=11 // pred_fallthru
          _
        // Predicated region
        $region29: #{discriminator_forward.3} parent=11 // pred_check
          %p285 = pneg %p179
        $region30: #{discriminator_forward.3} parent=11 // pred_check_branch
          %287 = sbr.rel (%p285) target = $region32
        $region31: #{discriminator_forward.3} parent=11 // pred_region
          %s289 = ssub.s32 16, 16
          %290 = vsyncadd [#allocation11], %s289
          %s292 = sshll.u32 [#allocation10], 4
          %s293 = int_to_ptr.vmem [resolvable:$true] %s292
          %295 = dma.hbm_to_vmem [thread:$0]  %s6, 16, %s293, [#allocation11]
        $region32: #{discriminator_forward.3} parent=11 // pred_fallthru
          _
        // Predicated region
        $region33: #{discriminator_forward.3} parent=11 // pred_check
          %p296 = pneg %p200
        $region34: #{discriminator_forward.3} parent=11 // pred_check_branch
          %298 = sbr.rel (%p296) target = $region36
        $region35: #{discriminator_forward.3} parent=11 // pred_region
          %s300 = ssub.s32 16, 16
          %301 = vsyncadd [#allocation11], %s300
          %s303 = sshll.u32 [#allocation12], 4
          %s304 = int_to_ptr.vmem [resolvable:$true] %s303
          %306 = dma.hbm_to_vmem [thread:$0]  %s7, 16, %s304, [#allocation11]
        $region36: #{discriminator_forward.3} parent=11 // pred_fallthru
          _
        // Predicated region
        $region37: #{discriminator_forward.3} parent=11 // pred_check
          %p307 = pneg %p221
        $region38: #{discriminator_forward.3} parent=11 // pred_check_branch
          %309 = sbr.rel (%p307) target = $region40
        $region39: #{discriminator_forward.3} parent=11 // pred_region
          _
        $region40: #{discriminator_forward.3} parent=11 // pred_fallthru
          _
      $region12: #{discriminator_forward.3} parent=5 // pred_fallthru
        _
      %p310 = scmp.lt.s32.totalorder %s22, 13
      // Predicated region
      $region41: #{discriminator_forward.3} parent=5 // pred_check
        %p311 = pneg %p310
      $region42: #{discriminator_forward.3} parent=5 // pred_check_branch
        %313 = sbr.rel (%p311) target = $region44
      $region43: #{discriminator_forward.3} parent=5 // pred_region
        // Predicated region
        $region45: #{discriminator_forward.3} parent=43 // pred_check
          %p314 = pneg %p42
        $region46: #{discriminator_forward.3} parent=43 // pred_check_branch
          %316 = sbr.rel (%p314) target = $region48
        $region47: #{discriminator_forward.3} parent=43 // pred_region
          %s317 = sand.u32 %s32, 1
          %s318 = sand.u32 %s32, 1
          %s319 = smul.addr %s318, 32
          %s320 = scalar_lea.vmem [#allocation4], %s319
          %s321 = smul.u32 2, %s22
          %s322 = smul.addr %s321, 4
          %s323 = scalar_lea.vmem %s0, %s322
          // Predicated region
          $region49: #{discriminator_forward.3} parent=47 // pred_check
            _
          $region50: #{discriminator_forward.3} parent=47 // pred_check_branch
            %325 = sbr.rel (0) target = $region52
          $region51: #{discriminator_forward.3} parent=47 // pred_region
            // Predicated region
            $region53: #{discriminator_forward.3} parent=51 // pred_check
              _
            $region54: #{discriminator_forward.3} parent=51 // pred_check_branch
              %327 = sbr.rel target = $region56
            $region55: #{discriminator_forward.3} parent=51 // pred_region
              // Predicated region
              $region68: #{discriminator_forward.3} parent=55 // pred_check
                _
              $region69: #{discriminator_forward.3} parent=55 // pred_check_branch
                %356 = sbr.rel (0) target = $region71
              $region70: #{discriminator_forward.3} parent=55 // pred_region
                loop: start=0, step=1, limit=1
                $region72: #{discriminator_forward.3} parent=70 // loop_pre_header
                  _
                $region73: #{discriminator_forward.3} parent=70 // loop_header
                  %s358 = sphi 0, %s362
                  %p359 = scmp.ge.s32.totalorder %s358, 1
                  %s363 = sphi %s323, %s323
                  %s364 = sphi %s320, %s320
                $region74: #{discriminator_forward.3} parent=70 // loop_header_branch
                  %361 = sbr.rel (%p359) target = $region78
                $region75: #{discriminator_forward.3} parent=70 // loop_body
                  _
                $region76: #{discriminator_forward.3} parent=70 // loop_footer
                  %s362 = sadd.s32 1, %s358
                $region77: #{discriminator_forward.3} parent=70 // loop_footer_branch
                  %357 = sbr.rel target = $region73
                $region78: #{discriminator_forward.3} parent=70 // loop_exit
                  _
                loop: start=0, step=1, limit=1
                $region79: #{discriminator_forward.3} parent=70 // loop_pre_header
                  _
                $region80: #{discriminator_forward.3} parent=70 // loop_header
                  %s367 = sphi 0, %s371
                  %p368 = scmp.ge.s32.totalorder %s367, 1
                  %s372 = sphi %s323, %s323
                  %s373 = sphi %s320, %s320
                $region81: #{discriminator_forward.3} parent=70 // loop_header_branch
                  %370 = sbr.rel (%p368) target = $region85
                $region82: #{discriminator_forward.3} parent=70 // loop_body
                  %v374 = vld [vmem:[%s372] sm:$0xf]
                  %375 = vst [vmem:[%s373] sm:$0xf] %v374
                  %v376 = vld [vmem:[%s372 + $0x4] sm:$0xf]
                  %377 = vst [vmem:[%s373 + $0x4] sm:$0xf] %v376
                  %v378 = vld [vmem:[%s372 + $0x68] sm:$0xf]
                  %379 = vst [vmem:[%s373 + $0x8] sm:$0xf] %v378
                  %v380 = vld [vmem:[%s372 + $0x6c] sm:$0xf]
                  %381 = vst [vmem:[%s373 + $0xc] sm:$0xf] %v380
                  %v382 = vld [vmem:[%s372 + $0xd0] sm:$0xf]
                  %383 = vst [vmem:[%s373 + $0x10] sm:$0xf] %v382
                  %v384 = vld [vmem:[%s372 + $0xd4] sm:$0xf]
                  %385 = vst [vmem:[%s373 + $0x14] sm:$0xf] %v384
                  %v386 = vld [vmem:[%s372 + $0x138] sm:$0xf]
                  %387 = vst [vmem:[%s373 + $0x18] sm:$0xf] %v386
                  %v388 = vld [vmem:[%s372 + $0x13c] sm:$0xf]
                  %389 = vst [vmem:[%s373 + $0x1c] sm:$0xf] %v388
                $region83: #{discriminator_forward.3} parent=70 // loop_footer
                  %s371 = sadd.s32 1, %s367
                $region84: #{discriminator_forward.3} parent=70 // loop_footer_branch
                  %366 = sbr.rel target = $region80
                $region85: #{discriminator_forward.3} parent=70 // loop_exit
                  _
              $region71: #{discriminator_forward.3} parent=55 // pred_fallthru
                _
            $region56: #{discriminator_forward.3} parent=51 // pred_fallthru
              _
            // Predicated region
            $region57: #{discriminator_forward.3} parent=51 // pred_check
              _
            $region58: #{discriminator_forward.3} parent=51 // pred_check_branch
              %329 = sbr.rel (0) target = $region60
            $region59: #{discriminator_forward.3} parent=51 // pred_region
              loop: start=0, step=1, limit=1
              $region61: #{discriminator_forward.3} parent=59 // loop_pre_header
                _
              $region62: #{discriminator_forward.3} parent=59 // loop_header
                %s332 = sphi 0, %s336
                %p333 = scmp.ge.s32.totalorder %s332, 1
                %s337 = sphi %s323, %s323
                %s338 = sphi %s320, %s320
              $region63: #{discriminator_forward.3} parent=59 // loop_header_branch
                %335 = sbr.rel (%p333) target = $region67
              $region64: #{discriminator_forward.3} parent=59 // loop_body
                %v339 = vld [vmem:[%s337] sm:$0xf]
                %340 = vst [vmem:[%s338] sm:$0xf] %v339
                %v341 = vld [vmem:[%s337 + $0x4] sm:$0xf]
                %342 = vst [vmem:[%s338 + $0x4] sm:$0xf] %v341
                %v343 = vld [vmem:[%s337 + $0x68] sm:$0xf]
                %344 = vst [vmem:[%s338 + $0x8] sm:$0xf] %v343
                %v345 = vld [vmem:[%s337 + $0x6c] sm:$0xf]
                %346 = vst [vmem:[%s338 + $0xc] sm:$0xf] %v345
                %v347 = vld [vmem:[%s337 + $0xd0] sm:$0xf]
                %348 = vst [vmem:[%s338 + $0x10] sm:$0xf] %v347
                %v349 = vld [vmem:[%s337 + $0xd4] sm:$0xf]
                %350 = vst [vmem:[%s338 + $0x14] sm:$0xf] %v349
                %v351 = vld [vmem:[%s337 + $0x138] sm:$0xf]
                %352 = vst [vmem:[%s338 + $0x18] sm:$0xf] %v351
                %v353 = vld [vmem:[%s337 + $0x13c] sm:$0xf]
                %354 = vst [vmem:[%s338 + $0x1c] sm:$0xf] %v353
              $region65: #{discriminator_forward.3} parent=59 // loop_footer
                %s336 = sadd.s32 1, %s332
              $region66: #{discriminator_forward.3} parent=59 // loop_footer_branch
                %331 = sbr.rel target = $region62
              $region67: #{discriminator_forward.3} parent=59 // loop_exit
                _
            $region60: #{discriminator_forward.3} parent=51 // pred_fallthru
              _
          $region52: #{discriminator_forward.3} parent=47 // pred_fallthru
            _
          %390 = vnop
        $region48: #{discriminator_forward.3} parent=43 // pred_fallthru
          _
        // Predicated region
        $region86: #{discriminator_forward.3} parent=43 // pred_check
          %p391 = pneg %p110
        $region87: #{discriminator_forward.3} parent=43 // pred_check_branch
          %393 = sbr.rel (%p391) target = $region89
        $region88: #{discriminator_forward.3} parent=43 // pred_region
          %s394 = sand.u32 %s100, 1
          %s395 = scalar_lea.sflag [#allocation6], %s394
          %s396 = sand.u32 %s100, 1
          %s397 = smul.addr %s396, 1024
          %s398 = scalar_lea.vmem [#allocation5], %s397
          %s399 = smul.u32 16, %s22
          %s401 = ssub.s32 16384, 16384
          %402 = vsyncadd %s395, %s401
          %s403 = smul.addr %s399, 16
          %s404 = smul.addr %s403, 64
          %s405 = scalar_lea.hbm %s3, %s404
          %s406 = sshll.u32 %s398, 4
          %s407 = int_to_ptr.vmem [resolvable:$true] %s406
          %412 = dma.hbm_to_vmem [thread:$0]  %s405, 16384, %s407, %s395, 64, 64, 4
        $region89: #{discriminator_forward.3} parent=43 // pred_fallthru
          _
      $region44: #{discriminator_forward.3} parent=5 // pred_fallthru
        _
      %p413 = scmp.le.s32.totalorder 1, %s22
      %p414 = scmp.lt.s32.totalorder %s22, 14
      %p415 = pnand %p413, %p414
      %p416 = pneg %p415
      // Predicated region
      $region90: #{discriminator_forward.3} parent=5 // pred_check
        _
      $region91: #{discriminator_forward.3} parent=5 // pred_check_branch
        %418 = sbr.rel (%p415) target = $region93
      $region92: #{discriminator_forward.3} parent=5 // pred_region
        %s419 = ssub.s32 %s22, 1
        %s420 = sand.u32 %s35, 1
        %s421 = sand.u32 %s35, 1
        %s422 = smul.addr %s421, 32
        %s423 = scalar_lea.vmem [#allocation4], %s422
        // Predicated region
        $region94: #{discriminator_forward.3} parent=92 // pred_check
          %p424 = pneg %p48
        $region95: #{discriminator_forward.3} parent=92 // pred_check_branch
          %426 = sbr.rel (%p424) target = $region97
        $region96: #{discriminator_forward.3} parent=92 // pred_region
          _
        $region97: #{discriminator_forward.3} parent=92 // pred_fallthru
          _
        %s427 = sand.u32 %s103, 1
        %s428 = scalar_lea.sflag [#allocation6], %s427
        %s429 = sand.u32 %s103, 1
        %s430 = smul.addr %s429, 1024
        %s431 = scalar_lea.vmem [#allocation5], %s430
        // Predicated region
        $region98: #{discriminator_forward.3} parent=92 // pred_check
          %p432 = pneg %p116
        $region99: #{discriminator_forward.3} parent=92 // pred_check_branch
          %434 = sbr.rel (%p432) target = $region101
        $region100: #{discriminator_forward.3} parent=92 // pred_region
          %435 = dma.done %s428, 16384
        $region101: #{discriminator_forward.3} parent=92 // pred_fallthru
          _
        // Predicated region
        $region102: #{discriminator_forward.3} parent=92 // pred_check
          %p436 = pneg %p137
        $region103: #{discriminator_forward.3} parent=92 // pred_check_branch
          %438 = sbr.rel (%p436) target = $region105
        $region104: #{discriminator_forward.3} parent=92 // pred_region
          %439 = dma.done [#allocation8], 16
        $region105: #{discriminator_forward.3} parent=92 // pred_fallthru
          _
        // Predicated region
        $region106: #{discriminator_forward.3} parent=92 // pred_check
          %p440 = pneg %p158
        $region107: #{discriminator_forward.3} parent=92 // pred_check_branch
          %442 = sbr.rel (%p440) target = $region109
        $region108: #{discriminator_forward.3} parent=92 // pred_region
          %443 = dma.done [#allocation8], 16
        $region109: #{discriminator_forward.3} parent=92 // pred_fallthru
          _
        // Predicated region
        $region110: #{discriminator_forward.3} parent=92 // pred_check
          %p444 = pneg %p179
        $region111: #{discriminator_forward.3} parent=92 // pred_check_branch
          %446 = sbr.rel (%p444) target = $region113
        $region112: #{discriminator_forward.3} parent=92 // pred_region
          %447 = dma.done [#allocation11], 16
        $region113: #{discriminator_forward.3} parent=92 // pred_fallthru
          _
        // Predicated region
        $region114: #{discriminator_forward.3} parent=92 // pred_check
          %p448 = pneg %p200
        $region115: #{discriminator_forward.3} parent=92 // pred_check_branch
          %450 = sbr.rel (%p448) target = $region117
        $region116: #{discriminator_forward.3} parent=92 // pred_region
          %451 = dma.done [#allocation11], 16
        $region117: #{discriminator_forward.3} parent=92 // pred_fallthru
          _
        %s452 = sand.u32 %s35, 1
        %s453 = sand.u32 %s35, 1
        %s454 = smul.addr %s453, 32
        %s455 = scalar_lea.vmem [#allocation4], %s454
        %p456 = pneg %p48
        %p457 = pneg %p45
        %p458 = pneg %p69
        %p459 = pneg %p66
        %p460 = pneg %p90
        %p461 = pneg %p87
        %s462 = sand.u32 %s103, 1
        %s463 = scalar_lea.sflag [#allocation6], %s462
        %s464 = sand.u32 %s103, 1
        %s465 = smul.addr %s464, 1024
        %s466 = scalar_lea.vmem [#allocation5], %s465
        %p467 = pneg %p116
        %p468 = pneg %p113
        %p469 = pneg %p137
        %p470 = pneg %p134
        %p471 = pneg %p158
        %p472 = pneg %p155
        %p473 = pneg %p179
        %p474 = pneg %p176
        %p475 = pneg %p200
        %p476 = pneg %p197
        %p477 = pneg %p221
        %p478 = pneg %p218
        %p479 = pneg %p242
        %p480 = pneg %p239
        %s481 = smul.u32 2, %s27
        %s482 = smul.u32 16, %s27
        %p484 = scmp.eq.s32.totalorder %s27, 0
        // Predicated region
        $region118: #{discriminator_forward.3} parent=92 // pred_check
          %p485 = pneg %p484
        $region119: #{discriminator_forward.3} parent=92 // pred_check_branch
          %487 = sbr.rel (%p485) target = $region121
        $region120: #{discriminator_forward.3} parent=92 // pred_region
          %488 = vst [vmem:[#allocation2] sm:$0xf] 0.0
        $region121: #{discriminator_forward.3} parent=92 // pred_fallthru
          _
        %v489 = vld [vmem:[%s1] sm:$0x1]
        %v490 = vld [vmem:[%s2] sm:$0x1]
        %v491 = vld [vmem:[%s423] sm:$0xf]
        %v492 = vld [vmem:[%s423 + $0x4] sm:$0xf]
        %v493 = vld [vmem:[%s423 + $0x8] sm:$0xf]
        %v494 = vld [vmem:[%s423 + $0xc] sm:$0xf]
        %v495 = vld [vmem:[%s423 + $0x10] sm:$0xf]
        %v496 = vld [vmem:[%s423 + $0x14] sm:$0xf]
        %v497 = vld [vmem:[%s423 + $0x18] sm:$0xf]
        %v498 = vld [vmem:[%s423 + $0x1c] sm:$0xf]
        %v499 = vunpack.c.l.bf16 %v491
        %v500 = vunpack.c.l.bf16 %v493
        %v501 = vunpack.c.l.bf16 %v495
        %v502 = vunpack.c.l.bf16 %v497
        %v504 = vlaneseq
        %v505 = vshrl.u32 %v504, 7
        %v506 = vsub.s32 0, %v505
        %v507 = vrot.slane %v489, %v506
        %v509 = vmul.f32 %v499, %v507
        %v510 = vmul.f32 %v500, %v507
        %v511 = vmul.f32 %v501, %v507
        %v512 = vmul.f32 %v502, %v507
        %v514 = vlaneseq
        %v515 = vshrl.u32 %v514, 7
        %v516 = vsub.s32 0, %v515
        %v517 = vrot.slane %v490, %v516
        %v519 = vadd.f32 %v509, %v517
        %v520 = vadd.f32 %v510, %v517
        %v521 = vadd.f32 %v511, %v517
        %v522 = vadd.f32 %v512, %v517
        %v523 = vld [vmem:[#allocation2] sm:$0xf]
        %v524 = vpack.c.bf16 %v519, %v519
        %v525 = vpack.c.bf16 %v520, %v520
        %v526 = vpack.c.bf16 %v521, %v521
        %v527 = vpack.c.bf16 %v522, %v522
        %v528 = vld [vmem:[%s431] sm:$0xf]
        %v529 = vld [vmem:[%s431 + $0x4] sm:$0xf]
        %v530 = vld [vmem:[%s431 + $0x8] sm:$0xf]
        %v531 = vld [vmem:[%s431 + $0xc] sm:$0xf]
        %v532 = vld [vmem:[%s431 + $0x10] sm:$0xf]
        %v533 = vld [vmem:[%s431 + $0x14] sm:$0xf]
        %v534 = vld [vmem:[%s431 + $0x18] sm:$0xf]
        %v535 = vld [vmem:[%s431 + $0x1c] sm:$0xf]
        %v536 = vld [vmem:[%s431 + $0x20] sm:$0xf]
        %v537 = vld [vmem:[%s431 + $0x24] sm:$0xf]
        %v538 = vld [vmem:[%s431 + $0x28] sm:$0xf]
        %v539 = vld [vmem:[%s431 + $0x2c] sm:$0xf]
        %v540 = vld [vmem:[%s431 + $0x30] sm:$0xf]
        %v541 = vld [vmem:[%s431 + $0x34] sm:$0xf]
        %v542 = vld [vmem:[%s431 + $0x38] sm:$0xf]
        %v543 = vld [vmem:[%s431 + $0x3c] sm:$0xf]
        %v548 = vunpack.c.l.b16 %v524
        %v549 = vunpack.c.l.b16 %v525
        %v550 = vunpack.c.l.b16 %v526
        %v551 = vunpack.c.l.b16 %v527
        %v552 = vrot.slane %v549, 7
        %vm553 = vcmask 1041409
        %v554 = vsel %vm553, %v552, %v548
        %v555 = vrot.slane %v550, 6
        %vm556 = vcmask 1042434
        %v557 = vsel %vm556, %v555, %v554
        %v558 = vrot.slane %v551, 5
        %vm559 = vcmask 1043459
        %v560 = vsel %vm559, %v558, %v557
        %v561 = vpack.c.b16 %v560, %v560
        %v579 = vunpack.c.l.b16 %v528
        %v580 = vunpack.c.l.b16 %v529
        %v581 = vunpack.c.l.b16 %v530
        %v582 = vunpack.c.l.b16 %v531
        %v583 = vunpack.c.l.b16 %v532
        %v584 = vunpack.c.l.b16 %v533
        %v585 = vunpack.c.l.b16 %v534
        %v586 = vunpack.c.l.b16 %v535
        %v587 = vunpack.c.l.b16 %v536
        %v588 = vunpack.c.l.b16 %v537
        %v589 = vunpack.c.l.b16 %v538
        %v590 = vunpack.c.l.b16 %v539
        %v591 = vunpack.c.l.b16 %v540
        %v592 = vunpack.c.l.b16 %v541
        %v593 = vunpack.c.l.b16 %v542
        %v594 = vunpack.c.l.b16 %v543
        %v595 = vpack.c.b16 %v580, %v579
        %v596 = vpack.c.b16 %v582, %v581
        %v597 = vpack.c.b16 %v584, %v583
        %v598 = vpack.c.b16 %v586, %v585
        %v599 = vpack.c.b16 %v588, %v587
        %v600 = vpack.c.b16 %v590, %v589
        %v601 = vpack.c.b16 %v592, %v591
        %v602 = vpack.c.b16 %v594, %v593
        %611 = vmatprep.subr.bf16.mxu0 0
        %612 = vmatpush1.bf16.msra.mxu0 %v595
        %613 = vmatprep.subr.bf16.mxu0 0
        %614 = vmatpush1.bf16.msra.mxu0 %v596
        %615 = vmatprep.subr.bf16.mxu0 0
        %616 = vmatpush1.bf16.msra.mxu0 %v597
        %617 = vmatprep.subr.bf16.mxu0 0
        %618 = vmatpush1.bf16.msra.mxu0 %v598
        %619 = vmatprep.subr.bf16.mxu0 0
        %620 = vmatpush1.bf16.msra.mxu0 %v599
        %621 = vmatprep.subr.bf16.mxu0 0
        %622 = vmatpush1.bf16.msra.mxu0 %v600
        %623 = vmatprep.subr.bf16.mxu0 0
        %624 = vmatpush1.bf16.msra.mxu0 %v601
        %625 = vmatprep.subr.bf16.mxu0 0
        %626 = vmatpush1.bf16.msra.mxu0 %v602
        %627 = vmatprep.subr.bf16.mxu0 0
        %628 = vmatpush1.bf16.msra.mxu0 0
        %629 = vmatprep.subr.bf16.mxu0 0
        %630 = vmatpush1.bf16.msra.mxu0 0
        %631 = vmatprep.subr.bf16.mxu0 0
        %632 = vmatpush1.bf16.msra.mxu0 0
        %633 = vmatprep.subr.bf16.mxu0 0
        %634 = vmatpush1.bf16.msra.mxu0 0
        %635 = vmatprep.subr.bf16.mxu0 0
        %636 = vmatpush1.bf16.msra.mxu0 0
        %637 = vmatprep.subr.bf16.mxu0 0
        %638 = vmatpush1.bf16.msra.mxu0 0
        %639 = vmatprep.subr.bf16.mxu0 0
        %640 = vmatpush1.bf16.msra.mxu0 0
        %641 = vmatprep.subr.bf16.mxu0 0
        %642 = vmatpush1.bf16.msra.mxu0 0
        %643 = vmatprep.mubr.bf16.mxu0 0
        %644 = vmatmul.mubr.bf16.gmra.mrb[0].mxu0 %v561
        %v645 = vpop.f32.mrb[0].mxu0
        %v646 = vadd.f32 0.0, %v645
        %v647 = vpop.f32.mrb[0].mxu0
        %v648 = vpop.f32.mrb[0].mxu0
        %v649 = vpop.f32.mrb[0].mxu0
        %650 = vdwg.mxu0
        %v651 = vadd.f32 %v523, %v646
        %652 = vst [vmem:[#allocation2] sm:$0xf] %v651
        %v653 = vld [vmem:[#allocation2] sm:$0xf]
        %s654 = scalar_lea.vmem %s431, 64 [#allocation5]
        %v655 = vld [vmem:[%s654] sm:$0xf]
        %v656 = vld [vmem:[%s654 + $0x4] sm:$0xf]
        %v657 = vld [vmem:[%s654 + $0x8] sm:$0xf]
        %v658 = vld [vmem:[%s654 + $0xc] sm:$0xf]
        %v659 = vld [vmem:[%s654 + $0x10] sm:$0xf]
        %v660 = vld [vmem:[%s654 + $0x14] sm:$0xf]
        %v661 = vld [vmem:[%s654 + $0x18] sm:$0xf]
        %v662 = vld [vmem:[%s654 + $0x1c] sm:$0xf]
        %v663 = vld [vmem:[%s654 + $0x20] sm:$0xf]
        %v664 = vld [vmem:[%s654 + $0x24] sm:$0xf]
        %v665 = vld [vmem:[%s654 + $0x28] sm:$0xf]
        %v666 = vld [vmem:[%s654 + $0x2c] sm:$0xf]
        %v667 = vld [vmem:[%s654 + $0x30] sm:$0xf]
        %v668 = vld [vmem:[%s654 + $0x34] sm:$0xf]
        %v669 = vld [vmem:[%s654 + $0x38] sm:$0xf]
        %v670 = vld [vmem:[%s654 + $0x3c] sm:$0xf]
        %v671 = vrot.slane %v548, 1
        %v672 = vsel %vm553, %v549, %v671
        %v673 = vrot.slane %v550, 7
        %v674 = vsel %vm556, %v673, %v672
        %v675 = vrot.slane %v551, 6
        %v676 = vsel %vm559, %v675, %v674
        %v677 = vpack.c.b16 %v676, %v676
        %v695 = vunpack.c.l.b16 %v655
        %v696 = vunpack.c.l.b16 %v656
        %v697 = vunpack.c.l.b16 %v657
        %v698 = vunpack.c.l.b16 %v658
        %v699 = vunpack.c.l.b16 %v659
        %v700 = vunpack.c.l.b16 %v660
        %v701 = vunpack.c.l.b16 %v661
        %v702 = vunpack.c.l.b16 %v662
        %v703 = vunpack.c.l.b16 %v663
        %v704 = vunpack.c.l.b16 %v664
        %v705 = vunpack.c.l.b16 %v665
        %v706 = vunpack.c.l.b16 %v666
        %v707 = vunpack.c.l.b16 %v667
        %v708 = vunpack.c.l.b16 %v668
        %v709 = vunpack.c.l.b16 %v669
        %v710 = vunpack.c.l.b16 %v670
        %v711 = vpack.c.b16 %v696, %v695
        %v712 = vpack.c.b16 %v698, %v697
        %v713 = vpack.c.b16 %v700, %v699
        %v714 = vpack.c.b16 %v702, %v701
        %v715 = vpack.c.b16 %v704, %v703
        %v716 = vpack.c.b16 %v706, %v705
        %v717 = vpack.c.b16 %v708, %v707
        %v718 = vpack.c.b16 %v710, %v709
        %727 = vmatprep.subr.bf16.mxu0 0
        %728 = vmatpush1.bf16.msra.mxu0 %v711
        %729 = vmatprep.subr.bf16.mxu0 0
        %730 = vmatpush1.bf16.msra.mxu0 %v712
        %731 = vmatprep.subr.bf16.mxu0 0
        %732 = vmatpush1.bf16.msra.mxu0 %v713
        %733 = vmatprep.subr.bf16.mxu0 0
        %734 = vmatpush1.bf16.msra.mxu0 %v714
        %735 = vmatprep.subr.bf16.mxu0 0
        %736 = vmatpush1.bf16.msra.mxu0 %v715
        %737 = vmatprep.subr.bf16.mxu0 0
        %738 = vmatpush1.bf16.msra.mxu0 %v716
        %739 = vmatprep.subr.bf16.mxu0 0
        %740 = vmatpush1.bf16.msra.mxu0 %v717
        %741 = vmatprep.subr.bf16.mxu0 0
        %742 = vmatpush1.bf16.msra.mxu0 %v718
        %743 = vmatprep.subr.bf16.mxu0 0
        %744 = vmatpush1.bf16.msra.mxu0 0
        %745 = vmatprep.subr.bf16.mxu0 0
        %746 = vmatpush1.bf16.msra.mxu0 0
        %747 = vmatprep.subr.bf16.mxu0 0
        %748 = vmatpush1.bf16.msra.mxu0 0
        %749 = vmatprep.subr.bf16.mxu0 0
        %750 = vmatpush1.bf16.msra.mxu0 0
        %751 = vmatprep.subr.bf16.mxu0 0
        %752 = vmatpush1.bf16.msra.mxu0 0
        %753 = vmatprep.subr.bf16.mxu0 0
        %754 = vmatpush1.bf16.msra.mxu0 0
        %755 = vmatprep.subr.bf16.mxu0 0
        %756 = vmatpush1.bf16.msra.mxu0 0
        %757 = vmatprep.subr.bf16.mxu0 0
        %758 = vmatpush1.bf16.msra.mxu0 0
        %759 = vmatprep.mubr.bf16.mxu0 0
        %760 = vmatmul.mubr.bf16.gmra.mrb[0].mxu0 %v677
        %v761 = vpop.f32.mrb[0].mxu0
        %v762 = vadd.f32 0.0, %v761
        %v763 = vpop.f32.mrb[0].mxu0
        %v764 = vpop.f32.mrb[0].mxu0
        %v765 = vpop.f32.mrb[0].mxu0
        %766 = vdwg.mxu0
        %v767 = vadd.f32 %v653, %v762
        %768 = vst [vmem:[#allocation2] sm:$0xf] %v767
        %v769 = vld [vmem:[#allocation2] sm:$0xf]
        %s770 = scalar_lea.vmem %s431, 128 [#allocation5]
        %v771 = vld [vmem:[%s770] sm:$0xf]
        %v772 = vld [vmem:[%s770 + $0x4] sm:$0xf]
        %v773 = vld [vmem:[%s770 + $0x8] sm:$0xf]
        %v774 = vld [vmem:[%s770 + $0xc] sm:$0xf]
        %v775 = vld [vmem:[%s770 + $0x10] sm:$0xf]
        %v776 = vld [vmem:[%s770 + $0x14] sm:$0xf]
        %v777 = vld [vmem:[%s770 + $0x18] sm:$0xf]
        %v778 = vld [vmem:[%s770 + $0x1c] sm:$0xf]
        %v779 = vld [vmem:[%s770 + $0x20] sm:$0xf]
        %v780 = vld [vmem:[%s770 + $0x24] sm:$0xf]
        %v781 = vld [vmem:[%s770 + $0x28] sm:$0xf]
        %v782 = vld [vmem:[%s770 + $0x2c] sm:$0xf]
        %v783 = vld [vmem:[%s770 + $0x30] sm:$0xf]
        %v784 = vld [vmem:[%s770 + $0x34] sm:$0xf]
        %v785 = vld [vmem:[%s770 + $0x38] sm:$0xf]
        %v786 = vld [vmem:[%s770 + $0x3c] sm:$0xf]
        %v787 = vrot.slane %v548, 2
        %v788 = vrot.slane %v549, 1
        %v789 = vsel %vm553, %v788, %v787
        %v790 = vsel %vm556, %v550, %v789
        %v791 = vrot.slane %v551, 7
        %v792 = vsel %vm559, %v791, %v790
        %v793 = vpack.c.b16 %v792, %v792
        %v811 = vunpack.c.l.b16 %v771
        %v812 = vunpack.c.l.b16 %v772
        %v813 = vunpack.c.l.b16 %v773
        %v814 = vunpack.c.l.b16 %v774
        %v815 = vunpack.c.l.b16 %v775
        %v816 = vunpack.c.l.b16 %v776
        %v817 = vunpack.c.l.b16 %v777
        %v818 = vunpack.c.l.b16 %v778
        %v819 = vunpack.c.l.b16 %v779
        %v820 = vunpack.c.l.b16 %v780
        %v821 = vunpack.c.l.b16 %v781
        %v822 = vunpack.c.l.b16 %v782
        %v823 = vunpack.c.l.b16 %v783
        %v824 = vunpack.c.l.b16 %v784
        %v825 = vunpack.c.l.b16 %v785
        %v826 = vunpack.c.l.b16 %v786
        %v827 = vpack.c.b16 %v812, %v811
        %v828 = vpack.c.b16 %v814, %v813
        %v829 = vpack.c.b16 %v816, %v815
        %v830 = vpack.c.b16 %v818, %v817
        %v831 = vpack.c.b16 %v820, %v819
        %v832 = vpack.c.b16 %v822, %v821
        %v833 = vpack.c.b16 %v824, %v823
        %v834 = vpack.c.b16 %v826, %v825
        %843 = vmatprep.subr.bf16.mxu0 0
        %844 = vmatpush1.bf16.msra.mxu0 %v827
        %845 = vmatprep.subr.bf16.mxu0 0
        %846 = vmatpush1.bf16.msra.mxu0 %v828
        %847 = vmatprep.subr.bf16.mxu0 0
        %848 = vmatpush1.bf16.msra.mxu0 %v829
        %849 = vmatprep.subr.bf16.mxu0 0
        %850 = vmatpush1.bf16.msra.mxu0 %v830
        %851 = vmatprep.subr.bf16.mxu0 0
        %852 = vmatpush1.bf16.msra.mxu0 %v831
        %853 = vmatprep.subr.bf16.mxu0 0
        %854 = vmatpush1.bf16.msra.mxu0 %v832
        %855 = vmatprep.subr.bf16.mxu0 0
        %856 = vmatpush1.bf16.msra.mxu0 %v833
        %857 = vmatprep.subr.bf16.mxu0 0
        %858 = vmatpush1.bf16.msra.mxu0 %v834
        %859 = vmatprep.subr.bf16.mxu0 0
        %860 = vmatpush1.bf16.msra.mxu0 0
        %861 = vmatprep.subr.bf16.mxu0 0
        %862 = vmatpush1.bf16.msra.mxu0 0
        %863 = vmatprep.subr.bf16.mxu0 0
        %864 = vmatpush1.bf16.msra.mxu0 0
        %865 = vmatprep.subr.bf16.mxu0 0
        %866 = vmatpush1.bf16.msra.mxu0 0
        %867 = vmatprep.subr.bf16.mxu0 0
        %868 = vmatpush1.bf16.msra.mxu0 0
        %869 = vmatprep.subr.bf16.mxu0 0
        %870 = vmatpush1.bf16.msra.mxu0 0
        %871 = vmatprep.subr.bf16.mxu0 0
        %872 = vmatpush1.bf16.msra.mxu0 0
        %873 = vmatprep.subr.bf16.mxu0 0
        %874 = vmatpush1.bf16.msra.mxu0 0
        %875 = vmatprep.mubr.bf16.mxu0 0
        %876 = vmatmul.mubr.bf16.gmra.mrb[0].mxu0 %v793
        %v877 = vpop.f32.mrb[0].mxu0
        %v878 = vadd.f32 0.0, %v877
        %v879 = vpop.f32.mrb[0].mxu0
        %v880 = vpop.f32.mrb[0].mxu0
        %v881 = vpop.f32.mrb[0].mxu0
        %882 = vdwg.mxu0
        %v883 = vadd.f32 %v769, %v878
        %884 = vst [vmem:[#allocation2] sm:$0xf] %v883
        %v885 = vld [vmem:[#allocation2] sm:$0xf]
        %s886 = scalar_lea.vmem %s431, 192 [#allocation5]
        %v887 = vld [vmem:[%s886] sm:$0xf]
        %v888 = vld [vmem:[%s886 + $0x4] sm:$0xf]
        %v889 = vld [vmem:[%s886 + $0x8] sm:$0xf]
        %v890 = vld [vmem:[%s886 + $0xc] sm:$0xf]
        %v891 = vld [vmem:[%s886 + $0x10] sm:$0xf]
        %v892 = vld [vmem:[%s886 + $0x14] sm:$0xf]
        %v893 = vld [vmem:[%s886 + $0x18] sm:$0xf]
        %v894 = vld [vmem:[%s886 + $0x1c] sm:$0xf]
        %v895 = vld [vmem:[%s886 + $0x20] sm:$0xf]
        %v896 = vld [vmem:[%s886 + $0x24] sm:$0xf]
        %v897 = vld [vmem:[%s886 + $0x28] sm:$0xf]
        %v898 = vld [vmem:[%s886 + $0x2c] sm:$0xf]
        %v899 = vld [vmem:[%s886 + $0x30] sm:$0xf]
        %v900 = vld [vmem:[%s886 + $0x34] sm:$0xf]
        %v901 = vld [vmem:[%s886 + $0x38] sm:$0xf]
        %v902 = vld [vmem:[%s886 + $0x3c] sm:$0xf]
        %v903 = vrot.slane %v548, 3
        %v904 = vrot.slane %v549, 2
        %v905 = vsel %vm553, %v904, %v903
        %v906 = vrot.slane %v550, 1
        %v907 = vsel %vm556, %v906, %v905
        %v908 = vsel %vm559, %v551, %v907
        %v909 = vpack.c.b16 %v908, %v908
        %v927 = vunpack.c.l.b16 %v887
        %v928 = vunpack.c.l.b16 %v888
        %v929 = vunpack.c.l.b16 %v889
        %v930 = vunpack.c.l.b16 %v890
        %v931 = vunpack.c.l.b16 %v891
        %v932 = vunpack.c.l.b16 %v892
        %v933 = vunpack.c.l.b16 %v893
        %v934 = vunpack.c.l.b16 %v894
        %v935 = vunpack.c.l.b16 %v895
        %v936 = vunpack.c.l.b16 %v896
        %v937 = vunpack.c.l.b16 %v897
        %v938 = vunpack.c.l.b16 %v898
        %v939 = vunpack.c.l.b16 %v899
        %v940 = vunpack.c.l.b16 %v900
        %v941 = vunpack.c.l.b16 %v901
        %v942 = vunpack.c.l.b16 %v902
        %v943 = vpack.c.b16 %v928, %v927
        %v944 = vpack.c.b16 %v930, %v929
        %v945 = vpack.c.b16 %v932, %v931
        %v946 = vpack.c.b16 %v934, %v933
        %v947 = vpack.c.b16 %v936, %v935
        %v948 = vpack.c.b16 %v938, %v937
        %v949 = vpack.c.b16 %v940, %v939
        %v950 = vpack.c.b16 %v942, %v941
        %959 = vmatprep.subr.bf16.mxu0 0
        %960 = vmatpush1.bf16.msra.mxu0 %v943
        %961 = vmatprep.subr.bf16.mxu0 0
        %962 = vmatpush1.bf16.msra.mxu0 %v944
        %963 = vmatprep.subr.bf16.mxu0 0
        %964 = vmatpush1.bf16.msra.mxu0 %v945
        %965 = vmatprep.subr.bf16.mxu0 0
        %966 = vmatpush1.bf16.msra.mxu0 %v946
        %967 = vmatprep.subr.bf16.mxu0 0
        %968 = vmatpush1.bf16.msra.mxu0 %v947
        %969 = vmatprep.subr.bf16.mxu0 0
        %970 = vmatpush1.bf16.msra.mxu0 %v948
        %971 = vmatprep.subr.bf16.mxu0 0
        %972 = vmatpush1.bf16.msra.mxu0 %v949
        %973 = vmatprep.subr.bf16.mxu0 0
        %974 = vmatpush1.bf16.msra.mxu0 %v950
        %975 = vmatprep.subr.bf16.mxu0 0
        %976 = vmatpush1.bf16.msra.mxu0 0
        %977 = vmatprep.subr.bf16.mxu0 0
        %978 = vmatpush1.bf16.msra.mxu0 0
        %979 = vmatprep.subr.bf16.mxu0 0
        %980 = vmatpush1.bf16.msra.mxu0 0
        %981 = vmatprep.subr.bf16.mxu0 0
        %982 = vmatpush1.bf16.msra.mxu0 0
        %983 = vmatprep.subr.bf16.mxu0 0
        %984 = vmatpush1.bf16.msra.mxu0 0
        %985 = vmatprep.subr.bf16.mxu0 0
        %986 = vmatpush1.bf16.msra.mxu0 0
        %987 = vmatprep.subr.bf16.mxu0 0
        %988 = vmatpush1.bf16.msra.mxu0 0
        %989 = vmatprep.subr.bf16.mxu0 0
        %990 = vmatpush1.bf16.msra.mxu0 0
        %991 = vmatprep.mubr.bf16.mxu0 0
        %992 = vmatmul.mubr.bf16.gmra.mrb[0].mxu0 %v909
        %v993 = vpop.f32.mrb[0].mxu0
        %v994 = vadd.f32 0.0, %v993
        %v995 = vpop.f32.mrb[0].mxu0
        %v996 = vpop.f32.mrb[0].mxu0
        %v997 = vpop.f32.mrb[0].mxu0
        %998 = vdwg.mxu0
        %v999 = vadd.f32 %v885, %v994
        %1000 = vst [vmem:[#allocation2] sm:$0xf] %v999
        %v1001 = vld [vmem:[#allocation2] sm:$0xf]
        %s1002 = scalar_lea.vmem %s431, 256 [#allocation5]
        %v1003 = vld [vmem:[%s1002] sm:$0xf]
        %v1004 = vld [vmem:[%s1002 + $0x4] sm:$0xf]
        %v1005 = vld [vmem:[%s1002 + $0x8] sm:$0xf]
        %v1006 = vld [vmem:[%s1002 + $0xc] sm:$0xf]
        %v1007 = vld [vmem:[%s1002 + $0x10] sm:$0xf]
        %v1008 = vld [vmem:[%s1002 + $0x14] sm:$0xf]
        %v1009 = vld [vmem:[%s1002 + $0x18] sm:$0xf]
        %v1010 = vld [vmem:[%s1002 + $0x1c] sm:$0xf]
        %v1011 = vld [vmem:[%s1002 + $0x20] sm:$0xf]
        %v1012 = vld [vmem:[%s1002 + $0x24] sm:$0xf]
        %v1013 = vld [vmem:[%s1002 + $0x28] sm:$0xf]
        %v1014 = vld [vmem:[%s1002 + $0x2c] sm:$0xf]
        %v1015 = vld [vmem:[%s1002 + $0x30] sm:$0xf]
        %v1016 = vld [vmem:[%s1002 + $0x34] sm:$0xf]
        %v1017 = vld [vmem:[%s1002 + $0x38] sm:$0xf]
        %v1018 = vld [vmem:[%s1002 + $0x3c] sm:$0xf]
        %v1019 = vrot.slane %v548, 4
        %v1020 = vrot.slane %v549, 3
        %v1021 = vsel %vm553, %v1020, %v1019
        %v1022 = vrot.slane %v550, 2
        %v1023 = vsel %vm556, %v1022, %v1021
        %v1024 = vrot.slane %v551, 1
        %v1025 = vsel %vm559, %v1024, %v1023
        %v1026 = vpack.c.b16 %v1025, %v1025
        %v1044 = vunpack.c.l.b16 %v1003
        %v1045 = vunpack.c.l.b16 %v1004
        %v1046 = vunpack.c.l.b16 %v1005
        %v1047 = vunpack.c.l.b16 %v1006
        %v1048 = vunpack.c.l.b16 %v1007
        %v1049 = vunpack.c.l.b16 %v1008
        %v1050 = vunpack.c.l.b16 %v1009
        %v1051 = vunpack.c.l.b16 %v1010
        %v1052 = vunpack.c.l.b16 %v1011
        %v1053 = vunpack.c.l.b16 %v1012
        %v1054 = vunpack.c.l.b16 %v1013
        %v1055 = vunpack.c.l.b16 %v1014
        %v1056 = vunpack.c.l.b16 %v1015
        %v1057 = vunpack.c.l.b16 %v1016
        %v1058 = vunpack.c.l.b16 %v1017
        %v1059 = vunpack.c.l.b16 %v1018
        %v1060 = vpack.c.b16 %v1045, %v1044
        %v1061 = vpack.c.b16 %v1047, %v1046
        %v1062 = vpack.c.b16 %v1049, %v1048
        %v1063 = vpack.c.b16 %v1051, %v1050
        %v1064 = vpack.c.b16 %v1053, %v1052
        %v1065 = vpack.c.b16 %v1055, %v1054
        %v1066 = vpack.c.b16 %v1057, %v1056
        %v1067 = vpack.c.b16 %v1059, %v1058
        %1076 = vmatprep.subr.bf16.mxu0 0
        %1077 = vmatpush1.bf16.msra.mxu0 %v1060
        %1078 = vmatprep.subr.bf16.mxu0 0
        %1079 = vmatpush1.bf16.msra.mxu0 %v1061
        %1080 = vmatprep.subr.bf16.mxu0 0
        %1081 = vmatpush1.bf16.msra.mxu0 %v1062
        %1082 = vmatprep.subr.bf16.mxu0 0
        %1083 = vmatpush1.bf16.msra.mxu0 %v1063
        %1084 = vmatprep.subr.bf16.mxu0 0
        %1085 = vmatpush1.bf16.msra.mxu0 %v1064
        %1086 = vmatprep.subr.bf16.mxu0 0
        %1087 = vmatpush1.bf16.msra.mxu0 %v1065
        %1088 = vmatprep.subr.bf16.mxu0 0
        %1089 = vmatpush1.bf16.msra.mxu0 %v1066
        %1090 = vmatprep.subr.bf16.mxu0 0
        %1091 = vmatpush1.bf16.msra.mxu0 %v1067
        %1092 = vmatprep.subr.bf16.mxu0 0
        %1093 = vmatpush1.bf16.msra.mxu0 0
        %1094 = vmatprep.subr.bf16.mxu0 0
        %1095 = vmatpush1.bf16.msra.mxu0 0
        %1096 = vmatprep.subr.bf16.mxu0 0
        %1097 = vmatpush1.bf16.msra.mxu0 0
        %1098 = vmatprep.subr.bf16.mxu0 0
        %1099 = vmatpush1.bf16.msra.mxu0 0
        %1100 = vmatprep.subr.bf16.mxu0 0
        %1101 = vmatpush1.bf16.msra.mxu0 0
        %1102 = vmatprep.subr.bf16.mxu0 0
        %1103 = vmatpush1.bf16.msra.mxu0 0
        %1104 = vmatprep.subr.bf16.mxu0 0
        %1105 = vmatpush1.bf16.msra.mxu0 0
        %1106 = vmatprep.subr.bf16.mxu0 0
        %1107 = vmatpush1.bf16.msra.mxu0 0
        %1108 = vmatprep.mubr.bf16.mxu0 0
        %1109 = vmatmul.mubr.bf16.gmra.mrb[0].mxu0 %v1026
        %v1110 = vpop.f32.mrb[0].mxu0
        %v1111 = vadd.f32 0.0, %v1110
        %v1112 = vpop.f32.mrb[0].mxu0
        %v1113 = vpop.f32.mrb[0].mxu0
        %v1114 = vpop.f32.mrb[0].mxu0
        %1115 = vdwg.mxu0
        %v1116 = vadd.f32 %v1001, %v1111
        %1117 = vst [vmem:[#allocation2] sm:$0xf] %v1116
        %v1118 = vld [vmem:[#allocation2] sm:$0xf]
        %s1119 = scalar_lea.vmem %s431, 320 [#allocation5]
        %v1120 = vld [vmem:[%s1119] sm:$0xf]
        %v1121 = vld [vmem:[%s1119 + $0x4] sm:$0xf]
        %v1122 = vld [vmem:[%s1119 + $0x8] sm:$0xf]
        %v1123 = vld [vmem:[%s1119 + $0xc] sm:$0xf]
        %v1124 = vld [vmem:[%s1119 + $0x10] sm:$0xf]
        %v1125 = vld [vmem:[%s1119 + $0x14] sm:$0xf]
        %v1126 = vld [vmem:[%s1119 + $0x18] sm:$0xf]
        %v1127 = vld [vmem:[%s1119 + $0x1c] sm:$0xf]
        %v1128 = vld [vmem:[%s1119 + $0x20] sm:$0xf]
        %v1129 = vld [vmem:[%s1119 + $0x24] sm:$0xf]
        %v1130 = vld [vmem:[%s1119 + $0x28] sm:$0xf]
        %v1131 = vld [vmem:[%s1119 + $0x2c] sm:$0xf]
        %v1132 = vld [vmem:[%s1119 + $0x30] sm:$0xf]
        %v1133 = vld [vmem:[%s1119 + $0x34] sm:$0xf]
        %v1134 = vld [vmem:[%s1119 + $0x38] sm:$0xf]
        %v1135 = vld [vmem:[%s1119 + $0x3c] sm:$0xf]
        %v1136 = vrot.slane %v548, 5
        %v1137 = vrot.slane %v549, 4
        %v1138 = vsel %vm553, %v1137, %v1136
        %v1139 = vrot.slane %v550, 3
        %v1140 = vsel %vm556, %v1139, %v1138
        %v1141 = vrot.slane %v551, 2
        %v1142 = vsel %vm559, %v1141, %v1140
        %v1143 = vpack.c.b16 %v1142, %v1142
        %v1161 = vunpack.c.l.b16 %v1120
        %v1162 = vunpack.c.l.b16 %v1121
        %v1163 = vunpack.c.l.b16 %v1122
        %v1164 = vunpack.c.l.b16 %v1123
        %v1165 = vunpack.c.l.b16 %v1124
        %v1166 = vunpack.c.l.b16 %v1125
        %v1167 = vunpack.c.l.b16 %v1126
        %v1168 = vunpack.c.l.b16 %v1127
        %v1169 = vunpack.c.l.b16 %v1128
        %v1170 = vunpack.c.l.b16 %v1129
        %v1171 = vunpack.c.l.b16 %v1130
        %v1172 = vunpack.c.l.b16 %v1131
        %v1173 = vunpack.c.l.b16 %v1132
        %v1174 = vunpack.c.l.b16 %v1133
        %v1175 = vunpack.c.l.b16 %v1134
        %v1176 = vunpack.c.l.b16 %v1135
        %v1177 = vpack.c.b16 %v1162, %v1161
        %v1178 = vpack.c.b16 %v1164, %v1163
        %v1179 = vpack.c.b16 %v1166, %v1165
        %v1180 = vpack.c.b16 %v1168, %v1167
        %v1181 = vpack.c.b16 %v1170, %v1169
        %v1182 = vpack.c.b16 %v1172, %v1171
        %v1183 = vpack.c.b16 %v1174, %v1173
        %v1184 = vpack.c.b16 %v1176, %v1175
        %1193 = vmatprep.subr.bf16.mxu0 0
        %1194 = vmatpush1.bf16.msra.mxu0 %v1177
        %1195 = vmatprep.subr.bf16.mxu0 0
        %1196 = vmatpush1.bf16.msra.mxu0 %v1178
        %1197 = vmatprep.subr.bf16.mxu0 0
        %1198 = vmatpush1.bf16.msra.mxu0 %v1179
        %1199 = vmatprep.subr.bf16.mxu0 0
        %1200 = vmatpush1.bf16.msra.mxu0 %v1180
        %1201 = vmatprep.subr.bf16.mxu0 0
        %1202 = vmatpush1.bf16.msra.mxu0 %v1181
        %1203 = vmatprep.subr.bf16.mxu0 0
        %1204 = vmatpush1.bf16.msra.mxu0 %v1182
        %1205 = vmatprep.subr.bf16.mxu0 0
        %1206 = vmatpush1.bf16.msra.mxu0 %v1183
        %1207 = vmatprep.subr.bf16.mxu0 0
        %1208 = vmatpush1.bf16.msra.mxu0 %v1184
        %1209 = vmatprep.subr.bf16.mxu0 0
        %1210 = vmatpush1.bf16.msra.mxu0 0
        %1211 = vmatprep.subr.bf16.mxu0 0
        %1212 = vmatpush1.bf16.msra.mxu0 0
        %1213 = vmatprep.subr.bf16.mxu0 0
        %1214 = vmatpush1.bf16.msra.mxu0 0
        %1215 = vmatprep.subr.bf16.mxu0 0
        %1216 = vmatpush1.bf16.msra.mxu0 0
        %1217 = vmatprep.subr.bf16.mxu0 0
        %1218 = vmatpush1.bf16.msra.mxu0 0
        %1219 = vmatprep.subr.bf16.mxu0 0
        %1220 = vmatpush1.bf16.msra.mxu0 0
        %1221 = vmatprep.subr.bf16.mxu0 0
        %1222 = vmatpush1.bf16.msra.mxu0 0
        %1223 = vmatprep.subr.bf16.mxu0 0
        %1224 = vmatpush1.bf16.msra.mxu0 0
        %1225 = vmatprep.mubr.bf16.mxu0 0
        %1226 = vmatmul.mubr.bf16.gmra.mrb[0].mxu0 %v1143
        %v1227 = vpop.f32.mrb[0].mxu0
        %v1228 = vadd.f32 0.0, %v1227
        %v1229 = vpop.f32.mrb[0].mxu0
        %v1230 = vpop.f32.mrb[0].mxu0
        %v1231 = vpop.f32.mrb[0].mxu0
        %1232 = vdwg.mxu0
        %v1233 = vadd.f32 %v1118, %v1228
        %1234 = vst [vmem:[#allocation2] sm:$0xf] %v1233
        %v1235 = vld [vmem:[#allocation2] sm:$0xf]
        %s1236 = scalar_lea.vmem %s431, 384 [#allocation5]
        %v1237 = vld [vmem:[%s1236] sm:$0xf]
        %v1238 = vld [vmem:[%s1236 + $0x4] sm:$0xf]
        %v1239 = vld [vmem:[%s1236 + $0x8] sm:$0xf]
        %v1240 = vld [vmem:[%s1236 + $0xc] sm:$0xf]
        %v1241 = vld [vmem:[%s1236 + $0x10] sm:$0xf]
        %v1242 = vld [vmem:[%s1236 + $0x14] sm:$0xf]
        %v1243 = vld [vmem:[%s1236 + $0x18] sm:$0xf]
        %v1244 = vld [vmem:[%s1236 + $0x1c] sm:$0xf]
        %v1245 = vld [vmem:[%s1236 + $0x20] sm:$0xf]
        %v1246 = vld [vmem:[%s1236 + $0x24] sm:$0xf]
        %v1247 = vld [vmem:[%s1236 + $0x28] sm:$0xf]
        %v1248 = vld [vmem:[%s1236 + $0x2c] sm:$0xf]
        %v1249 = vld [vmem:[%s1236 + $0x30] sm:$0xf]
        %v1250 = vld [vmem:[%s1236 + $0x34] sm:$0xf]
        %v1251 = vld [vmem:[%s1236 + $0x38] sm:$0xf]
        %v1252 = vld [vmem:[%s1236 + $0x3c] sm:$0xf]
        %v1253 = vrot.slane %v548, 6
        %v1254 = vrot.slane %v549, 5
        %v1255 = vsel %vm553, %v1254, %v1253
        %v1256 = vrot.slane %v550, 4
        %v1257 = vsel %vm556, %v1256, %v1255
        %v1258 = vrot.slane %v551, 3
        %v1259 = vsel %vm559, %v1258, %v1257
        %v1260 = vpack.c.b16 %v1259, %v1259
        %v1278 = vunpack.c.l.b16 %v1237
        %v1279 = vunpack.c.l.b16 %v1238
        %v1280 = vunpack.c.l.b16 %v1239
        %v1281 = vunpack.c.l.b16 %v1240
        %v1282 = vunpack.c.l.b16 %v1241
        %v1283 = vunpack.c.l.b16 %v1242
        %v1284 = vunpack.c.l.b16 %v1243
        %v1285 = vunpack.c.l.b16 %v1244
        %v1286 = vunpack.c.l.b16 %v1245
        %v1287 = vunpack.c.l.b16 %v1246
        %v1288 = vunpack.c.l.b16 %v1247
        %v1289 = vunpack.c.l.b16 %v1248
        %v1290 = vunpack.c.l.b16 %v1249
        %v1291 = vunpack.c.l.b16 %v1250
        %v1292 = vunpack.c.l.b16 %v1251
        %v1293 = vunpack.c.l.b16 %v1252
        %v1294 = vpack.c.b16 %v1279, %v1278
        %v1295 = vpack.c.b16 %v1281, %v1280
        %v1296 = vpack.c.b16 %v1283, %v1282
        %v1297 = vpack.c.b16 %v1285, %v1284
        %v1298 = vpack.c.b16 %v1287, %v1286
        %v1299 = vpack.c.b16 %v1289, %v1288
        %v1300 = vpack.c.b16 %v1291, %v1290
        %v1301 = vpack.c.b16 %v1293, %v1292
        %1310 = vmatprep.subr.bf16.mxu0 0
        %1311 = vmatpush1.bf16.msra.mxu0 %v1294
        %1312 = vmatprep.subr.bf16.mxu0 0
        %1313 = vmatpush1.bf16.msra.mxu0 %v1295
        %1314 = vmatprep.subr.bf16.mxu0 0
        %1315 = vmatpush1.bf16.msra.mxu0 %v1296
        %1316 = vmatprep.subr.bf16.mxu0 0
        %1317 = vmatpush1.bf16.msra.mxu0 %v1297
        %1318 = vmatprep.subr.bf16.mxu0 0
        %1319 = vmatpush1.bf16.msra.mxu0 %v1298
        %1320 = vmatprep.subr.bf16.mxu0 0
        %1321 = vmatpush1.bf16.msra.mxu0 %v1299
        %1322 = vmatprep.subr.bf16.mxu0 0
        %1323 = vmatpush1.bf16.msra.mxu0 %v1300
        %1324 = vmatprep.subr.bf16.mxu0 0
        %1325 = vmatpush1.bf16.msra.mxu0 %v1301
        %1326 = vmatprep.subr.bf16.mxu0 0
        %1327 = vmatpush1.bf16.msra.mxu0 0
        %1328 = vmatprep.subr.bf16.mxu0 0
        %1329 = vmatpush1.bf16.msra.mxu0 0
        %1330 = vmatprep.subr.bf16.mxu0 0
        %1331 = vmatpush1.bf16.msra.mxu0 0
        %1332 = vmatprep.subr.bf16.mxu0 0
        %1333 = vmatpush1.bf16.msra.mxu0 0
        %1334 = vmatprep.subr.bf16.mxu0 0
        %1335 = vmatpush1.bf16.msra.mxu0 0
        %1336 = vmatprep.subr.bf16.mxu0 0
        %1337 = vmatpush1.bf16.msra.mxu0 0
        %1338 = vmatprep.subr.bf16.mxu0 0
        %1339 = vmatpush1.bf16.msra.mxu0 0
        %1340 = vmatprep.subr.bf16.mxu0 0
        %1341 = vmatpush1.bf16.msra.mxu0 0
        %1342 = vmatprep.mubr.bf16.mxu0 0
        %1343 = vmatmul.mubr.bf16.gmra.mrb[0].mxu0 %v1260
        %v1344 = vpop.f32.mrb[0].mxu0
        %v1345 = vadd.f32 0.0, %v1344
        %v1346 = vpop.f32.mrb[0].mxu0
        %v1347 = vpop.f32.mrb[0].mxu0
        %v1348 = vpop.f32.mrb[0].mxu0
        %1349 = vdwg.mxu0
        %v1350 = vadd.f32 %v1235, %v1345
        %1351 = vst [vmem:[#allocation2] sm:$0xf] %v1350
        %v1352 = vld [vmem:[#allocation2] sm:$0xf]
        %s1353 = scalar_lea.vmem %s431, 448 [#allocation5]
        %v1354 = vld [vmem:[%s1353] sm:$0xf]
        %v1355 = vld [vmem:[%s1353 + $0x4] sm:$0xf]
        %v1356 = vld [vmem:[%s1353 + $0x8] sm:$0xf]
        %v1357 = vld [vmem:[%s1353 + $0xc] sm:$0xf]
        %v1358 = vld [vmem:[%s1353 + $0x10] sm:$0xf]
        %v1359 = vld [vmem:[%s1353 + $0x14] sm:$0xf]
        %v1360 = vld [vmem:[%s1353 + $0x18] sm:$0xf]
        %v1361 = vld [vmem:[%s1353 + $0x1c] sm:$0xf]
        %v1362 = vld [vmem:[%s1353 + $0x20] sm:$0xf]
        %v1363 = vld [vmem:[%s1353 + $0x24] sm:$0xf]
        %v1364 = vld [vmem:[%s1353 + $0x28] sm:$0xf]
        %v1365 = vld [vmem:[%s1353 + $0x2c] sm:$0xf]
        %v1366 = vld [vmem:[%s1353 + $0x30] sm:$0xf]
        %v1367 = vld [vmem:[%s1353 + $0x34] sm:$0xf]
        %v1368 = vld [vmem:[%s1353 + $0x38] sm:$0xf]
        %v1369 = vld [vmem:[%s1353 + $0x3c] sm:$0xf]
        %v1370 = vrot.slane %v548, 7
        %v1371 = vrot.slane %v549, 6
        %v1372 = vsel %vm553, %v1371, %v1370
        %v1373 = vrot.slane %v550, 5
        %v1374 = vsel %vm556, %v1373, %v1372
        %v1375 = vrot.slane %v551, 4
        %v1376 = vsel %vm559, %v1375, %v1374
        %v1377 = vpack.c.b16 %v1376, %v1376
        %v1395 = vunpack.c.l.b16 %v1354
        %v1396 = vunpack.c.l.b16 %v1355
        %v1397 = vunpack.c.l.b16 %v1356
        %v1398 = vunpack.c.l.b16 %v1357
        %v1399 = vunpack.c.l.b16 %v1358
        %v1400 = vunpack.c.l.b16 %v1359
        %v1401 = vunpack.c.l.b16 %v1360
        %v1402 = vunpack.c.l.b16 %v1361
        %v1403 = vunpack.c.l.b16 %v1362
        %v1404 = vunpack.c.l.b16 %v1363
        %v1405 = vunpack.c.l.b16 %v1364
        %v1406 = vunpack.c.l.b16 %v1365
        %v1407 = vunpack.c.l.b16 %v1366
        %v1408 = vunpack.c.l.b16 %v1367
        %v1409 = vunpack.c.l.b16 %v1368
        %v1410 = vunpack.c.l.b16 %v1369
        %v1411 = vpack.c.b16 %v1396, %v1395
        %v1412 = vpack.c.b16 %v1398, %v1397
        %v1413 = vpack.c.b16 %v1400, %v1399
        %v1414 = vpack.c.b16 %v1402, %v1401
        %v1415 = vpack.c.b16 %v1404, %v1403
        %v1416 = vpack.c.b16 %v1406, %v1405
        %v1417 = vpack.c.b16 %v1408, %v1407
        %v1418 = vpack.c.b16 %v1410, %v1409
        %1427 = vmatprep.subr.bf16.mxu0 0
        %1428 = vmatpush1.bf16.msra.mxu0 %v1411
        %1429 = vmatprep.subr.bf16.mxu0 0
        %1430 = vmatpush1.bf16.msra.mxu0 %v1412
        %1431 = vmatprep.subr.bf16.mxu0 0
        %1432 = vmatpush1.bf16.msra.mxu0 %v1413
        %1433 = vmatprep.subr.bf16.mxu0 0
        %1434 = vmatpush1.bf16.msra.mxu0 %v1414
        %1435 = vmatprep.subr.bf16.mxu0 0
        %1436 = vmatpush1.bf16.msra.mxu0 %v1415
        %1437 = vmatprep.subr.bf16.mxu0 0
        %1438 = vmatpush1.bf16.msra.mxu0 %v1416
        %1439 = vmatprep.subr.bf16.mxu0 0
        %1440 = vmatpush1.bf16.msra.mxu0 %v1417
        %1441 = vmatprep.subr.bf16.mxu0 0
        %1442 = vmatpush1.bf16.msra.mxu0 %v1418
        %1443 = vmatprep.subr.bf16.mxu0 0
        %1444 = vmatpush1.bf16.msra.mxu0 0
        %1445 = vmatprep.subr.bf16.mxu0 0
        %1446 = vmatpush1.bf16.msra.mxu0 0
        %1447 = vmatprep.subr.bf16.mxu0 0
        %1448 = vmatpush1.bf16.msra.mxu0 0
        %1449 = vmatprep.subr.bf16.mxu0 0
        %1450 = vmatpush1.bf16.msra.mxu0 0
        %1451 = vmatprep.subr.bf16.mxu0 0
        %1452 = vmatpush1.bf16.msra.mxu0 0
        %1453 = vmatprep.subr.bf16.mxu0 0
        %1454 = vmatpush1.bf16.msra.mxu0 0
        %1455 = vmatprep.subr.bf16.mxu0 0
        %1456 = vmatpush1.bf16.msra.mxu0 0
        %1457 = vmatprep.subr.bf16.mxu0 0
        %1458 = vmatpush1.bf16.msra.mxu0 0
        %1459 = vmatprep.mubr.bf16.mxu0 0
        %1460 = vmatmul.mubr.bf16.gmra.mrb[0].mxu0 %v1377
        %v1461 = vpop.f32.mrb[0].mxu0
        %v1462 = vadd.f32 0.0, %v1461
        %v1463 = vpop.f32.mrb[0].mxu0
        %v1464 = vpop.f32.mrb[0].mxu0
        %v1465 = vpop.f32.mrb[0].mxu0
        %1466 = vdwg.mxu0
        %v1467 = vadd.f32 %v1352, %v1462
        %1468 = vst [vmem:[#allocation2] sm:$0xf] %v1467
        %v1469 = vunpack.c.l.bf16 %v492
        %v1470 = vunpack.c.l.bf16 %v494
        %v1471 = vunpack.c.l.bf16 %v496
        %v1472 = vunpack.c.l.bf16 %v498
        %v1473 = vmul.f32 %v1469, %v507
        %v1474 = vmul.f32 %v1470, %v507
        %v1475 = vmul.f32 %v1471, %v507
        %v1476 = vmul.f32 %v1472, %v507
        %v1477 = vadd.f32 %v1473, %v517
        %v1478 = vadd.f32 %v1474, %v517
        %v1479 = vadd.f32 %v1475, %v517
        %v1480 = vadd.f32 %v1476, %v517
        %v1481 = vld [vmem:[#allocation2] sm:$0xf]
        %v1482 = vpack.c.bf16 %v1477, %v1477
        %v1483 = vpack.c.bf16 %v1478, %v1478
        %v1484 = vpack.c.bf16 %v1479, %v1479
        %v1485 = vpack.c.bf16 %v1480, %v1480
        %s1486 = scalar_lea.vmem %s431, 512 [#allocation5]
        %v1487 = vld [vmem:[%s1486] sm:$0xf]
        %v1488 = vld [vmem:[%s1486 + $0x4] sm:$0xf]
        %v1489 = vld [vmem:[%s1486 + $0x8] sm:$0xf]
        %v1490 = vld [vmem:[%s1486 + $0xc] sm:$0xf]
        %v1491 = vld [vmem:[%s1486 + $0x10] sm:$0xf]
        %v1492 = vld [vmem:[%s1486 + $0x14] sm:$0xf]
        %v1493 = vld [vmem:[%s1486 + $0x18] sm:$0xf]
        %v1494 = vld [vmem:[%s1486 + $0x1c] sm:$0xf]
        %v1495 = vld [vmem:[%s1486 + $0x20] sm:$0xf]
        %v1496 = vld [vmem:[%s1486 + $0x24] sm:$0xf]
        %v1497 = vld [vmem:[%s1486 + $0x28] sm:$0xf]
        %v1498 = vld [vmem:[%s1486 + $0x2c] sm:$0xf]
        %v1499 = vld [vmem:[%s1486 + $0x30] sm:$0xf]
        %v1500 = vld [vmem:[%s1486 + $0x34] sm:$0xf]
        %v1501 = vld [vmem:[%s1486 + $0x38] sm:$0xf]
        %v1502 = vld [vmem:[%s1486 + $0x3c] sm:$0xf]
        %v1507 = vunpack.c.l.b16 %v1482
        %v1508 = vunpack.c.l.b16 %v1483
        %v1509 = vunpack.c.l.b16 %v1484
        %v1510 = vunpack.c.l.b16 %v1485
        %v1511 = vrot.slane %v1508, 7
        %v1512 = vsel %vm553, %v1511, %v1507
        %v1513 = vrot.slane %v1509, 6
        %v1514 = vsel %vm556, %v1513, %v1512
        %v1515 = vrot.slane %v1510, 5
        %v1516 = vsel %vm559, %v1515, %v1514
        %v1517 = vpack.c.b16 %v1516, %v1516
        %v1535 = vunpack.c.l.b16 %v1487
        %v1536 = vunpack.c.l.b16 %v1488
        %v1537 = vunpack.c.l.b16 %v1489
        %v1538 = vunpack.c.l.b16 %v1490
        %v1539 = vunpack.c.l.b16 %v1491
        %v1540 = vunpack.c.l.b16 %v1492
        %v1541 = vunpack.c.l.b16 %v1493
        %v1542 = vunpack.c.l.b16 %v1494
        %v1543 = vunpack.c.l.b16 %v1495
        %v1544 = vunpack.c.l.b16 %v1496
        %v1545 = vunpack.c.l.b16 %v1497
        %v1546 = vunpack.c.l.b16 %v1498
        %v1547 = vunpack.c.l.b16 %v1499
        %v1548 = vunpack.c.l.b16 %v1500
        %v1549 = vunpack.c.l.b16 %v1501
        %v1550 = vunpack.c.l.b16 %v1502
        %v1551 = vpack.c.b16 %v1536, %v1535
        %v1552 = vpack.c.b16 %v1538, %v1537
        %v1553 = vpack.c.b16 %v1540, %v1539
        %v1554 = vpack.c.b16 %v1542, %v1541
        %v1555 = vpack.c.b16 %v1544, %v1543
        %v1556 = vpack.c.b16 %v1546, %v1545
        %v1557 = vpack.c.b16 %v1548, %v1547
        %v1558 = vpack.c.b16 %v1550, %v1549
        %1567 = vmatprep.subr.bf16.mxu0 0
        %1568 = vmatpush1.bf16.msra.mxu0 %v1551
        %1569 = vmatprep.subr.bf16.mxu0 0
        %1570 = vmatpush1.bf16.msra.mxu0 %v1552
        %1571 = vmatprep.subr.bf16.mxu0 0
        %1572 = vmatpush1.bf16.msra.mxu0 %v1553
        %1573 = vmatprep.subr.bf16.mxu0 0
        %1574 = vmatpush1.bf16.msra.mxu0 %v1554
        %1575 = vmatprep.subr.bf16.mxu0 0
        %1576 = vmatpush1.bf16.msra.mxu0 %v1555
        %1577 = vmatprep.subr.bf16.mxu0 0
        %1578 = vmatpush1.bf16.msra.mxu0 %v1556
        %1579 = vmatprep.subr.bf16.mxu0 0
        %1580 = vmatpush1.bf16.msra.mxu0 %v1557
        %1581 = vmatprep.subr.bf16.mxu0 0
        %1582 = vmatpush1.bf16.msra.mxu0 %v1558
        %1583 = vmatprep.subr.bf16.mxu0 0
        %1584 = vmatpush1.bf16.msra.mxu0 0
        %1585 = vmatprep.subr.bf16.mxu0 0
        %1586 = vmatpush1.bf16.msra.mxu0 0
        %1587 = vmatprep.subr.bf16.mxu0 0
        %1588 = vmatpush1.bf16.msra.mxu0 0
        %1589 = vmatprep.subr.bf16.mxu0 0
        %1590 = vmatpush1.bf16.msra.mxu0 0
        %1591 = vmatprep.subr.bf16.mxu0 0
        %1592 = vmatpush1.bf16.msra.mxu0 0
        %1593 = vmatprep.subr.bf16.mxu0 0
        %1594 = vmatpush1.bf16.msra.mxu0 0
        %1595 = vmatprep.subr.bf16.mxu0 0
        %1596 = vmatpush1.bf16.msra.mxu0 0
        %1597 = vmatprep.subr.bf16.mxu0 0
        %1598 = vmatpush1.bf16.msra.mxu0 0
        %1599 = vmatprep.mubr.bf16.mxu0 0
        %1600 = vmatmul.mubr.bf16.gmra.mrb[0].mxu0 %v1517
        %v1601 = vpop.f32.mrb[0].mxu0
        %v1602 = vadd.f32 0.0, %v1601
        %v1603 = vpop.f32.mrb[0].mxu0
        %v1604 = vpop.f32.mrb[0].mxu0
        %v1605 = vpop.f32.mrb[0].mxu0
        %1606 = vdwg.mxu0
        %v1607 = vadd.f32 %v1481, %v1602
        %1608 = vst [vmem:[#allocation2] sm:$0xf] %v1607
        %v1609 = vld [vmem:[#allocation2] sm:$0xf]
        %s1610 = scalar_lea.vmem %s431, 576 [#allocation5]
        %v1611 = vld [vmem:[%s1610] sm:$0xf]
        %v1612 = vld [vmem:[%s1610 + $0x4] sm:$0xf]
        %v1613 = vld [vmem:[%s1610 + $0x8] sm:$0xf]
        %v1614 = vld [vmem:[%s1610 + $0xc] sm:$0xf]
        %v1615 = vld [vmem:[%s1610 + $0x10] sm:$0xf]
        %v1616 = vld [vmem:[%s1610 + $0x14] sm:$0xf]
        %v1617 = vld [vmem:[%s1610 + $0x18] sm:$0xf]
        %v1618 = vld [vmem:[%s1610 + $0x1c] sm:$0xf]
        %v1619 = vld [vmem:[%s1610 + $0x20] sm:$0xf]
        %v1620 = vld [vmem:[%s1610 + $0x24] sm:$0xf]
        %v1621 = vld [vmem:[%s1610 + $0x28] sm:$0xf]
        %v1622 = vld [vmem:[%s1610 + $0x2c] sm:$0xf]
        %v1623 = vld [vmem:[%s1610 + $0x30] sm:$0xf]
        %v1624 = vld [vmem:[%s1610 + $0x34] sm:$0xf]
        %v1625 = vld [vmem:[%s1610 + $0x38] sm:$0xf]
        %v1626 = vld [vmem:[%s1610 + $0x3c] sm:$0xf]
        %v1627 = vrot.slane %v1507, 1
        %v1628 = vsel %vm553, %v1508, %v1627
        %v1629 = vrot.slane %v1509, 7
        %v1630 = vsel %vm556, %v1629, %v1628
        %v1631 = vrot.slane %v1510, 6
        %v1632 = vsel %vm559, %v1631, %v1630
        %v1633 = vpack.c.b16 %v1632, %v1632
        %v1651 = vunpack.c.l.b16 %v1611
        %v1652 = vunpack.c.l.b16 %v1612
        %v1653 = vunpack.c.l.b16 %v1613
        %v1654 = vunpack.c.l.b16 %v1614
        %v1655 = vunpack.c.l.b16 %v1615
        %v1656 = vunpack.c.l.b16 %v1616
        %v1657 = vunpack.c.l.b16 %v1617
        %v1658 = vunpack.c.l.b16 %v1618
        %v1659 = vunpack.c.l.b16 %v1619
        %v1660 = vunpack.c.l.b16 %v1620
        %v1661 = vunpack.c.l.b16 %v1621
        %v1662 = vunpack.c.l.b16 %v1622
        %v1663 = vunpack.c.l.b16 %v1623
        %v1664 = vunpack.c.l.b16 %v1624
        %v1665 = vunpack.c.l.b16 %v1625
        %v1666 = vunpack.c.l.b16 %v1626
        %v1667 = vpack.c.b16 %v1652, %v1651
        %v1668 = vpack.c.b16 %v1654, %v1653
        %v1669 = vpack.c.b16 %v1656, %v1655
        %v1670 = vpack.c.b16 %v1658, %v1657
        %v1671 = vpack.c.b16 %v1660, %v1659
        %v1672 = vpack.c.b16 %v1662, %v1661
        %v1673 = vpack.c.b16 %v1664, %v1663
        %v1674 = vpack.c.b16 %v1666, %v1665
        %1683 = vmatprep.subr.bf16.mxu0 0
        %1684 = vmatpush1.bf16.msra.mxu0 %v1667
        %1685 = vmatprep.subr.bf16.mxu0 0
        %1686 = vmatpush1.bf16.msra.mxu0 %v1668
        %1687 = vmatprep.subr.bf16.mxu0 0
        %1688 = vmatpush1.bf16.msra.mxu0 %v1669
        %1689 = vmatprep.subr.bf16.mxu0 0
        %1690 = vmatpush1.bf16.msra.mxu0 %v1670
        %1691 = vmatprep.subr.bf16.mxu0 0
        %1692 = vmatpush1.bf16.msra.mxu0 %v1671
        %1693 = vmatprep.subr.bf16.mxu0 0
        %1694 = vmatpush1.bf16.msra.mxu0 %v1672
        %1695 = vmatprep.subr.bf16.mxu0 0
        %1696 = vmatpush1.bf16.msra.mxu0 %v1673
        %1697 = vmatprep.subr.bf16.mxu0 0
        %1698 = vmatpush1.bf16.msra.mxu0 %v1674
        %1699 = vmatprep.subr.bf16.mxu0 0
        %1700 = vmatpush1.bf16.msra.mxu0 0
        %1701 = vmatprep.subr.bf16.mxu0 0
        %1702 = vmatpush1.bf16.msra.mxu0 0
        %1703 = vmatprep.subr.bf16.mxu0 0
        %1704 = vmatpush1.bf16.msra.mxu0 0
        %1705 = vmatprep.subr.bf16.mxu0 0
        %1706 = vmatpush1.bf16.msra.mxu0 0
        %1707 = vmatprep.subr.bf16.mxu0 0
        %1708 = vmatpush1.bf16.msra.mxu0 0
        %1709 = vmatprep.subr.bf16.mxu0 0
        %1710 = vmatpush1.bf16.msra.mxu0 0
        %1711 = vmatprep.subr.bf16.mxu0 0
        %1712 = vmatpush1.bf16.msra.mxu0 0
        %1713 = vmatprep.subr.bf16.mxu0 0
        %1714 = vmatpush1.bf16.msra.mxu0 0
        %1715 = vmatprep.mubr.bf16.mxu0 0
        %1716 = vmatmul.mubr.bf16.gmra.mrb[0].mxu0 %v1633
        %v1717 = vpop.f32.mrb[0].mxu0
        %v1718 = vadd.f32 0.0, %v1717
        %v1719 = vpop.f32.mrb[0].mxu0
        %v1720 = vpop.f32.mrb[0].mxu0
        %v1721 = vpop.f32.mrb[0].mxu0
        %1722 = vdwg.mxu0
        %v1723 = vadd.f32 %v1609, %v1718
        %1724 = vst [vmem:[#allocation2] sm:$0xf] %v1723
        %v1725 = vld [vmem:[#allocation2] sm:$0xf]
        %s1726 = scalar_lea.vmem %s431, 640 [#allocation5]
        %v1727 = vld [vmem:[%s1726] sm:$0xf]
        %v1728 = vld [vmem:[%s1726 + $0x4] sm:$0xf]
        %v1729 = vld [vmem:[%s1726 + $0x8] sm:$0xf]
        %v1730 = vld [vmem:[%s1726 + $0xc] sm:$0xf]
        %v1731 = vld [vmem:[%s1726 + $0x10] sm:$0xf]
        %v1732 = vld [vmem:[%s1726 + $0x14] sm:$0xf]
        %v1733 = vld [vmem:[%s1726 + $0x18] sm:$0xf]
        %v1734 = vld [vmem:[%s1726 + $0x1c] sm:$0xf]
        %v1735 = vld [vmem:[%s1726 + $0x20] sm:$0xf]
        %v1736 = vld [vmem:[%s1726 + $0x24] sm:$0xf]
        %v1737 = vld [vmem:[%s1726 + $0x28] sm:$0xf]
        %v1738 = vld [vmem:[%s1726 + $0x2c] sm:$0xf]
        %v1739 = vld [vmem:[%s1726 + $0x30] sm:$0xf]
        %v1740 = vld [vmem:[%s1726 + $0x34] sm:$0xf]
        %v1741 = vld [vmem:[%s1726 + $0x38] sm:$0xf]
        %v1742 = vld [vmem:[%s1726 + $0x3c] sm:$0xf]
        %v1743 = vrot.slane %v1507, 2
        %v1744 = vrot.slane %v1508, 1
        %v1745 = vsel %vm553, %v1744, %v1743
        %v1746 = vsel %vm556, %v1509, %v1745
        %v1747 = vrot.slane %v1510, 7
        %v1748 = vsel %vm559, %v1747, %v1746
        %v1749 = vpack.c.b16 %v1748, %v1748
        %v1767 = vunpack.c.l.b16 %v1727
        %v1768 = vunpack.c.l.b16 %v1728
        %v1769 = vunpack.c.l.b16 %v1729
        %v1770 = vunpack.c.l.b16 %v1730
        %v1771 = vunpack.c.l.b16 %v1731
        %v1772 = vunpack.c.l.b16 %v1732
        %v1773 = vunpack.c.l.b16 %v1733
        %v1774 = vunpack.c.l.b16 %v1734
        %v1775 = vunpack.c.l.b16 %v1735
        %v1776 = vunpack.c.l.b16 %v1736
        %v1777 = vunpack.c.l.b16 %v1737
        %v1778 = vunpack.c.l.b16 %v1738
        %v1779 = vunpack.c.l.b16 %v1739
        %v1780 = vunpack.c.l.b16 %v1740
        %v1781 = vunpack.c.l.b16 %v1741
        %v1782 = vunpack.c.l.b16 %v1742
        %v1783 = vpack.c.b16 %v1768, %v1767
        %v1784 = vpack.c.b16 %v1770, %v1769
        %v1785 = vpack.c.b16 %v1772, %v1771
        %v1786 = vpack.c.b16 %v1774, %v1773
        %v1787 = vpack.c.b16 %v1776, %v1775
        %v1788 = vpack.c.b16 %v1778, %v1777
        %v1789 = vpack.c.b16 %v1780, %v1779
        %v1790 = vpack.c.b16 %v1782, %v1781
        %1799 = vmatprep.subr.bf16.mxu0 0
        %1800 = vmatpush1.bf16.msra.mxu0 %v1783
        %1801 = vmatprep.subr.bf16.mxu0 0
        %1802 = vmatpush1.bf16.msra.mxu0 %v1784
        %1803 = vmatprep.subr.bf16.mxu0 0
        %1804 = vmatpush1.bf16.msra.mxu0 %v1785
        %1805 = vmatprep.subr.bf16.mxu0 0
        %1806 = vmatpush1.bf16.msra.mxu0 %v1786
        %1807 = vmatprep.subr.bf16.mxu0 0
        %1808 = vmatpush1.bf16.msra.mxu0 %v1787
        %1809 = vmatprep.subr.bf16.mxu0 0
        %1810 = vmatpush1.bf16.msra.mxu0 %v1788
        %1811 = vmatprep.subr.bf16.mxu0 0
        %1812 = vmatpush1.bf16.msra.mxu0 %v1789
        %1813 = vmatprep.subr.bf16.mxu0 0
        %1814 = vmatpush1.bf16.msra.mxu0 %v1790
        %1815 = vmatprep.subr.bf16.mxu0 0
        %1816 = vmatpush1.bf16.msra.mxu0 0
        %1817 = vmatprep.subr.bf16.mxu0 0
        %1818 = vmatpush1.bf16.msra.mxu0 0
        %1819 = vmatprep.subr.bf16.mxu0 0
        %1820 = vmatpush1.bf16.msra.mxu0 0
        %1821 = vmatprep.subr.bf16.mxu0 0
        %1822 = vmatpush1.bf16.msra.mxu0 0
        %1823 = vmatprep.subr.bf16.mxu0 0
        %1824 = vmatpush1.bf16.msra.mxu0 0
        %1825 = vmatprep.subr.bf16.mxu0 0
        %1826 = vmatpush1.bf16.msra.mxu0 0
        %1827 = vmatprep.subr.bf16.mxu0 0
        %1828 = vmatpush1.bf16.msra.mxu0 0
        %1829 = vmatprep.subr.bf16.mxu0 0
        %1830 = vmatpush1.bf16.msra.mxu0 0
        %1831 = vmatprep.mubr.bf16.mxu0 0
        %1832 = vmatmul.mubr.bf16.gmra.mrb[0].mxu0 %v1749
        %v1833 = vpop.f32.mrb[0].mxu0
        %v1834 = vadd.f32 0.0, %v1833
        %v1835 = vpop.f32.mrb[0].mxu0
        %v1836 = vpop.f32.mrb[0].mxu0
        %v1837 = vpop.f32.mrb[0].mxu0
        %1838 = vdwg.mxu0
        %v1839 = vadd.f32 %v1725, %v1834
        %1840 = vst [vmem:[#allocation2] sm:$0xf] %v1839
        %v1841 = vld [vmem:[#allocation2] sm:$0xf]
        %s1842 = scalar_lea.vmem %s431, 704 [#allocation5]
        %v1843 = vld [vmem:[%s1842] sm:$0xf]
        %v1844 = vld [vmem:[%s1842 + $0x4] sm:$0xf]
        %v1845 = vld [vmem:[%s1842 + $0x8] sm:$0xf]
        %v1846 = vld [vmem:[%s1842 + $0xc] sm:$0xf]
        %v1847 = vld [vmem:[%s1842 + $0x10] sm:$0xf]
        %v1848 = vld [vmem:[%s1842 + $0x14] sm:$0xf]
        %v1849 = vld [vmem:[%s1842 + $0x18] sm:$0xf]
        %v1850 = vld [vmem:[%s1842 + $0x1c] sm:$0xf]
        %v1851 = vld [vmem:[%s1842 + $0x20] sm:$0xf]
        %v1852 = vld [vmem:[%s1842 + $0x24] sm:$0xf]
        %v1853 = vld [vmem:[%s1842 + $0x28] sm:$0xf]
        %v1854 = vld [vmem:[%s1842 + $0x2c] sm:$0xf]
        %v1855 = vld [vmem:[%s1842 + $0x30] sm:$0xf]
        %v1856 = vld [vmem:[%s1842 + $0x34] sm:$0xf]
        %v1857 = vld [vmem:[%s1842 + $0x38] sm:$0xf]
        %v1858 = vld [vmem:[%s1842 + $0x3c] sm:$0xf]
        %v1859 = vrot.slane %v1507, 3
        %v1860 = vrot.slane %v1508, 2
        %v1861 = vsel %vm553, %v1860, %v1859
        %v1862 = vrot.slane %v1509, 1
        %v1863 = vsel %vm556, %v1862, %v1861
        %v1864 = vsel %vm559, %v1510, %v1863
        %v1865 = vpack.c.b16 %v1864, %v1864
        %v1883 = vunpack.c.l.b16 %v1843
        %v1884 = vunpack.c.l.b16 %v1844
        %v1885 = vunpack.c.l.b16 %v1845
        %v1886 = vunpack.c.l.b16 %v1846
        %v1887 = vunpack.c.l.b16 %v1847
        %v1888 = vunpack.c.l.b16 %v1848
        %v1889 = vunpack.c.l.b16 %v1849
        %v1890 = vunpack.c.l.b16 %v1850
        %v1891 = vunpack.c.l.b16 %v1851
        %v1892 = vunpack.c.l.b16 %v1852
        %v1893 = vunpack.c.l.b16 %v1853
        %v1894 = vunpack.c.l.b16 %v1854
        %v1895 = vunpack.c.l.b16 %v1855
        %v1896 = vunpack.c.l.b16 %v1856
        %v1897 = vunpack.c.l.b16 %v1857
        %v1898 = vunpack.c.l.b16 %v1858
        %v1899 = vpack.c.b16 %v1884, %v1883
        %v1900 = vpack.c.b16 %v1886, %v1885
        %v1901 = vpack.c.b16 %v1888, %v1887
        %v1902 = vpack.c.b16 %v1890, %v1889
        %v1903 = vpack.c.b16 %v1892, %v1891
        %v1904 = vpack.c.b16 %v1894, %v1893
        %v1905 = vpack.c.b16 %v1896, %v1895
        %v1906 = vpack.c.b16 %v1898, %v1897
        %1915 = vmatprep.subr.bf16.mxu0 0
        %1916 = vmatpush1.bf16.msra.mxu0 %v1899
        %1917 = vmatprep.subr.bf16.mxu0 0
        %1918 = vmatpush1.bf16.msra.mxu0 %v1900
        %1919 = vmatprep.subr.bf16.mxu0 0
        %1920 = vmatpush1.bf16.msra.mxu0 %v1901
        %1921 = vmatprep.subr.bf16.mxu0 0
        %1922 = vmatpush1.bf16.msra.mxu0 %v1902
        %1923 = vmatprep.subr.bf16.mxu0 0
        %1924 = vmatpush1.bf16.msra.mxu0 %v1903
        %1925 = vmatprep.subr.bf16.mxu0 0
        %1926 = vmatpush1.bf16.msra.mxu0 %v1904
        %1927 = vmatprep.subr.bf16.mxu0 0
        %1928 = vmatpush1.bf16.msra.mxu0 %v1905
        %1929 = vmatprep.subr.bf16.mxu0 0
        %1930 = vmatpush1.bf16.msra.mxu0 %v1906
        %1931 = vmatprep.subr.bf16.mxu0 0
        %1932 = vmatpush1.bf16.msra.mxu0 0
        %1933 = vmatprep.subr.bf16.mxu0 0
        %1934 = vmatpush1.bf16.msra.mxu0 0
        %1935 = vmatprep.subr.bf16.mxu0 0
        %1936 = vmatpush1.bf16.msra.mxu0 0
        %1937 = vmatprep.subr.bf16.mxu0 0
        %1938 = vmatpush1.bf16.msra.mxu0 0
        %1939 = vmatprep.subr.bf16.mxu0 0
        %1940 = vmatpush1.bf16.msra.mxu0 0
        %1941 = vmatprep.subr.bf16.mxu0 0
        %1942 = vmatpush1.bf16.msra.mxu0 0
        %1943 = vmatprep.subr.bf16.mxu0 0
        %1944 = vmatpush1.bf16.msra.mxu0 0
        %1945 = vmatprep.subr.bf16.mxu0 0
        %1946 = vmatpush1.bf16.msra.mxu0 0
        %1947 = vmatprep.mubr.bf16.mxu0 0
        %1948 = vmatmul.mubr.bf16.gmra.mrb[0].mxu0 %v1865
        %v1949 = vpop.f32.mrb[0].mxu0
        %v1950 = vadd.f32 0.0, %v1949
        %v1951 = vpop.f32.mrb[0].mxu0
        %v1952 = vpop.f32.mrb[0].mxu0
        %v1953 = vpop.f32.mrb[0].mxu0
        %1954 = vdwg.mxu0
        %v1955 = vadd.f32 %v1841, %v1950
        %1956 = vst [vmem:[#allocation2] sm:$0xf] %v1955
        %v1957 = vld [vmem:[#allocation2] sm:$0xf]
        %s1958 = scalar_lea.vmem %s431, 768 [#allocation5]
        %v1959 = vld [vmem:[%s1958] sm:$0xf]
        %v1960 = vld [vmem:[%s1958 + $0x4] sm:$0xf]
        %v1961 = vld [vmem:[%s1958 + $0x8] sm:$0xf]
        %v1962 = vld [vmem:[%s1958 + $0xc] sm:$0xf]
        %v1963 = vld [vmem:[%s1958 + $0x10] sm:$0xf]
        %v1964 = vld [vmem:[%s1958 + $0x14] sm:$0xf]
        %v1965 = vld [vmem:[%s1958 + $0x18] sm:$0xf]
        %v1966 = vld [vmem:[%s1958 + $0x1c] sm:$0xf]
        %v1967 = vld [vmem:[%s1958 + $0x20] sm:$0xf]
        %v1968 = vld [vmem:[%s1958 + $0x24] sm:$0xf]
        %v1969 = vld [vmem:[%s1958 + $0x28] sm:$0xf]
        %v1970 = vld [vmem:[%s1958 + $0x2c] sm:$0xf]
        %v1971 = vld [vmem:[%s1958 + $0x30] sm:$0xf]
        %v1972 = vld [vmem:[%s1958 + $0x34] sm:$0xf]
        %v1973 = vld [vmem:[%s1958 + $0x38] sm:$0xf]
        %v1974 = vld [vmem:[%s1958 + $0x3c] sm:$0xf]
        %v1975 = vrot.slane %v1507, 4
        %v1976 = vrot.slane %v1508, 3
        %v1977 = vsel %vm553, %v1976, %v1975
        %v1978 = vrot.slane %v1509, 2
        %v1979 = vsel %vm556, %v1978, %v1977
        %v1980 = vrot.slane %v1510, 1
        %v1981 = vsel %vm559, %v1980, %v1979
        %v1982 = vpack.c.b16 %v1981, %v1981
        %v2000 = vunpack.c.l.b16 %v1959
        %v2001 = vunpack.c.l.b16 %v1960
        %v2002 = vunpack.c.l.b16 %v1961
        %v2003 = vunpack.c.l.b16 %v1962
        %v2004 = vunpack.c.l.b16 %v1963
        %v2005 = vunpack.c.l.b16 %v1964
        %v2006 = vunpack.c.l.b16 %v1965
        %v2007 = vunpack.c.l.b16 %v1966
        %v2008 = vunpack.c.l.b16 %v1967
        %v2009 = vunpack.c.l.b16 %v1968
        %v2010 = vunpack.c.l.b16 %v1969
        %v2011 = vunpack.c.l.b16 %v1970
        %v2012 = vunpack.c.l.b16 %v1971
        %v2013 = vunpack.c.l.b16 %v1972
        %v2014 = vunpack.c.l.b16 %v1973
        %v2015 = vunpack.c.l.b16 %v1974
        %v2016 = vpack.c.b16 %v2001, %v2000
        %v2017 = vpack.c.b16 %v2003, %v2002
        %v2018 = vpack.c.b16 %v2005, %v2004
        %v2019 = vpack.c.b16 %v2007, %v2006
        %v2020 = vpack.c.b16 %v2009, %v2008
        %v2021 = vpack.c.b16 %v2011, %v2010
        %v2022 = vpack.c.b16 %v2013, %v2012
        %v2023 = vpack.c.b16 %v2015, %v2014
        %2032 = vmatprep.subr.bf16.mxu0 0
        %2033 = vmatpush1.bf16.msra.mxu0 %v2016
        %2034 = vmatprep.subr.bf16.mxu0 0
        %2035 = vmatpush1.bf16.msra.mxu0 %v2017
        %2036 = vmatprep.subr.bf16.mxu0 0
        %2037 = vmatpush1.bf16.msra.mxu0 %v2018
        %2038 = vmatprep.subr.bf16.mxu0 0
        %2039 = vmatpush1.bf16.msra.mxu0 %v2019
        %2040 = vmatprep.subr.bf16.mxu0 0
        %2041 = vmatpush1.bf16.msra.mxu0 %v2020
        %2042 = vmatprep.subr.bf16.mxu0 0
        %2043 = vmatpush1.bf16.msra.mxu0 %v2021
        %2044 = vmatprep.subr.bf16.mxu0 0
        %2045 = vmatpush1.bf16.msra.mxu0 %v2022
        %2046 = vmatprep.subr.bf16.mxu0 0
        %2047 = vmatpush1.bf16.msra.mxu0 %v2023
        %2048 = vmatprep.subr.bf16.mxu0 0
        %2049 = vmatpush1.bf16.msra.mxu0 0
        %2050 = vmatprep.subr.bf16.mxu0 0
        %2051 = vmatpush1.bf16.msra.mxu0 0
        %2052 = vmatprep.subr.bf16.mxu0 0
        %2053 = vmatpush1.bf16.msra.mxu0 0
        %2054 = vmatprep.subr.bf16.mxu0 0
        %2055 = vmatpush1.bf16.msra.mxu0 0
        %2056 = vmatprep.subr.bf16.mxu0 0
        %2057 = vmatpush1.bf16.msra.mxu0 0
        %2058 = vmatprep.subr.bf16.mxu0 0
        %2059 = vmatpush1.bf16.msra.mxu0 0
        %2060 = vmatprep.subr.bf16.mxu0 0
        %2061 = vmatpush1.bf16.msra.mxu0 0
        %2062 = vmatprep.subr.bf16.mxu0 0
        %2063 = vmatpush1.bf16.msra.mxu0 0
        %2064 = vmatprep.mubr.bf16.mxu0 0
        %2065 = vmatmul.mubr.bf16.gmra.mrb[0].mxu0 %v1982
        %v2066 = vpop.f32.mrb[0].mxu0
        %v2067 = vadd.f32 0.0, %v2066
        %v2068 = vpop.f32.mrb[0].mxu0
        %v2069 = vpop.f32.mrb[0].mxu0
        %v2070 = vpop.f32.mrb[0].mxu0
        %2071 = vdwg.mxu0
        %v2072 = vadd.f32 %v1957, %v2067
        %2073 = vst [vmem:[#allocation2] sm:$0xf] %v2072
        %v2074 = vld [vmem:[#allocation2] sm:$0xf]
        %s2075 = scalar_lea.vmem %s431, 832 [#allocation5]
        %v2076 = vld [vmem:[%s2075] sm:$0xf]
        %v2077 = vld [vmem:[%s2075 + $0x4] sm:$0xf]
        %v2078 = vld [vmem:[%s2075 + $0x8] sm:$0xf]
        %v2079 = vld [vmem:[%s2075 + $0xc] sm:$0xf]
        %v2080 = vld [vmem:[%s2075 + $0x10] sm:$0xf]
        %v2081 = vld [vmem:[%s2075 + $0x14] sm:$0xf]
        %v2082 = vld [vmem:[%s2075 + $0x18] sm:$0xf]
        %v2083 = vld [vmem:[%s2075 + $0x1c] sm:$0xf]
        %v2084 = vld [vmem:[%s2075 + $0x20] sm:$0xf]
        %v2085 = vld [vmem:[%s2075 + $0x24] sm:$0xf]
        %v2086 = vld [vmem:[%s2075 + $0x28] sm:$0xf]
        %v2087 = vld [vmem:[%s2075 + $0x2c] sm:$0xf]
        %v2088 = vld [vmem:[%s2075 + $0x30] sm:$0xf]
        %v2089 = vld [vmem:[%s2075 + $0x34] sm:$0xf]
        %v2090 = vld [vmem:[%s2075 + $0x38] sm:$0xf]
        %v2091 = vld [vmem:[%s2075 + $0x3c] sm:$0xf]
        %v2092 = vrot.slane %v1507, 5
        %v2093 = vrot.slane %v1508, 4
        %v2094 = vsel %vm553, %v2093, %v2092
        %v2095 = vrot.slane %v1509, 3
        %v2096 = vsel %vm556, %v2095, %v2094
        %v2097 = vrot.slane %v1510, 2
        %v2098 = vsel %vm559, %v2097, %v2096
        %v2099 = vpack.c.b16 %v2098, %v2098
        %v2117 = vunpack.c.l.b16 %v2076
        %v2118 = vunpack.c.l.b16 %v2077
        %v2119 = vunpack.c.l.b16 %v2078
        %v2120 = vunpack.c.l.b16 %v2079
        %v2121 = vunpack.c.l.b16 %v2080
        %v2122 = vunpack.c.l.b16 %v2081
        %v2123 = vunpack.c.l.b16 %v2082
        %v2124 = vunpack.c.l.b16 %v2083
        %v2125 = vunpack.c.l.b16 %v2084
        %v2126 = vunpack.c.l.b16 %v2085
        %v2127 = vunpack.c.l.b16 %v2086
        %v2128 = vunpack.c.l.b16 %v2087
        %v2129 = vunpack.c.l.b16 %v2088
        %v2130 = vunpack.c.l.b16 %v2089
        %v2131 = vunpack.c.l.b16 %v2090
        %v2132 = vunpack.c.l.b16 %v2091
        %v2133 = vpack.c.b16 %v2118, %v2117
        %v2134 = vpack.c.b16 %v2120, %v2119
        %v2135 = vpack.c.b16 %v2122, %v2121
        %v2136 = vpack.c.b16 %v2124, %v2123
        %v2137 = vpack.c.b16 %v2126, %v2125
        %v2138 = vpack.c.b16 %v2128, %v2127
        %v2139 = vpack.c.b16 %v2130, %v2129
        %v2140 = vpack.c.b16 %v2132, %v2131
        %2149 = vmatprep.subr.bf16.mxu0 0
        %2150 = vmatpush1.bf16.msra.mxu0 %v2133
        %2151 = vmatprep.subr.bf16.mxu0 0
        %2152 = vmatpush1.bf16.msra.mxu0 %v2134
        %2153 = vmatprep.subr.bf16.mxu0 0
        %2154 = vmatpush1.bf16.msra.mxu0 %v2135
        %2155 = vmatprep.subr.bf16.mxu0 0
        %2156 = vmatpush1.bf16.msra.mxu0 %v2136
        %2157 = vmatprep.subr.bf16.mxu0 0
        %2158 = vmatpush1.bf16.msra.mxu0 %v2137
        %2159 = vmatprep.subr.bf16.mxu0 0
        %2160 = vmatpush1.bf16.msra.mxu0 %v2138
        %2161 = vmatprep.subr.bf16.mxu0 0
        %2162 = vmatpush1.bf16.msra.mxu0 %v2139
        %2163 = vmatprep.subr.bf16.mxu0 0
        %2164 = vmatpush1.bf16.msra.mxu0 %v2140
        %2165 = vmatprep.subr.bf16.mxu0 0
        %2166 = vmatpush1.bf16.msra.mxu0 0
        %2167 = vmatprep.subr.bf16.mxu0 0
        %2168 = vmatpush1.bf16.msra.mxu0 0
        %2169 = vmatprep.subr.bf16.mxu0 0
        %2170 = vmatpush1.bf16.msra.mxu0 0
        %2171 = vmatprep.subr.bf16.mxu0 0
        %2172 = vmatpush1.bf16.msra.mxu0 0
        %2173 = vmatprep.subr.bf16.mxu0 0
        %2174 = vmatpush1.bf16.msra.mxu0 0
        %2175 = vmatprep.subr.bf16.mxu0 0
        %2176 = vmatpush1.bf16.msra.mxu0 0
        %2177 = vmatprep.subr.bf16.mxu0 0
        %2178 = vmatpush1.bf16.msra.mxu0 0
        %2179 = vmatprep.subr.bf16.mxu0 0
        %2180 = vmatpush1.bf16.msra.mxu0 0
        %2181 = vmatprep.mubr.bf16.mxu0 0
        %2182 = vmatmul.mubr.bf16.gmra.mrb[0].mxu0 %v2099
        %v2183 = vpop.f32.mrb[0].mxu0
        %v2184 = vadd.f32 0.0, %v2183
        %v2185 = vpop.f32.mrb[0].mxu0
        %v2186 = vpop.f32.mrb[0].mxu0
        %v2187 = vpop.f32.mrb[0].mxu0
        %2188 = vdwg.mxu0
        %v2189 = vadd.f32 %v2074, %v2184
        %2190 = vst [vmem:[#allocation2] sm:$0xf] %v2189
        %v2191 = vld [vmem:[#allocation2] sm:$0xf]
        %s2192 = scalar_lea.vmem %s431, 896 [#allocation5]
        %v2193 = vld [vmem:[%s2192] sm:$0xf]
        %v2194 = vld [vmem:[%s2192 + $0x4] sm:$0xf]
        %v2195 = vld [vmem:[%s2192 + $0x8] sm:$0xf]
        %v2196 = vld [vmem:[%s2192 + $0xc] sm:$0xf]
        %v2197 = vld [vmem:[%s2192 + $0x10] sm:$0xf]
        %v2198 = vld [vmem:[%s2192 + $0x14] sm:$0xf]
        %v2199 = vld [vmem:[%s2192 + $0x18] sm:$0xf]
        %v2200 = vld [vmem:[%s2192 + $0x1c] sm:$0xf]
        %v2201 = vld [vmem:[%s2192 + $0x20] sm:$0xf]
        %v2202 = vld [vmem:[%s2192 + $0x24] sm:$0xf]
        %v2203 = vld [vmem:[%s2192 + $0x28] sm:$0xf]
        %v2204 = vld [vmem:[%s2192 + $0x2c] sm:$0xf]
        %v2205 = vld [vmem:[%s2192 + $0x30] sm:$0xf]
        %v2206 = vld [vmem:[%s2192 + $0x34] sm:$0xf]
        %v2207 = vld [vmem:[%s2192 + $0x38] sm:$0xf]
        %v2208 = vld [vmem:[%s2192 + $0x3c] sm:$0xf]
        %v2209 = vrot.slane %v1507, 6
        %v2210 = vrot.slane %v1508, 5
        %v2211 = vsel %vm553, %v2210, %v2209
        %v2212 = vrot.slane %v1509, 4
        %v2213 = vsel %vm556, %v2212, %v2211
        %v2214 = vrot.slane %v1510, 3
        %v2215 = vsel %vm559, %v2214, %v2213
        %v2216 = vpack.c.b16 %v2215, %v2215
        %v2234 = vunpack.c.l.b16 %v2193
        %v2235 = vunpack.c.l.b16 %v2194
        %v2236 = vunpack.c.l.b16 %v2195
        %v2237 = vunpack.c.l.b16 %v2196
        %v2238 = vunpack.c.l.b16 %v2197
        %v2239 = vunpack.c.l.b16 %v2198
        %v2240 = vunpack.c.l.b16 %v2199
        %v2241 = vunpack.c.l.b16 %v2200
        %v2242 = vunpack.c.l.b16 %v2201
        %v2243 = vunpack.c.l.b16 %v2202
        %v2244 = vunpack.c.l.b16 %v2203
        %v2245 = vunpack.c.l.b16 %v2204
        %v2246 = vunpack.c.l.b16 %v2205
        %v2247 = vunpack.c.l.b16 %v2206
        %v2248 = vunpack.c.l.b16 %v2207
        %v2249 = vunpack.c.l.b16 %v2208
        %v2250 = vpack.c.b16 %v2235, %v2234
        %v2251 = vpack.c.b16 %v2237, %v2236
        %v2252 = vpack.c.b16 %v2239, %v2238
        %v2253 = vpack.c.b16 %v2241, %v2240
        %v2254 = vpack.c.b16 %v2243, %v2242
        %v2255 = vpack.c.b16 %v2245, %v2244
        %v2256 = vpack.c.b16 %v2247, %v2246
        %v2257 = vpack.c.b16 %v2249, %v2248
        %2266 = vmatprep.subr.bf16.mxu0 0
        %2267 = vmatpush1.bf16.msra.mxu0 %v2250
        %2268 = vmatprep.subr.bf16.mxu0 0
        %2269 = vmatpush1.bf16.msra.mxu0 %v2251
        %2270 = vmatprep.subr.bf16.mxu0 0
        %2271 = vmatpush1.bf16.msra.mxu0 %v2252
        %2272 = vmatprep.subr.bf16.mxu0 0
        %2273 = vmatpush1.bf16.msra.mxu0 %v2253
        %2274 = vmatprep.subr.bf16.mxu0 0
        %2275 = vmatpush1.bf16.msra.mxu0 %v2254
        %2276 = vmatprep.subr.bf16.mxu0 0
        %2277 = vmatpush1.bf16.msra.mxu0 %v2255
        %2278 = vmatprep.subr.bf16.mxu0 0
        %2279 = vmatpush1.bf16.msra.mxu0 %v2256
        %2280 = vmatprep.subr.bf16.mxu0 0
        %2281 = vmatpush1.bf16.msra.mxu0 %v2257
        %2282 = vmatprep.subr.bf16.mxu0 0
        %2283 = vmatpush1.bf16.msra.mxu0 0
        %2284 = vmatprep.subr.bf16.mxu0 0
        %2285 = vmatpush1.bf16.msra.mxu0 0
        %2286 = vmatprep.subr.bf16.mxu0 0
        %2287 = vmatpush1.bf16.msra.mxu0 0
        %2288 = vmatprep.subr.bf16.mxu0 0
        %2289 = vmatpush1.bf16.msra.mxu0 0
        %2290 = vmatprep.subr.bf16.mxu0 0
        %2291 = vmatpush1.bf16.msra.mxu0 0
        %2292 = vmatprep.subr.bf16.mxu0 0
        %2293 = vmatpush1.bf16.msra.mxu0 0
        %2294 = vmatprep.subr.bf16.mxu0 0
        %2295 = vmatpush1.bf16.msra.mxu0 0
        %2296 = vmatprep.subr.bf16.mxu0 0
        %2297 = vmatpush1.bf16.msra.mxu0 0
        %2298 = vmatprep.mubr.bf16.mxu0 0
        %2299 = vmatmul.mubr.bf16.gmra.mrb[0].mxu0 %v2216
        %v2300 = vpop.f32.mrb[0].mxu0
        %v2301 = vadd.f32 0.0, %v2300
        %v2302 = vpop.f32.mrb[0].mxu0
        %v2303 = vpop.f32.mrb[0].mxu0
        %v2304 = vpop.f32.mrb[0].mxu0
        %2305 = vdwg.mxu0
        %v2306 = vadd.f32 %v2191, %v2301
        %2307 = vst [vmem:[#allocation2] sm:$0xf] %v2306
        %v2308 = vld [vmem:[#allocation2] sm:$0xf]
        %s2309 = scalar_lea.vmem %s431, 960 [#allocation5]
        %v2310 = vld [vmem:[%s2309] sm:$0xf]
        %v2311 = vld [vmem:[%s2309 + $0x4] sm:$0xf]
        %v2312 = vld [vmem:[%s2309 + $0x8] sm:$0xf]
        %v2313 = vld [vmem:[%s2309 + $0xc] sm:$0xf]
        %v2314 = vld [vmem:[%s2309 + $0x10] sm:$0xf]
        %v2315 = vld [vmem:[%s2309 + $0x14] sm:$0xf]
        %v2316 = vld [vmem:[%s2309 + $0x18] sm:$0xf]
        %v2317 = vld [vmem:[%s2309 + $0x1c] sm:$0xf]
        %v2318 = vld [vmem:[%s2309 + $0x20] sm:$0xf]
        %v2319 = vld [vmem:[%s2309 + $0x24] sm:$0xf]
        %v2320 = vld [vmem:[%s2309 + $0x28] sm:$0xf]
        %v2321 = vld [vmem:[%s2309 + $0x2c] sm:$0xf]
        %v2322 = vld [vmem:[%s2309 + $0x30] sm:$0xf]
        %v2323 = vld [vmem:[%s2309 + $0x34] sm:$0xf]
        %v2324 = vld [vmem:[%s2309 + $0x38] sm:$0xf]
        %v2325 = vld [vmem:[%s2309 + $0x3c] sm:$0xf]
        %v2326 = vrot.slane %v1507, 7
        %v2327 = vrot.slane %v1508, 6
        %v2328 = vsel %vm553, %v2327, %v2326
        %v2329 = vrot.slane %v1509, 5
        %v2330 = vsel %vm556, %v2329, %v2328
        %v2331 = vrot.slane %v1510, 4
        %v2332 = vsel %vm559, %v2331, %v2330
        %v2333 = vpack.c.b16 %v2332, %v2332
        %v2351 = vunpack.c.l.b16 %v2310
        %v2352 = vunpack.c.l.b16 %v2311
        %v2353 = vunpack.c.l.b16 %v2312
        %v2354 = vunpack.c.l.b16 %v2313
        %v2355 = vunpack.c.l.b16 %v2314
        %v2356 = vunpack.c.l.b16 %v2315
        %v2357 = vunpack.c.l.b16 %v2316
        %v2358 = vunpack.c.l.b16 %v2317
        %v2359 = vunpack.c.l.b16 %v2318
        %v2360 = vunpack.c.l.b16 %v2319
        %v2361 = vunpack.c.l.b16 %v2320
        %v2362 = vunpack.c.l.b16 %v2321
        %v2363 = vunpack.c.l.b16 %v2322
        %v2364 = vunpack.c.l.b16 %v2323
        %v2365 = vunpack.c.l.b16 %v2324
        %v2366 = vunpack.c.l.b16 %v2325
        %v2367 = vpack.c.b16 %v2352, %v2351
        %v2368 = vpack.c.b16 %v2354, %v2353
        %v2369 = vpack.c.b16 %v2356, %v2355
        %v2370 = vpack.c.b16 %v2358, %v2357
        %v2371 = vpack.c.b16 %v2360, %v2359
        %v2372 = vpack.c.b16 %v2362, %v2361
        %v2373 = vpack.c.b16 %v2364, %v2363
        %v2374 = vpack.c.b16 %v2366, %v2365
        %2383 = vmatprep.subr.bf16.mxu0 0
        %2384 = vmatpush1.bf16.msra.mxu0 %v2367
        %2385 = vmatprep.subr.bf16.mxu0 0
        %2386 = vmatpush1.bf16.msra.mxu0 %v2368
        %2387 = vmatprep.subr.bf16.mxu0 0
        %2388 = vmatpush1.bf16.msra.mxu0 %v2369
        %2389 = vmatprep.subr.bf16.mxu0 0
        %2390 = vmatpush1.bf16.msra.mxu0 %v2370
        %2391 = vmatprep.subr.bf16.mxu0 0
        %2392 = vmatpush1.bf16.msra.mxu0 %v2371
        %2393 = vmatprep.subr.bf16.mxu0 0
        %2394 = vmatpush1.bf16.msra.mxu0 %v2372
        %2395 = vmatprep.subr.bf16.mxu0 0
        %2396 = vmatpush1.bf16.msra.mxu0 %v2373
        %2397 = vmatprep.subr.bf16.mxu0 0
        %2398 = vmatpush1.bf16.msra.mxu0 %v2374
        %2399 = vmatprep.subr.bf16.mxu0 0
        %2400 = vmatpush1.bf16.msra.mxu0 0
        %2401 = vmatprep.subr.bf16.mxu0 0
        %2402 = vmatpush1.bf16.msra.mxu0 0
        %2403 = vmatprep.subr.bf16.mxu0 0
        %2404 = vmatpush1.bf16.msra.mxu0 0
        %2405 = vmatprep.subr.bf16.mxu0 0
        %2406 = vmatpush1.bf16.msra.mxu0 0
        %2407 = vmatprep.subr.bf16.mxu0 0
        %2408 = vmatpush1.bf16.msra.mxu0 0
        %2409 = vmatprep.subr.bf16.mxu0 0
        %2410 = vmatpush1.bf16.msra.mxu0 0
        %2411 = vmatprep.subr.bf16.mxu0 0
        %2412 = vmatpush1.bf16.msra.mxu0 0
        %2413 = vmatprep.subr.bf16.mxu0 0
        %2414 = vmatpush1.bf16.msra.mxu0 0
        %2415 = vmatprep.mubr.bf16.mxu0 0
        %2416 = vmatmul.mubr.bf16.gmra.mrb[0].mxu0 %v2333
        %v2417 = vpop.f32.mrb[0].mxu0
        %v2418 = vadd.f32 0.0, %v2417
        %v2419 = vpop.f32.mrb[0].mxu0
        %v2420 = vpop.f32.mrb[0].mxu0
        %v2421 = vpop.f32.mrb[0].mxu0
        %2422 = vdwg.mxu0
        %v2423 = vadd.f32 %v2308, %v2418
        %2424 = vst [vmem:[#allocation2] sm:$0xf] %v2423
        %p2425 = scmp.eq.s32.totalorder %s27, 12
        // Predicated region
        $region122: #{discriminator_forward.3} parent=92 // pred_check
          %p2426 = pneg %p2425
        $region123: #{discriminator_forward.3} parent=92 // pred_check_branch
          %2428 = sbr.rel (%p2426) target = $region125
        $region124: #{discriminator_forward.3} parent=92 // pred_region
          %v2429 = vld [vmem:[#allocation2] sm:$0xf]
          %v2430 = vld [vmem:[#allocation7] sm:$0x1]
          %v2432 = vlaneseq
          %v2433 = vshrl.u32 %v2432, 7
          %v2434 = vsub.s32 0, %v2433
          %v2435 = vrot.slane %v2430, %v2434
          %v2437 = vadd.f32 %v2429, %v2435
          %v2438 = vmax.f32 %v2437, 0.0
          %vm2439 = vcmask 1043456
          %v2440 = vsel %vm2439, %v2438, 0.0
          %v2441 = vrot.slane %v2440, 4
          %v2442 = vadd.f32 %v2440, %v2441
          %v2443 = vrot.slane %v2442, 2
          %v2444 = vadd.f32 %v2442, %v2443
          %v2445 = vrot.slane %v2444, 1
          %v2446 = vadd.f32 %v2444, %v2445
          %v2447 = vrcp.pop 4.0
          %v2448 = vmul.f32 %v2446, %v2447
          %v2449 = vsub.f32 %v2438, %v2448
          %v2450 = vmul.f32 %v2449, %v2449
          %v2451 = vsel %vm2439, %v2450, 0.0
          %v2452 = vrot.slane %v2451, 4
          %v2453 = vadd.f32 %v2451, %v2452
          %v2454 = vrot.slane %v2453, 2
          %v2455 = vadd.f32 %v2453, %v2454
          %v2456 = vrot.slane %v2455, 1
          %v2457 = vadd.f32 %v2455, %v2456
          %v2458 = vmul.f32 %v2457, %v2447
          %v2459 = vadd.f32 %v2458, 1e-05
          %v2460 = vrsqrt.pop %v2459
          %v2461 = vmul.f32 %v2449, %v2460
          %v2462 = vld [vmem:[#allocation9] sm:$0x1]
          %v2464 = vlaneseq
          %v2465 = vshrl.u32 %v2464, 7
          %v2466 = vsub.s32 0, %v2465
          %v2467 = vrot.slane %v2462, %v2466
          %v2469 = vmul.f32 %v2461, %v2467
          %v2470 = vld [vmem:[#allocation10] sm:$0x1]
          %v2472 = vlaneseq
          %v2473 = vshrl.u32 %v2472, 7
          %v2474 = vsub.s32 0, %v2473
          %v2475 = vrot.slane %v2470, %v2474
          %v2477 = vadd.f32 %v2469, %v2475
          %v2478 = vld [vmem:[#allocation12] sm:$0x1]
          %v2480 = vlaneseq
          %v2481 = vshrl.u32 %v2480, 7
          %v2482 = vsub.s32 0, %v2481
          %v2483 = vrot.slane %v2478, %v2482
          %v2485 = vmul.f32 %v2477, %v2483
          %v2486 = vsel %vm2439, %v2485, 0.0
          %2487 = vadd.xlane.f32.xlu0 %v2486
          %v2488 = vpop.xlane.xlu0 %2487
          %v2489 = vld [vmem:[#allocation3] sm:$0x1]
          %v2491 = vlaneseq
          %v2492 = vshrl.u32 %v2491, 7
          %v2493 = vsub.s32 0, %v2492
          %v2494 = vrot.slane %v2489, %v2493
          %v2496 = vadd.f32 %v2488, %v2494
          %v2497 = vsub.f32 0.0, %v2496
          %v2498 = vmul.f32 %v2497, 1.442695
          %v2499 = vpow.pop %v2498
          %v2500 = vadd.f32 %v2499, 1.0
          %v2501 = vrcp.pop %v2500
          %v2502 = vmul.f32 1.0, %v2501
          %vm2503 = vcmask 3072
          %2504 = vst.msk [vmem:[%s9] sm:$0xf] %vm2503, %v2502
        $region125: #{discriminator_forward.3} parent=92 // pred_fallthru
          _
        // Predicated region
        $region126: #{discriminator_forward.3} parent=92 // pred_check
          %p2505 = pneg %p239
        $region127: #{discriminator_forward.3} parent=92 // pred_check_branch
          %2507 = sbr.rel (%p2505) target = $region129
        $region128: #{discriminator_forward.3} parent=92 // pred_region
          _
        $region129: #{discriminator_forward.3} parent=92 // pred_fallthru
          _
        // Predicated region
        $region130: #{discriminator_forward.3} parent=92 // pred_check
          %p2508 = pneg %p239
        $region131: #{discriminator_forward.3} parent=92 // pred_check_branch
          %2510 = sbr.rel (%p2508) target = $region133
        $region132: #{discriminator_forward.3} parent=92 // pred_region
          _
        $region133: #{discriminator_forward.3} parent=92 // pred_fallthru
          _
      $region93: #{discriminator_forward.3} parent=5 // pred_fallthru
        _
      %p2511 = scmp.le.s32.totalorder 2, %s22
      // Predicated region
      $region134: #{discriminator_forward.3} parent=5 // pred_check
        %p2512 = pneg %p2511
      $region135: #{discriminator_forward.3} parent=5 // pred_check_branch
        %2514 = sbr.rel (%p2512) target = $region137
      $region136: #{discriminator_forward.3} parent=5 // pred_region
        %s2515 = ssub.s32 %s22, 2
      $region137: #{discriminator_forward.3} parent=5 // pred_fallthru
        _
    $region6: #{discriminator_forward.3} parent=1 // loop_footer
      %s26 = sadd.s32 1, %s22
    $region7: #{discriminator_forward.3} parent=1 // loop_footer_branch
      %21 = sbr.rel target = $region3
    $region8: #{discriminator_forward.3} parent=1 // loop_exit
      _
    %2516 = vsyncpa [#allocation6], 1
    %s2517 = scalar_lea.sflag [#allocation6], 1
    %2518 = vsyncpa %s2517, 1
    %2519 = vsyncpa [#allocation8], 1
    %2520 = vsyncpa [#allocation11], 1

</llo_original>
